<compile_context>
chip_gen: v6e
topology: v6e:2x2x1
jax: 0.10.0
libtpu: 0.0.40
codegen_flags: <defaults>
</compile_context>

<pallas_src>
import functools

import jax
import jax.numpy as jnp
from jax import lax
from jax.experimental import pallas as pl
from jax.experimental.pallas import tpu as pltpu


# ----------------------------------------------------------------------------
# helpers
# ----------------------------------------------------------------------------
def _round_up(x: int, m: int) -> int:
    return ((x + m - 1) // m) * m


def _padded_bytes(rows: int, cols: int, dtype) -> int:
    """VMEM footprint of a (rows, cols) array incl. (sublane, lane) tiling pad."""
    itemsize = jnp.dtype(dtype).itemsize
    sublane = max(8, 32 // itemsize)          # 8 for 4B, 16 for 2B, 32 for 1B
    return _round_up(max(rows, 1), sublane) * _round_up(max(cols, 1), 128) * itemsize


def _vmem_capacity_bytes() -> int:
    try:
        return int(pltpu.get_tpu_info().vmem_capacity_bytes)
    except Exception:
        return 64 * 1024 * 1024   # v7x per-TC floor; safe on every generation


_ONEHOT_N_MAX = 4096   # one-hot MXU gather only when tables have <= this many rows


def _resident_plan(Nu, Ni, D, B, dtype):
    """Chunk size, padded batch and padding-aware VMEM estimate for the resident path."""
    tb = min(256, _round_up(B, 8))
    b_pad = _round_up(B, tb)
    needed = (
        _padded_bytes(Nu, D, dtype) + _padded_bytes(Ni, D, dtype)   # tables (single buffer)
        + 4 * _padded_bytes(tb, D, dtype)                           # 2 outputs x 2 pipeline bufs
        + 4 * _padded_bytes(tb, 1, jnp.int32)                       # 2 id inputs x 2 bufs
        + _padded_bytes(tb, Nu, jnp.float32)                        # one-hot (user)
        + _padded_bytes(tb, Ni, jnp.float32)                        # one-hot (item)
    )
    return tb, b_pad, needed


# ----------------------------------------------------------------------------
# Resident path: tables single-buffered in VMEM, vectorized one-hot MXU gather.
# ----------------------------------------------------------------------------
def _resident_onehot_kernel(uid_ref, iid_ref, utab_hbm, itab_hbm,
                            uout_ref, iout_ref, utab_v, itab_v, sem):
    # Load both tables HBM -> VMEM once (step 0); scratch persists across steps.
    @pl.when(pl.program_id(0) == 0)
    def _():
        cu = pltpu.make_async_copy(utab_hbm, utab_v, sem.at[0])
        ci = pltpu.make_async_copy(itab_hbm, itab_v, sem.at[1])
        cu.start()
        ci.start()
        cu.wait()
        ci.wait()

    tb = uout_ref.shape[0]
    nu = utab_v.shape[0]
    ni = itab_v.shape[0]

    uids = uid_ref[...]                                   # (tb, 1) int32
    iids = iid_ref[...]
    u_oh = (uids == lax.broadcasted_iota(jnp.int32, (tb, nu), 1)).astype(utab_v.dtype)
    i_oh = (iids == lax.broadcasted_iota(jnp.int32, (tb, ni), 1)).astype(itab_v.dtype)

    # Gather as a lane-parallel MXU matmul (one nonzero term per row).
    uout_ref[...] = jnp.dot(u_oh, utab_v[...],
                            preferred_element_type=jnp.float32,
                            precision=lax.Precision.HIGHEST).astype(uout_ref.dtype)
    iout_ref[...] = jnp.dot(i_oh, itab_v[...],
                            preferred_element_type=jnp.float32,
                            precision=lax.Precision.HIGHEST).astype(iout_ref.dtype)


def _forward_resident(user_tab, item_tab, uid, iid):
    B = uid.shape[0]
    Nu, D = user_tab.shape
    Ni, _ = item_tab.shape
    dtype = user_tab.dtype

    tb, b_pad, needed = _resident_plan(Nu, Ni, D, B, dtype)
    n_chunks = b_pad // tb
    pad = b_pad - B
    uid_p = jnp.pad(uid, (0, pad)).reshape(b_pad, 1)
    iid_p = jnp.pad(iid, (0, pad)).reshape(b_pad, 1)

    cap = _vmem_capacity_bytes()
    vmem_limit = None
    if needed > (12 << 20):
        # padded estimate + headroom, but stay 10-15% below physical capacity.
        vmem_limit = int(min(0.87 * cap, max(1.3 * needed, 16 << 20)))

    u_out, i_out = pl.pallas_call(
        _resident_onehot_kernel,
        out_shape=(jax.ShapeDtypeStruct((b_pad, D), dtype),
                   jax.ShapeDtypeStruct((b_pad, D), item_tab.dtype)),
        grid=(n_chunks,),
        in_specs=[
            pl.BlockSpec((tb, 1), lambda g: (g, 0)),
            pl.BlockSpec((tb, 1), lambda g: (g, 0)),
            pl.BlockSpec(memory_space=pl.ANY),       # user table stays in HBM
            pl.BlockSpec(memory_space=pl.ANY),       # item table stays in HBM
        ],
        out_specs=(pl.BlockSpec((tb, D), lambda g: (g, 0)),
                   pl.BlockSpec((tb, D), lambda g: (g, 0))),
        scratch_shapes=[
            pltpu.VMEM((Nu, D), dtype),              # single-buffered table copies
            pltpu.VMEM((Ni, D), item_tab.dtype),
            pltpu.SemaphoreType.DMA((2,)),
        ],
        compiler_params=pltpu.CompilerParams(
            # table DMA only happens at step 0 -> steps must run sequentially.
            dimension_semantics=("arbitrary",),
            vmem_limit_bytes=vmem_limit),
    )(uid_p, iid_p, user_tab, item_tab)
    return u_out[:B], i_out[:B]


# ----------------------------------------------------------------------------
# Streaming path: batched, double-buffered manual row-DMA gather from HBM.
# ----------------------------------------------------------------------------
def _streaming_kernel(uid_ref, iid_ref, utab_hbm, itab_hbm,
                      uout_ref, iout_ref, ubuf, ibuf, usem, isem, *, rows):
    g = pl.program_id(0)
    ng = pl.num_programs(0)
    slot = lax.rem(g, 2)

    def start_fetch(step, slot_):
        base = step * rows
        for r in range(rows):                       # static unroll: 2*rows DMAs in flight
            dst = slot_ * rows + r
            pltpu.make_async_copy(
                utab_hbm.at[pl.ds(uid_ref[base + r], 1), :],
                ubuf.at[pl.ds(dst, 1), :],
                usem.at[dst]).start()
            pltpu.make_async_copy(
                itab_hbm.at[pl.ds(iid_ref[base + r], 1), :],
                ibuf.at[pl.ds(dst, 1), :],
                isem.at[dst]).start()

    @pl.when(g == 0)
    def _():
        start_fetch(0, 0)                           # prime slot 0

    @pl.when(g + 1 < ng)
    def _():
        start_fetch(g + 1, 1 - slot)                # prefetch next step into the other slot

    # Wait for this step's 2*rows row DMAs.
    for r in range(rows):
        cur = slot * rows + r
        pltpu.make_async_copy(utab_hbm.at[pl.ds(0, 1), :],
                              ubuf.at[pl.ds(cur, 1), :], usem.at[cur]).wait()
        pltpu.make_async_copy(itab_hbm.at[pl.ds(0, 1), :],
                              ibuf.at[pl.ds(cur, 1), :], isem.at[cur]).wait()

    start = pl.multiple_of(slot * rows, rows)
    uout_ref[...] = ubuf[pl.ds(start, rows), :]     # sublane-dense (rows, D) writeback
    iout_ref[...] = ibuf[pl.ds(start, rows), :]


def _forward_streaming(user_tab, item_tab, uid, iid):
    B = uid.shape[0]
    _, D = user_tab.shape
    dtype = user_tab.dtype

    # R rows gathered per grid step (multiple of 8 for sublane-dense stores).
    rows = 32 if B >= 64 else max(8, min(16, _round_up(B, 8)))
    b_pad = _round_up(B, rows)
    pad = b_pad - B
    uid_p = jnp.pad(uid, (0, pad))
    iid_p = jnp.pad(iid, (0, pad))
    n_steps = b_pad // rows

    grid_spec = pltpu.PrefetchScalarGridSpec(
        num_scalar_prefetch=2,                       # uid, iid -> SMEM
        grid=(n_steps,),
        in_specs=[pl.BlockSpec(memory_space=pl.ANY),  # tables stay in HBM
                  pl.BlockSpec(memory_space=pl.ANY)],
        out_specs=[pl.BlockSpec((rows, D), lambda g, u, i: (g, 0)),
                   pl.BlockSpec((rows, D), lambda g, u, i: (g, 0))],
        scratch_shapes=[
            pltpu.VMEM((2 * rows, D), dtype),         # double-buffered user rows
            pltpu.VMEM((2 * rows, D), user_tab.dtype if dtype is None else item_tab.dtype),
            pltpu.SemaphoreType.DMA((2 * rows,)),
            pltpu.SemaphoreType.DMA((2 * rows,)),
        ],
    )
    u_out, i_out = pl.pallas_call(
        functools.partial(_streaming_kernel, rows=rows),
        out_shape=(jax.ShapeDtypeStruct((b_pad, D), dtype),
                   jax.ShapeDtypeStruct((b_pad, D), item_tab.dtype)),
        grid_spec=grid_spec,
        compiler_params=pltpu.CompilerParams(
            # manual cross-step double buffering requires sequential steps.
            dimension_semantics=("arbitrary",)),
    )(uid_p, iid_p, user_tab, item_tab)
    return u_out[:B], i_out[:B]


# ----------------------------------------------------------------------------
# Wrapper / module
# ----------------------------------------------------------------------------
def mf_encoder_forward(user_embedding, item_embedding, user_id, item_id,
                       force_path=None):
    """Fused Pallas forward: (user_embedding[user_id], item_embedding[item_id])."""
    assert user_embedding.ndim == 2 and item_embedding.ndim == 2
    assert user_embedding.shape[1] == item_embedding.shape[1]
    assert user_embedding.dtype == item_embedding.dtype
    assert user_id.shape == item_id.shape

    id_shape = user_id.shape
    Nu, D = user_embedding.shape
    Ni = item_embedding.shape[0]

    # nn.Embedding accepts arbitrary index shapes; clamp ids for robustness
    # (OOB ids would otherwise drive an unchecked data-dependent access).
    uid = jnp.clip(user_id.reshape(-1).astype(jnp.int32), 0, Nu - 1)
    iid = jnp.clip(item_id.reshape(-1).astype(jnp.int32), 0, Ni - 1)
    B = uid.shape[0]

    if force_path is None:
        _, _, needed = _resident_plan(Nu, Ni, D, B, user_embedding.dtype)
        cap = _vmem_capacity_bytes()
        itemsize = jnp.dtype(user_embedding.dtype).itemsize
        table_bytes = (Nu + Ni) * D * itemsize
        fits_vmem = needed <= int(0.65 * cap)
        small_table = max(Nu, Ni) <= _ONEHOT_N_MAX
        # bytes-moved heuristic: resident re-DMAs the whole table every call,
        # so it only wins when tables are tiny or not >> batch.  (On v5e, with
        # ~half the HBM BW, this conservative gate biases toward streaming.)
        worth_it = (table_bytes <= (2 << 20)) or ((Nu + Ni) <= 8 * B)
        path = "resident" if (fits_vmem and small_table and worth_it) else "streaming"
    else:
        path = force_path

    if path == "resident":
        u_flat, i_flat = _forward_resident(user_embedding, item_embedding, uid, iid)
    else:
        u_flat, i_flat = _forward_streaming(user_embedding, item_embedding, uid, iid)

    return (u_flat.reshape(id_shape + (D,)),
            i_flat.reshape(id_shape + (D,)))


class MFEncoderPallas:
    """JAX/Pallas equivalent of recbole MFEncoder."""

    def __init__(self, user_num: int, item_num: int, emb_size: int, key):
        ku, ki = jax.random.split(key)
        # nn.Embedding default init: N(0, 1)
        self.user_embedding = jax.random.normal(ku, (user_num, emb_size), jnp.float32)
        self.item_embedding = jax.random.normal(ki, (item_num, emb_size), jnp.float32)

    def forward(self, user_id: jax.Array, item_id: jax.Array, force_path=None):
        return mf_encoder_forward(self.user_embedding, self.item_embedding,
                                  user_id, item_id, force_path=force_path)

    def get_all_embeddings(self):
        return (self.user_embedding, self.item_embedding)


if __name__ == "__main__":
    key = jax.random.PRNGKey(0)
    k_model, k_u, k_i, k_u2, k_i2 = jax.random.split(key, 5)

    user_num, item_num, emb_size = 64, 96, 32
    batch = 8

    model = MFEncoderPallas(user_num, item_num, emb_size, k_model)

    user_id = jax.random.randint(k_u, (batch,), 0, user_num, dtype=jnp.int32)
    item_id = jax.random.randint(k_i, (batch,), 0, item_num, dtype=jnp.int32)
    u_ref = model.user_embedding[user_id]
    i_ref = model.item_embedding[item_id]

    # 1) streaming path (manual batched row-DMA gather) -- bitwise exact copy.
    u_s, i_s = model.forward(user_id, item_id, force_path="streaming")
    u_s, i_s = jax.block_until_ready((u_s, i_s))
    assert u_s.shape == (batch, emb_size) and i_s.shape == (batch, emb_size)
    assert jnp.array_equal(u_s, u_ref) and jnp.array_equal(i_s, i_ref)

    # 2) resident path (VMEM tables + one-hot MXU gather); matmul-based gather
    #    so compare with a tolerance that still catches any wrong-row pick.
    u_r, i_r = model.forward(user_id, item_id, force_path="resident")
    u_r, i_r = jax.block_until_ready((u_r, i_r))
    assert jnp.allclose(u_r, u_ref, rtol=1e-2, atol=1e-2)
    assert jnp.allclose(i_r, i_ref, rtol=1e-2, atol=1e-2)

    # 3) multi-step streaming pipeline (grid > 1) with non-1D ids + padding.
    uid2 = jax.random.randint(k_u2, (5, 8), 0, user_num, dtype=jnp.int32)
    iid2 = jax.random.randint(k_i2, (5, 8), 0, item_num, dtype=jnp.int32)
    u_s2, i_s2 = model.forward(uid2, iid2, force_path="streaming")
    u_s2, i_s2 = jax.block_until_ready((u_s2, i_s2))
    assert u_s2.shape == (5, 8, emb_size)
    assert jnp.array_equal(u_s2, model.user_embedding[uid2])
    assert jnp.array_equal(i_s2, model.item_embedding[iid2])

    # 4) default heuristic (tiny tables -> resident), non-multiple-of-8 batch.
    u_d, i_d = model.forward(uid2, iid2)
    u_d, i_d = jax.block_until_ready((u_d, i_d))
    assert jnp.allclose(u_d, model.user_embedding[uid2], rtol=1e-2, atol=1e-2)
    assert jnp.allclose(i_d, model.item_embedding[iid2], rtol=1e-2, atol=1e-2)

    print("KERNEL_OK")
</pallas_src>

<mosaic_0001>
module attributes {stable_mosaic.version = 11 : i64} {
  func.func @_streaming_kernel(%arg0: i32, %arg1: memref<8xi32, #tpu.memory_space<smem>>, %arg2: memref<8xi32, #tpu.memory_space<smem>>, %arg3: memref<64x32xf32, #tpu.memory_space<any>>, %arg4: memref<96x32xf32, #tpu.memory_space<any>>, %arg5: memref<8x32xf32, #tpu.memory_space<vmem>>, %arg6: memref<8x32xf32, #tpu.memory_space<vmem>>, %arg7: memref<16x32xf32, #tpu.memory_space<vmem>>, %arg8: memref<16x32xf32, #tpu.memory_space<vmem>>, %arg9: memref<16x!tpu.dma_semaphore, #tpu.memory_space<semaphore_mem>>, %arg10: memref<16x!tpu.dma_semaphore, #tpu.memory_space<semaphore_mem>>) attributes {dimension_semantics = [#tpu.dimension_semantics<arbitrary>], iteration_bounds = array<i64: 1>, scalar_prefetch = 2 : i64, scratch_operands = 4 : i64, tpu.core_type = #tpu.core_type<tc>, window_params = [{}, {}, {transform_indices = @transform_2, window_bounds = array<i64: 8, 32>}, {transform_indices = @transform_3, window_bounds = array<i64: 8, 32>}]} {
    %c2_i32 = arith.constant 2 : i32
    %0 = arith.remsi %arg0, %c2_i32 : i32
    %c0_i32 = arith.constant 0 : i32
    %1 = arith.cmpi eq, %arg0, %c0_i32 : i32
    %2 = arith.extui %1 : i1 to i32
    %c0_i32_0 = arith.constant 0 : i32
    %3 = arith.cmpi ne, %2, %c0_i32_0 : i32
    scf.if %3 {
      %c0_67 = arith.constant 0 : index
      %96 = memref.load %arg1[%c0_67] : memref<8xi32, #tpu.memory_space<smem>>
      %c0_i32_68 = arith.constant 0 : i32
      %c0_i32_69 = arith.constant 0 : i32
      %97 = tpu.memref_slice %arg3[%96, %c0_i32_69] : memref<64x32xf32, #tpu.memory_space<any>> -> memref<1x32xf32, #tpu.memory_space<any>>
      %c0_i32_70 = arith.constant 0 : i32
      %c0_i32_71 = arith.constant 0 : i32
      %98 = tpu.memref_slice %arg7[%c0_i32_70, %c0_i32_71] : memref<16x32xf32, #tpu.memory_space<vmem>> -> memref<1x32xf32, #tpu.memory_space<vmem>>
      %99 = tpu.memref_slice %arg9[%c0_i32_68] : memref<16x!tpu.dma_semaphore, #tpu.memory_space<semaphore_mem>> -> memref<1x!tpu.dma_semaphore, #tpu.memory_space<semaphore_mem>>
      %100 = tpu.memref_squeeze %99 : memref<1x!tpu.dma_semaphore, #tpu.memory_space<semaphore_mem>> -> memref<!tpu.dma_semaphore, #tpu.memory_space<semaphore_mem>>
      tpu.enqueue_dma source(%97 : memref<1x32xf32, #tpu.memory_space<any>>) target(%98 : memref<1x32xf32, #tpu.memory_space<vmem>>) target_semaphore(%100 : memref<!tpu.dma_semaphore, #tpu.memory_space<semaphore_mem>>)
      %c0_72 = arith.constant 0 : index
      %101 = memref.load %arg2[%c0_72] : memref<8xi32, #tpu.memory_space<smem>>
      %c0_i32_73 = arith.constant 0 : i32
      %c0_i32_74 = arith.constant 0 : i32
      %102 = tpu.memref_slice %arg4[%101, %c0_i32_74] : memref<96x32xf32, #tpu.memory_space<any>> -> memref<1x32xf32, #tpu.memory_space<any>>
      %c0_i32_75 = arith.constant 0 : i32
      %c0_i32_76 = arith.constant 0 : i32
      %103 = tpu.memref_slice %arg8[%c0_i32_75, %c0_i32_76] : memref<16x32xf32, #tpu.memory_space<vmem>> -> memref<1x32xf32, #tpu.memory_space<vmem>>
      %104 = tpu.memref_slice %arg10[%c0_i32_73] : memref<16x!tpu.dma_semaphore, #tpu.memory_space<semaphore_mem>> -> memref<1x!tpu.dma_semaphore, #tpu.memory_space<semaphore_mem>>
      %105 = tpu.memref_squeeze %104 : memref<1x!tpu.dma_semaphore, #tpu.memory_space<semaphore_mem>> -> memref<!tpu.dma_semaphore, #tpu.memory_space<semaphore_mem>>
      tpu.enqueue_dma source(%102 : memref<1x32xf32, #tpu.memory_space<any>>) target(%103 : memref<1x32xf32, #tpu.memory_space<vmem>>) target_semaphore(%105 : memref<!tpu.dma_semaphore, #tpu.memory_space<semaphore_mem>>)
      %c1 = arith.constant 1 : index
      %106 = memref.load %arg1[%c1] : memref<8xi32, #tpu.memory_space<smem>>
      %c1_i32_77 = arith.constant 1 : i32
      %c0_i32_78 = arith.constant 0 : i32
      %107 = tpu.memref_slice %arg3[%106, %c0_i32_78] : memref<64x32xf32, #tpu.memory_space<any>> -> memref<1x32xf32, #tpu.memory_space<any>>
      %c1_i32_79 = arith.constant 1 : i32
      %c0_i32_80 = arith.constant 0 : i32
      %108 = tpu.memref_slice %arg7[%c1_i32_79, %c0_i32_80] : memref<16x32xf32, #tpu.memory_space<vmem>> -> memref<1x32xf32, #tpu.memory_space<vmem>>
      %109 = tpu.memref_slice %arg9[%c1_i32_77] : memref<16x!tpu.dma_semaphore, #tpu.memory_space<semaphore_mem>> -> memref<1x!tpu.dma_semaphore, #tpu.memory_space<semaphore_mem>>
      %110 = tpu.memref_squeeze %109 : memref<1x!tpu.dma_semaphore, #tpu.memory_space<semaphore_mem>> -> memref<!tpu.dma_semaphore, #tpu.memory_space<semaphore_mem>>
      tpu.enqueue_dma source(%107 : memref<1x32xf32, #tpu.memory_space<any>>) target(%108 : memref<1x32xf32, #tpu.memory_space<vmem>>) target_semaphore(%110 : memref<!tpu.dma_semaphore, #tpu.memory_space<semaphore_mem>>)
      %c1_81 = arith.constant 1 : index
      %111 = memref.load %arg2[%c1_81] : memref<8xi32, #tpu.memory_space<smem>>
      %c1_i32_82 = arith.constant 1 : i32
      %c0_i32_83 = arith.constant 0 : i32
      %112 = tpu.memref_slice %arg4[%111, %c0_i32_83] : memref<96x32xf32, #tpu.memory_space<any>> -> memref<1x32xf32, #tpu.memory_space<any>>
      %c1_i32_84 = arith.constant 1 : i32
      %c0_i32_85 = arith.constant 0 : i32
      %113 = tpu.memref_slice %arg8[%c1_i32_84, %c0_i32_85] : memref<16x32xf32, #tpu.memory_space<vmem>> -> memref<1x32xf32, #tpu.memory_space<vmem>>
      %114 = tpu.memref_slice %arg10[%c1_i32_82] : memref<16x!tpu.dma_semaphore, #tpu.memory_space<semaphore_mem>> -> memref<1x!tpu.dma_semaphore, #tpu.memory_space<semaphore_mem>>
      %115 = tpu.memref_squeeze %114 : memref<1x!tpu.dma_semaphore, #tpu.memory_space<semaphore_mem>> -> memref<!tpu.dma_semaphore, #tpu.memory_space<semaphore_mem>>
      tpu.enqueue_dma source(%112 : memref<1x32xf32, #tpu.memory_space<any>>) target(%113 : memref<1x32xf32, #tpu.memory_space<vmem>>) target_semaphore(%115 : memref<!tpu.dma_semaphore, #tpu.memory_space<semaphore_mem>>)
      %c2 = arith.constant 2 : index
      %116 = memref.load %arg1[%c2] : memref<8xi32, #tpu.memory_space<smem>>
      %c2_i32_86 = arith.constant 2 : i32
      %c0_i32_87 = arith.constant 0 : i32
      %117 = tpu.memref_slice %arg3[%116, %c0_i32_87] : memref<64x32xf32, #tpu.memory_space<any>> -> memref<1x32xf32, #tpu.memory_space<any>>
      %c2_i32_88 = arith.constant 2 : i32
      %c0_i32_89 = arith.constant 0 : i32
      %118 = tpu.memref_slice %arg7[%c2_i32_88, %c0_i32_89] : memref<16x32xf32, #tpu.memory_space<vmem>> -> memref<1x32xf32, #tpu.memory_space<vmem>>
      %119 = tpu.memref_slice %arg9[%c2_i32_86] : memref<16x!tpu.dma_semaphore, #tpu.memory_space<semaphore_mem>> -> memref<1x!tpu.dma_semaphore, #tpu.memory_space<semaphore_mem>>
      %120 = tpu.memref_squeeze %119 : memref<1x!tpu.dma_semaphore, #tpu.memory_space<semaphore_mem>> -> memref<!tpu.dma_semaphore, #tpu.memory_space<semaphore_mem>>
      tpu.enqueue_dma source(%117 : memref<1x32xf32, #tpu.memory_space<any>>) target(%118 : memref<1x32xf32, #tpu.memory_space<vmem>>) target_semaphore(%120 : memref<!tpu.dma_semaphore, #tpu.memory_space<semaphore_mem>>)
      %c2_90 = arith.constant 2 : index
      %121 = memref.load %arg2[%c2_90] : memref<8xi32, #tpu.memory_space<smem>>
      %c2_i32_91 = arith.constant 2 : i32
      %c0_i32_92 = arith.constant 0 : i32
      %122 = tpu.memref_slice %arg4[%121, %c0_i32_92] : memref<96x32xf32, #tpu.memory_space<any>> -> memref<1x32xf32, #tpu.memory_space<any>>
      %c2_i32_93 = arith.constant 2 : i32
      %c0_i32_94 = arith.constant 0 : i32
      %123 = tpu.memref_slice %arg8[%c2_i32_93, %c0_i32_94] : memref<16x32xf32, #tpu.memory_space<vmem>> -> memref<1x32xf32, #tpu.memory_space<vmem>>
      %124 = tpu.memref_slice %arg10[%c2_i32_91] : memref<16x!tpu.dma_semaphore, #tpu.memory_space<semaphore_mem>> -> memref<1x!tpu.dma_semaphore, #tpu.memory_space<semaphore_mem>>
      %125 = tpu.memref_squeeze %124 : memref<1x!tpu.dma_semaphore, #tpu.memory_space<semaphore_mem>> -> memref<!tpu.dma_semaphore, #tpu.memory_space<semaphore_mem>>
      tpu.enqueue_dma source(%122 : memref<1x32xf32, #tpu.memory_space<any>>) target(%123 : memref<1x32xf32, #tpu.memory_space<vmem>>) target_semaphore(%125 : memref<!tpu.dma_semaphore, #tpu.memory_space<semaphore_mem>>)
      %c3 = arith.constant 3 : index
      %126 = memref.load %arg1[%c3] : memref<8xi32, #tpu.memory_space<smem>>
      %c3_i32_95 = arith.constant 3 : i32
      %c0_i32_96 = arith.constant 0 : i32
      %127 = tpu.memref_slice %arg3[%126, %c0_i32_96] : memref<64x32xf32, #tpu.memory_space<any>> -> memref<1x32xf32, #tpu.memory_space<any>>
      %c3_i32_97 = arith.constant 3 : i32
      %c0_i32_98 = arith.constant 0 : i32
      %128 = tpu.memref_slice %arg7[%c3_i32_97, %c0_i32_98] : memref<16x32xf32, #tpu.memory_space<vmem>> -> memref<1x32xf32, #tpu.memory_space<vmem>>
      %129 = tpu.memref_slice %arg9[%c3_i32_95] : memref<16x!tpu.dma_semaphore, #tpu.memory_space<semaphore_mem>> -> memref<1x!tpu.dma_semaphore, #tpu.memory_space<semaphore_mem>>
      %130 = tpu.memref_squeeze %129 : memref<1x!tpu.dma_semaphore, #tpu.memory_space<semaphore_mem>> -> memref<!tpu.dma_semaphore, #tpu.memory_space<semaphore_mem>>
      tpu.enqueue_dma source(%127 : memref<1x32xf32, #tpu.memory_space<any>>) target(%128 : memref<1x32xf32, #tpu.memory_space<vmem>>) target_semaphore(%130 : memref<!tpu.dma_semaphore, #tpu.memory_space<semaphore_mem>>)
      %c3_99 = arith.constant 3 : index
      %131 = memref.load %arg2[%c3_99] : memref<8xi32, #tpu.memory_space<smem>>
      %c3_i32_100 = arith.constant 3 : i32
      %c0_i32_101 = arith.constant 0 : i32
      %132 = tpu.memref_slice %arg4[%131, %c0_i32_101] : memref<96x32xf32, #tpu.memory_space<any>> -> memref<1x32xf32, #tpu.memory_space<any>>
      %c3_i32_102 = arith.constant 3 : i32
      %c0_i32_103 = arith.constant 0 : i32
      %133 = tpu.memref_slice %arg8[%c3_i32_102, %c0_i32_103] : memref<16x32xf32, #tpu.memory_space<vmem>> -> memref<1x32xf32, #tpu.memory_space<vmem>>
      %134 = tpu.memref_slice %arg10[%c3_i32_100] : memref<16x!tpu.dma_semaphore, #tpu.memory_space<semaphore_mem>> -> memref<1x!tpu.dma_semaphore, #tpu.memory_space<semaphore_mem>>
      %135 = tpu.memref_squeeze %134 : memref<1x!tpu.dma_semaphore, #tpu.memory_space<semaphore_mem>> -> memref<!tpu.dma_semaphore, #tpu.memory_space<semaphore_mem>>
      tpu.enqueue_dma source(%132 : memref<1x32xf32, #tpu.memory_space<any>>) target(%133 : memref<1x32xf32, #tpu.memory_space<vmem>>) target_semaphore(%135 : memref<!tpu.dma_semaphore, #tpu.memory_space<semaphore_mem>>)
      %c4 = arith.constant 4 : index
      %136 = memref.load %arg1[%c4] : memref<8xi32, #tpu.memory_space<smem>>
      %c4_i32_104 = arith.constant 4 : i32
      %c0_i32_105 = arith.constant 0 : i32
      %137 = tpu.memref_slice %arg3[%136, %c0_i32_105] : memref<64x32xf32, #tpu.memory_space<any>> -> memref<1x32xf32, #tpu.memory_space<any>>
      %c4_i32_106 = arith.constant 4 : i32
      %c0_i32_107 = arith.constant 0 : i32
      %138 = tpu.memref_slice %arg7[%c4_i32_106, %c0_i32_107] : memref<16x32xf32, #tpu.memory_space<vmem>> -> memref<1x32xf32, #tpu.memory_space<vmem>>
      %139 = tpu.memref_slice %arg9[%c4_i32_104] : memref<16x!tpu.dma_semaphore, #tpu.memory_space<semaphore_mem>> -> memref<1x!tpu.dma_semaphore, #tpu.memory_space<semaphore_mem>>
      %140 = tpu.memref_squeeze %139 : memref<1x!tpu.dma_semaphore, #tpu.memory_space<semaphore_mem>> -> memref<!tpu.dma_semaphore, #tpu.memory_space<semaphore_mem>>
      tpu.enqueue_dma source(%137 : memref<1x32xf32, #tpu.memory_space<any>>) target(%138 : memref<1x32xf32, #tpu.memory_space<vmem>>) target_semaphore(%140 : memref<!tpu.dma_semaphore, #tpu.memory_space<semaphore_mem>>)
      %c4_108 = arith.constant 4 : index
      %141 = memref.load %arg2[%c4_108] : memref<8xi32, #tpu.memory_space<smem>>
      %c4_i32_109 = arith.constant 4 : i32
      %c0_i32_110 = arith.constant 0 : i32
      %142 = tpu.memref_slice %arg4[%141, %c0_i32_110] : memref<96x32xf32, #tpu.memory_space<any>> -> memref<1x32xf32, #tpu.memory_space<any>>
      %c4_i32_111 = arith.constant 4 : i32
      %c0_i32_112 = arith.constant 0 : i32
      %143 = tpu.memref_slice %arg8[%c4_i32_111, %c0_i32_112] : memref<16x32xf32, #tpu.memory_space<vmem>> -> memref<1x32xf32, #tpu.memory_space<vmem>>
      %144 = tpu.memref_slice %arg10[%c4_i32_109] : memref<16x!tpu.dma_semaphore, #tpu.memory_space<semaphore_mem>> -> memref<1x!tpu.dma_semaphore, #tpu.memory_space<semaphore_mem>>
      %145 = tpu.memref_squeeze %144 : memref<1x!tpu.dma_semaphore, #tpu.memory_space<semaphore_mem>> -> memref<!tpu.dma_semaphore, #tpu.memory_space<semaphore_mem>>
      tpu.enqueue_dma source(%142 : memref<1x32xf32, #tpu.memory_space<any>>) target(%143 : memref<1x32xf32, #tpu.memory_space<vmem>>) target_semaphore(%145 : memref<!tpu.dma_semaphore, #tpu.memory_space<semaphore_mem>>)
      %c5 = arith.constant 5 : index
      %146 = memref.load %arg1[%c5] : memref<8xi32, #tpu.memory_space<smem>>
      %c5_i32_113 = arith.constant 5 : i32
      %c0_i32_114 = arith.constant 0 : i32
      %147 = tpu.memref_slice %arg3[%146, %c0_i32_114] : memref<64x32xf32, #tpu.memory_space<any>> -> memref<1x32xf32, #tpu.memory_space<any>>
      %c5_i32_115 = arith.constant 5 : i32
      %c0_i32_116 = arith.constant 0 : i32
      %148 = tpu.memref_slice %arg7[%c5_i32_115, %c0_i32_116] : memref<16x32xf32, #tpu.memory_space<vmem>> -> memref<1x32xf32, #tpu.memory_space<vmem>>
      %149 = tpu.memref_slice %arg9[%c5_i32_113] : memref<16x!tpu.dma_semaphore, #tpu.memory_space<semaphore_mem>> -> memref<1x!tpu.dma_semaphore, #tpu.memory_space<semaphore_mem>>
      %150 = tpu.memref_squeeze %149 : memref<1x!tpu.dma_semaphore, #tpu.memory_space<semaphore_mem>> -> memref<!tpu.dma_semaphore, #tpu.memory_space<semaphore_mem>>
      tpu.enqueue_dma source(%147 : memref<1x32xf32, #tpu.memory_space<any>>) target(%148 : memref<1x32xf32, #tpu.memory_space<vmem>>) target_semaphore(%150 : memref<!tpu.dma_semaphore, #tpu.memory_space<semaphore_mem>>)
      %c5_117 = arith.constant 5 : index
      %151 = memref.load %arg2[%c5_117] : memref<8xi32, #tpu.memory_space<smem>>
      %c5_i32_118 = arith.constant 5 : i32
      %c0_i32_119 = arith.constant 0 : i32
      %152 = tpu.memref_slice %arg4[%151, %c0_i32_119] : memref<96x32xf32, #tpu.memory_space<any>> -> memref<1x32xf32, #tpu.memory_space<any>>
      %c5_i32_120 = arith.constant 5 : i32
      %c0_i32_121 = arith.constant 0 : i32
      %153 = tpu.memref_slice %arg8[%c5_i32_120, %c0_i32_121] : memref<16x32xf32, #tpu.memory_space<vmem>> -> memref<1x32xf32, #tpu.memory_space<vmem>>
      %154 = tpu.memref_slice %arg10[%c5_i32_118] : memref<16x!tpu.dma_semaphore, #tpu.memory_space<semaphore_mem>> -> memref<1x!tpu.dma_semaphore, #tpu.memory_space<semaphore_mem>>
      %155 = tpu.memref_squeeze %154 : memref<1x!tpu.dma_semaphore, #tpu.memory_space<semaphore_mem>> -> memref<!tpu.dma_semaphore, #tpu.memory_space<semaphore_mem>>
      tpu.enqueue_dma source(%152 : memref<1x32xf32, #tpu.memory_space<any>>) target(%153 : memref<1x32xf32, #tpu.memory_space<vmem>>) target_semaphore(%155 : memref<!tpu.dma_semaphore, #tpu.memory_space<semaphore_mem>>)
      %c6 = arith.constant 6 : index
      %156 = memref.load %arg1[%c6] : memref<8xi32, #tpu.memory_space<smem>>
      %c6_i32_122 = arith.constant 6 : i32
      %c0_i32_123 = arith.constant 0 : i32
      %157 = tpu.memref_slice %arg3[%156, %c0_i32_123] : memref<64x32xf32, #tpu.memory_space<any>> -> memref<1x32xf32, #tpu.memory_space<any>>
      %c6_i32_124 = arith.constant 6 : i32
      %c0_i32_125 = arith.constant 0 : i32
      %158 = tpu.memref_slice %arg7[%c6_i32_124, %c0_i32_125] : memref<16x32xf32, #tpu.memory_space<vmem>> -> memref<1x32xf32, #tpu.memory_space<vmem>>
      %159 = tpu.memref_slice %arg9[%c6_i32_122] : memref<16x!tpu.dma_semaphore, #tpu.memory_space<semaphore_mem>> -> memref<1x!tpu.dma_semaphore, #tpu.memory_space<semaphore_mem>>
      %160 = tpu.memref_squeeze %159 : memref<1x!tpu.dma_semaphore, #tpu.memory_space<semaphore_mem>> -> memref<!tpu.dma_semaphore, #tpu.memory_space<semaphore_mem>>
      tpu.enqueue_dma source(%157 : memref<1x32xf32, #tpu.memory_space<any>>) target(%158 : memref<1x32xf32, #tpu.memory_space<vmem>>) target_semaphore(%160 : memref<!tpu.dma_semaphore, #tpu.memory_space<semaphore_mem>>)
      %c6_126 = arith.constant 6 : index
      %161 = memref.load %arg2[%c6_126] : memref<8xi32, #tpu.memory_space<smem>>
      %c6_i32_127 = arith.constant 6 : i32
      %c0_i32_128 = arith.constant 0 : i32
      %162 = tpu.memref_slice %arg4[%161, %c0_i32_128] : memref<96x32xf32, #tpu.memory_space<any>> -> memref<1x32xf32, #tpu.memory_space<any>>
      %c6_i32_129 = arith.constant 6 : i32
      %c0_i32_130 = arith.constant 0 : i32
      %163 = tpu.memref_slice %arg8[%c6_i32_129, %c0_i32_130] : memref<16x32xf32, #tpu.memory_space<vmem>> -> memref<1x32xf32, #tpu.memory_space<vmem>>
      %164 = tpu.memref_slice %arg10[%c6_i32_127] : memref<16x!tpu.dma_semaphore, #tpu.memory_space<semaphore_mem>> -> memref<1x!tpu.dma_semaphore, #tpu.memory_space<semaphore_mem>>
      %165 = tpu.memref_squeeze %164 : memref<1x!tpu.dma_semaphore, #tpu.memory_space<semaphore_mem>> -> memref<!tpu.dma_semaphore, #tpu.memory_space<semaphore_mem>>
      tpu.enqueue_dma source(%162 : memref<1x32xf32, #tpu.memory_space<any>>) target(%163 : memref<1x32xf32, #tpu.memory_space<vmem>>) target_semaphore(%165 : memref<!tpu.dma_semaphore, #tpu.memory_space<semaphore_mem>>)
      %c7 = arith.constant 7 : index
      %166 = memref.load %arg1[%c7] : memref<8xi32, #tpu.memory_space<smem>>
      %c7_i32_131 = arith.constant 7 : i32
      %c0_i32_132 = arith.constant 0 : i32
      %167 = tpu.memref_slice %arg3[%166, %c0_i32_132] : memref<64x32xf32, #tpu.memory_space<any>> -> memref<1x32xf32, #tpu.memory_space<any>>
      %c7_i32_133 = arith.constant 7 : i32
      %c0_i32_134 = arith.constant 0 : i32
      %168 = tpu.memref_slice %arg7[%c7_i32_133, %c0_i32_134] : memref<16x32xf32, #tpu.memory_space<vmem>> -> memref<1x32xf32, #tpu.memory_space<vmem>>
      %169 = tpu.memref_slice %arg9[%c7_i32_131] : memref<16x!tpu.dma_semaphore, #tpu.memory_space<semaphore_mem>> -> memref<1x!tpu.dma_semaphore, #tpu.memory_space<semaphore_mem>>
      %170 = tpu.memref_squeeze %169 : memref<1x!tpu.dma_semaphore, #tpu.memory_space<semaphore_mem>> -> memref<!tpu.dma_semaphore, #tpu.memory_space<semaphore_mem>>
      tpu.enqueue_dma source(%167 : memref<1x32xf32, #tpu.memory_space<any>>) target(%168 : memref<1x32xf32, #tpu.memory_space<vmem>>) target_semaphore(%170 : memref<!tpu.dma_semaphore, #tpu.memory_space<semaphore_mem>>)
      %c7_135 = arith.constant 7 : index
      %171 = memref.load %arg2[%c7_135] : memref<8xi32, #tpu.memory_space<smem>>
      %c7_i32_136 = arith.constant 7 : i32
      %c0_i32_137 = arith.constant 0 : i32
      %172 = tpu.memref_slice %arg4[%171, %c0_i32_137] : memref<96x32xf32, #tpu.memory_space<any>> -> memref<1x32xf32, #tpu.memory_space<any>>
      %c7_i32_138 = arith.constant 7 : i32
      %c0_i32_139 = arith.constant 0 : i32
      %173 = tpu.memref_slice %arg8[%c7_i32_138, %c0_i32_139] : memref<16x32xf32, #tpu.memory_space<vmem>> -> memref<1x32xf32, #tpu.memory_space<vmem>>
      %174 = tpu.memref_slice %arg10[%c7_i32_136] : memref<16x!tpu.dma_semaphore, #tpu.memory_space<semaphore_mem>> -> memref<1x!tpu.dma_semaphore, #tpu.memory_space<semaphore_mem>>
      %175 = tpu.memref_squeeze %174 : memref<1x!tpu.dma_semaphore, #tpu.memory_space<semaphore_mem>> -> memref<!tpu.dma_semaphore, #tpu.memory_space<semaphore_mem>>
      tpu.enqueue_dma source(%172 : memref<1x32xf32, #tpu.memory_space<any>>) target(%173 : memref<1x32xf32, #tpu.memory_space<vmem>>) target_semaphore(%175 : memref<!tpu.dma_semaphore, #tpu.memory_space<semaphore_mem>>)
    } else {
    }
    %c1_i32 = arith.constant 1 : i32
    %4 = arith.addi %arg0, %c1_i32 : i32
    %c1_i32_1 = arith.constant 1 : i32
    %5 = arith.cmpi slt, %4, %c1_i32_1 : i32
    %6 = arith.extui %5 : i1 to i32
    %c0_i32_2 = arith.constant 0 : i32
    %7 = arith.cmpi ne, %6, %c0_i32_2 : i32
    scf.if %7 {
      %c1_i32_67 = arith.constant 1 : i32
      %96 = arith.addi %arg0, %c1_i32_67 : i32
      %c1_i32_68 = arith.constant 1 : i32
      %97 = arith.subi %c1_i32_68, %0 : i32
      %c8_i32_69 = arith.constant 8 : i32
      %98 = arith.muli %96, %c8_i32_69 : i32
      %c8_i32_70 = arith.constant 8 : i32
      %99 = arith.muli %97, %c8_i32_70 : i32
      %c0_i32_71 = arith.constant 0 : i32
      %100 = arith.addi %99, %c0_i32_71 : i32
      %c0_i32_72 = arith.constant 0 : i32
      %101 = arith.addi %98, %c0_i32_72 : i32
      %102 = arith.index_cast %101 : i32 to index
      %103 = memref.load %arg1[%102] : memref<8xi32, #tpu.memory_space<smem>>
      %c0_i32_73 = arith.constant 0 : i32
      %104 = tpu.memref_slice %arg3[%103, %c0_i32_73] : memref<64x32xf32, #tpu.memory_space<any>> -> memref<1x32xf32, #tpu.memory_space<any>>
      %c0_i32_74 = arith.constant 0 : i32
      %105 = tpu.memref_slice %arg7[%100, %c0_i32_74] : memref<16x32xf32, #tpu.memory_space<vmem>> -> memref<1x32xf32, #tpu.memory_space<vmem>>
      %106 = tpu.memref_slice %arg9[%100] : memref<16x!tpu.dma_semaphore, #tpu.memory_space<semaphore_mem>> -> memref<1x!tpu.dma_semaphore, #tpu.memory_space<semaphore_mem>>
      %107 = tpu.memref_squeeze %106 : memref<1x!tpu.dma_semaphore, #tpu.memory_space<semaphore_mem>> -> memref<!tpu.dma_semaphore, #tpu.memory_space<semaphore_mem>>
      tpu.enqueue_dma source(%104 : memref<1x32xf32, #tpu.memory_space<any>>) target(%105 : memref<1x32xf32, #tpu.memory_space<vmem>>) target_semaphore(%107 : memref<!tpu.dma_semaphore, #tpu.memory_space<semaphore_mem>>)
      %c0_i32_75 = arith.constant 0 : i32
      %108 = arith.addi %98, %c0_i32_75 : i32
      %109 = arith.index_cast %108 : i32 to index
      %110 = memref.load %arg2[%109] : memref<8xi32, #tpu.memory_space<smem>>
      %c0_i32_76 = arith.constant 0 : i32
      %111 = tpu.memref_slice %arg4[%110, %c0_i32_76] : memref<96x32xf32, #tpu.memory_space<any>> -> memref<1x32xf32, #tpu.memory_space<any>>
      %c0_i32_77 = arith.constant 0 : i32
      %112 = tpu.memref_slice %arg8[%100, %c0_i32_77] : memref<16x32xf32, #tpu.memory_space<vmem>> -> memref<1x32xf32, #tpu.memory_space<vmem>>
      %113 = tpu.memref_slice %arg10[%100] : memref<16x!tpu.dma_semaphore, #tpu.memory_space<semaphore_mem>> -> memref<1x!tpu.dma_semaphore, #tpu.memory_space<semaphore_mem>>
      %114 = tpu.memref_squeeze %113 : memref<1x!tpu.dma_semaphore, #tpu.memory_space<semaphore_mem>> -> memref<!tpu.dma_semaphore, #tpu.memory_space<semaphore_mem>>
      tpu.enqueue_dma source(%111 : memref<1x32xf32, #tpu.memory_space<any>>) target(%112 : memref<1x32xf32, #tpu.memory_space<vmem>>) target_semaphore(%114 : memref<!tpu.dma_semaphore, #tpu.memory_space<semaphore_mem>>)
      %c8_i32_78 = arith.constant 8 : i32
      %115 = arith.muli %97, %c8_i32_78 : i32
      %c1_i32_79 = arith.constant 1 : i32
      %116 = arith.addi %115, %c1_i32_79 : i32
      %c1_i32_80 = arith.constant 1 : i32
      %117 = arith.addi %98, %c1_i32_80 : i32
      %118 = arith.index_cast %117 : i32 to index
      %119 = memref.load %arg1[%118] : memref<8xi32, #tpu.memory_space<smem>>
      %c0_i32_81 = arith.constant 0 : i32
      %120 = tpu.memref_slice %arg3[%119, %c0_i32_81] : memref<64x32xf32, #tpu.memory_space<any>> -> memref<1x32xf32, #tpu.memory_space<any>>
      %c0_i32_82 = arith.constant 0 : i32
      %121 = tpu.memref_slice %arg7[%116, %c0_i32_82] : memref<16x32xf32, #tpu.memory_space<vmem>> -> memref<1x32xf32, #tpu.memory_space<vmem>>
      %122 = tpu.memref_slice %arg9[%116] : memref<16x!tpu.dma_semaphore, #tpu.memory_space<semaphore_mem>> -> memref<1x!tpu.dma_semaphore, #tpu.memory_space<semaphore_mem>>
      %123 = tpu.memref_squeeze %122 : memref<1x!tpu.dma_semaphore, #tpu.memory_space<semaphore_mem>> -> memref<!tpu.dma_semaphore, #tpu.memory_space<semaphore_mem>>
      tpu.enqueue_dma source(%120 : memref<1x32xf32, #tpu.memory_space<any>>) target(%121 : memref<1x32xf32, #tpu.memory_space<vmem>>) target_semaphore(%123 : memref<!tpu.dma_semaphore, #tpu.memory_space<semaphore_mem>>)
      %c1_i32_83 = arith.constant 1 : i32
      %124 = arith.addi %98, %c1_i32_83 : i32
      %125 = arith.index_cast %124 : i32 to index
      %126 = memref.load %arg2[%125] : memref<8xi32, #tpu.memory_space<smem>>
      %c0_i32_84 = arith.constant 0 : i32
      %127 = tpu.memref_slice %arg4[%126, %c0_i32_84] : memref<96x32xf32, #tpu.memory_space<any>> -> memref<1x32xf32, #tpu.memory_space<any>>
      %c0_i32_85 = arith.constant 0 : i32
      %128 = tpu.memref_slice %arg8[%116, %c0_i32_85] : memref<16x32xf32, #tpu.memory_space<vmem>> -> memref<1x32xf32, #tpu.memory_space<vmem>>
      %129 = tpu.memref_slice %arg10[%116] : memref<16x!tpu.dma_semaphore, #tpu.memory_space<semaphore_mem>> -> memref<1x!tpu.dma_semaphore, #tpu.memory_space<semaphore_mem>>
      %130 = tpu.memref_squeeze %129 : memref<1x!tpu.dma_semaphore, #tpu.memory_space<semaphore_mem>> -> memref<!tpu.dma_semaphore, #tpu.memory_space<semaphore_mem>>
      tpu.enqueue_dma source(%127 : memref<1x32xf32, #tpu.memory_space<any>>) target(%128 : memref<1x32xf32, #tpu.memory_space<vmem>>) target_semaphore(%130 : memref<!tpu.dma_semaphore, #tpu.memory_space<semaphore_mem>>)
      %c8_i32_86 = arith.constant 8 : i32
      %131 = arith.muli %97, %c8_i32_86 : i32
      %c2_i32_87 = arith.constant 2 : i32
      %132 = arith.addi %131, %c2_i32_87 : i32
      %c2_i32_88 = arith.constant 2 : i32
      %133 = arith.addi %98, %c2_i32_88 : i32
      %134 = arith.index_cast %133 : i32 to index
      %135 = memref.load %arg1[%134] : memref<8xi32, #tpu.memory_space<smem>>
      %c0_i32_89 = arith.constant 0 : i32
      %136 = tpu.memref_slice %arg3[%135, %c0_i32_89] : memref<64x32xf32, #tpu.memory_space<any>> -> memref<1x32xf32, #tpu.memory_space<any>>
      %c0_i32_90 = arith.constant 0 : i32
      %137 = tpu.memref_slice %arg7[%132, %c0_i32_90] : memref<16x32xf32, #tpu.memory_space<vmem>> -> memref<1x32xf32, #tpu.memory_space<vmem>>
      %138 = tpu.memref_slice %arg9[%132] : memref<16x!tpu.dma_semaphore, #tpu.memory_space<semaphore_mem>> -> memref<1x!tpu.dma_semaphore, #tpu.memory_space<semaphore_mem>>
      %139 = tpu.memref_squeeze %138 : memref<1x!tpu.dma_semaphore, #tpu.memory_space<semaphore_mem>> -> memref<!tpu.dma_semaphore, #tpu.memory_space<semaphore_mem>>
      tpu.enqueue_dma source(%136 : memref<1x32xf32, #tpu.memory_space<any>>) target(%137 : memref<1x32xf32, #tpu.memory_space<vmem>>) target_semaphore(%139 : memref<!tpu.dma_semaphore, #tpu.memory_space<semaphore_mem>>)
      %c2_i32_91 = arith.constant 2 : i32
      %140 = arith.addi %98, %c2_i32_91 : i32
      %141 = arith.index_cast %140 : i32 to index
      %142 = memref.load %arg2[%141] : memref<8xi32, #tpu.memory_space<smem>>
      %c0_i32_92 = arith.constant 0 : i32
      %143 = tpu.memref_slice %arg4[%142, %c0_i32_92] : memref<96x32xf32, #tpu.memory_space<any>> -> memref<1x32xf32, #tpu.memory_space<any>>
      %c0_i32_93 = arith.constant 0 : i32
      %144 = tpu.memref_slice %arg8[%132, %c0_i32_93] : memref<16x32xf32, #tpu.memory_space<vmem>> -> memref<1x32xf32, #tpu.memory_space<vmem>>
      %145 = tpu.memref_slice %arg10[%132] : memref<16x!tpu.dma_semaphore, #tpu.memory_space<semaphore_mem>> -> memref<1x!tpu.dma_semaphore, #tpu.memory_space<semaphore_mem>>
      %146 = tpu.memref_squeeze %145 : memref<1x!tpu.dma_semaphore, #tpu.memory_space<semaphore_mem>> -> memref<!tpu.dma_semaphore, #tpu.memory_space<semaphore_mem>>
      tpu.enqueue_dma source(%143 : memref<1x32xf32, #tpu.memory_space<any>>) target(%144 : memref<1x32xf32, #tpu.memory_space<vmem>>) target_semaphore(%146 : memref<!tpu.dma_semaphore, #tpu.memory_space<semaphore_mem>>)
      %c8_i32_94 = arith.constant 8 : i32
      %147 = arith.muli %97, %c8_i32_94 : i32
      %c3_i32_95 = arith.constant 3 : i32
      %148 = arith.addi %147, %c3_i32_95 : i32
      %c3_i32_96 = arith.constant 3 : i32
      %149 = arith.addi %98, %c3_i32_96 : i32
      %150 = arith.index_cast %149 : i32 to index
      %151 = memref.load %arg1[%150] : memref<8xi32, #tpu.memory_space<smem>>
      %c0_i32_97 = arith.constant 0 : i32
      %152 = tpu.memref_slice %arg3[%151, %c0_i32_97] : memref<64x32xf32, #tpu.memory_space<any>> -> memref<1x32xf32, #tpu.memory_space<any>>
      %c0_i32_98 = arith.constant 0 : i32
      %153 = tpu.memref_slice %arg7[%148, %c0_i32_98] : memref<16x32xf32, #tpu.memory_space<vmem>> -> memref<1x32xf32, #tpu.memory_space<vmem>>
      %154 = tpu.memref_slice %arg9[%148] : memref<16x!tpu.dma_semaphore, #tpu.memory_space<semaphore_mem>> -> memref<1x!tpu.dma_semaphore, #tpu.memory_space<semaphore_mem>>
      %155 = tpu.memref_squeeze %154 : memref<1x!tpu.dma_semaphore, #tpu.memory_space<semaphore_mem>> -> memref<!tpu.dma_semaphore, #tpu.memory_space<semaphore_mem>>
      tpu.enqueue_dma source(%152 : memref<1x32xf32, #tpu.memory_space<any>>) target(%153 : memref<1x32xf32, #tpu.memory_space<vmem>>) target_semaphore(%155 : memref<!tpu.dma_semaphore, #tpu.memory_space<semaphore_mem>>)
      %c3_i32_99 = arith.constant 3 : i32
      %156 = arith.addi %98, %c3_i32_99 : i32
      %157 = arith.index_cast %156 : i32 to index
      %158 = memref.load %arg2[%157] : memref<8xi32, #tpu.memory_space<smem>>
      %c0_i32_100 = arith.constant 0 : i32
      %159 = tpu.memref_slice %arg4[%158, %c0_i32_100] : memref<96x32xf32, #tpu.memory_space<any>> -> memref<1x32xf32, #tpu.memory_space<any>>
      %c0_i32_101 = arith.constant 0 : i32
      %160 = tpu.memref_slice %arg8[%148, %c0_i32_101] : memref<16x32xf32, #tpu.memory_space<vmem>> -> memref<1x32xf32, #tpu.memory_space<vmem>>
      %161 = tpu.memref_slice %arg10[%148] : memref<16x!tpu.dma_semaphore, #tpu.memory_space<semaphore_mem>> -> memref<1x!tpu.dma_semaphore, #tpu.memory_space<semaphore_mem>>
      %162 = tpu.memref_squeeze %161 : memref<1x!tpu.dma_semaphore, #tpu.memory_space<semaphore_mem>> -> memref<!tpu.dma_semaphore, #tpu.memory_space<semaphore_mem>>
      tpu.enqueue_dma source(%159 : memref<1x32xf32, #tpu.memory_space<any>>) target(%160 : memref<1x32xf32, #tpu.memory_space<vmem>>) target_semaphore(%162 : memref<!tpu.dma_semaphore, #tpu.memory_space<semaphore_mem>>)
      %c8_i32_102 = arith.constant 8 : i32
      %163 = arith.muli %97, %c8_i32_102 : i32
      %c4_i32_103 = arith.constant 4 : i32
      %164 = arith.addi %163, %c4_i32_103 : i32
      %c4_i32_104 = arith.constant 4 : i32
      %165 = arith.addi %98, %c4_i32_104 : i32
      %166 = arith.index_cast %165 : i32 to index
      %167 = memref.load %arg1[%166] : memref<8xi32, #tpu.memory_space<smem>>
      %c0_i32_105 = arith.constant 0 : i32
      %168 = tpu.memref_slice %arg3[%167, %c0_i32_105] : memref<64x32xf32, #tpu.memory_space<any>> -> memref<1x32xf32, #tpu.memory_space<any>>
      %c0_i32_106 = arith.constant 0 : i32
      %169 = tpu.memref_slice %arg7[%164, %c0_i32_106] : memref<16x32xf32, #tpu.memory_space<vmem>> -> memref<1x32xf32, #tpu.memory_space<vmem>>
      %170 = tpu.memref_slice %arg9[%164] : memref<16x!tpu.dma_semaphore, #tpu.memory_space<semaphore_mem>> -> memref<1x!tpu.dma_semaphore, #tpu.memory_space<semaphore_mem>>
      %171 = tpu.memref_squeeze %170 : memref<1x!tpu.dma_semaphore, #tpu.memory_space<semaphore_mem>> -> memref<!tpu.dma_semaphore, #tpu.memory_space<semaphore_mem>>
      tpu.enqueue_dma source(%168 : memref<1x32xf32, #tpu.memory_space<any>>) target(%169 : memref<1x32xf32, #tpu.memory_space<vmem>>) target_semaphore(%171 : memref<!tpu.dma_semaphore, #tpu.memory_space<semaphore_mem>>)
      %c4_i32_107 = arith.constant 4 : i32
      %172 = arith.addi %98, %c4_i32_107 : i32
      %173 = arith.index_cast %172 : i32 to index
      %174 = memref.load %arg2[%173] : memref<8xi32, #tpu.memory_space<smem>>
      %c0_i32_108 = arith.constant 0 : i32
      %175 = tpu.memref_slice %arg4[%174, %c0_i32_108] : memref<96x32xf32, #tpu.memory_space<any>> -> memref<1x32xf32, #tpu.memory_space<any>>
      %c0_i32_109 = arith.constant 0 : i32
      %176 = tpu.memref_slice %arg8[%164, %c0_i32_109] : memref<16x32xf32, #tpu.memory_space<vmem>> -> memref<1x32xf32, #tpu.memory_space<vmem>>
      %177 = tpu.memref_slice %arg10[%164] : memref<16x!tpu.dma_semaphore, #tpu.memory_space<semaphore_mem>> -> memref<1x!tpu.dma_semaphore, #tpu.memory_space<semaphore_mem>>
      %178 = tpu.memref_squeeze %177 : memref<1x!tpu.dma_semaphore, #tpu.memory_space<semaphore_mem>> -> memref<!tpu.dma_semaphore, #tpu.memory_space<semaphore_mem>>
      tpu.enqueue_dma source(%175 : memref<1x32xf32, #tpu.memory_space<any>>) target(%176 : memref<1x32xf32, #tpu.memory_space<vmem>>) target_semaphore(%178 : memref<!tpu.dma_semaphore, #tpu.memory_space<semaphore_mem>>)
      %c8_i32_110 = arith.constant 8 : i32
      %179 = arith.muli %97, %c8_i32_110 : i32
      %c5_i32_111 = arith.constant 5 : i32
      %180 = arith.addi %179, %c5_i32_111 : i32
      %c5_i32_112 = arith.constant 5 : i32
      %181 = arith.addi %98, %c5_i32_112 : i32
      %182 = arith.index_cast %181 : i32 to index
      %183 = memref.load %arg1[%182] : memref<8xi32, #tpu.memory_space<smem>>
      %c0_i32_113 = arith.constant 0 : i32
      %184 = tpu.memref_slice %arg3[%183, %c0_i32_113] : memref<64x32xf32, #tpu.memory_space<any>> -> memref<1x32xf32, #tpu.memory_space<any>>
      %c0_i32_114 = arith.constant 0 : i32
      %185 = tpu.memref_slice %arg7[%180, %c0_i32_114] : memref<16x32xf32, #tpu.memory_space<vmem>> -> memref<1x32xf32, #tpu.memory_space<vmem>>
      %186 = tpu.memref_slice %arg9[%180] : memref<16x!tpu.dma_semaphore, #tpu.memory_space<semaphore_mem>> -> memref<1x!tpu.dma_semaphore, #tpu.memory_space<semaphore_mem>>
      %187 = tpu.memref_squeeze %186 : memref<1x!tpu.dma_semaphore, #tpu.memory_space<semaphore_mem>> -> memref<!tpu.dma_semaphore, #tpu.memory_space<semaphore_mem>>
      tpu.enqueue_dma source(%184 : memref<1x32xf32, #tpu.memory_space<any>>) target(%185 : memref<1x32xf32, #tpu.memory_space<vmem>>) target_semaphore(%187 : memref<!tpu.dma_semaphore, #tpu.memory_space<semaphore_mem>>)
      %c5_i32_115 = arith.constant 5 : i32
      %188 = arith.addi %98, %c5_i32_115 : i32
      %189 = arith.index_cast %188 : i32 to index
      %190 = memref.load %arg2[%189] : memref<8xi32, #tpu.memory_space<smem>>
      %c0_i32_116 = arith.constant 0 : i32
      %191 = tpu.memref_slice %arg4[%190, %c0_i32_116] : memref<96x32xf32, #tpu.memory_space<any>> -> memref<1x32xf32, #tpu.memory_space<any>>
      %c0_i32_117 = arith.constant 0 : i32
      %192 = tpu.memref_slice %arg8[%180, %c0_i32_117] : memref<16x32xf32, #tpu.memory_space<vmem>> -> memref<1x32xf32, #tpu.memory_space<vmem>>
      %193 = tpu.memref_slice %arg10[%180] : memref<16x!tpu.dma_semaphore, #tpu.memory_space<semaphore_mem>> -> memref<1x!tpu.dma_semaphore, #tpu.memory_space<semaphore_mem>>
      %194 = tpu.memref_squeeze %193 : memref<1x!tpu.dma_semaphore, #tpu.memory_space<semaphore_mem>> -> memref<!tpu.dma_semaphore, #tpu.memory_space<semaphore_mem>>
      tpu.enqueue_dma source(%191 : memref<1x32xf32, #tpu.memory_space<any>>) target(%192 : memref<1x32xf32, #tpu.memory_space<vmem>>) target_semaphore(%194 : memref<!tpu.dma_semaphore, #tpu.memory_space<semaphore_mem>>)
      %c8_i32_118 = arith.constant 8 : i32
      %195 = arith.muli %97, %c8_i32_118 : i32
      %c6_i32_119 = arith.constant 6 : i32
      %196 = arith.addi %195, %c6_i32_119 : i32
      %c6_i32_120 = arith.constant 6 : i32
      %197 = arith.addi %98, %c6_i32_120 : i32
      %198 = arith.index_cast %197 : i32 to index
      %199 = memref.load %arg1[%198] : memref<8xi32, #tpu.memory_space<smem>>
      %c0_i32_121 = arith.constant 0 : i32
      %200 = tpu.memref_slice %arg3[%199, %c0_i32_121] : memref<64x32xf32, #tpu.memory_space<any>> -> memref<1x32xf32, #tpu.memory_space<any>>
      %c0_i32_122 = arith.constant 0 : i32
      %201 = tpu.memref_slice %arg7[%196, %c0_i32_122] : memref<16x32xf32, #tpu.memory_space<vmem>> -> memref<1x32xf32, #tpu.memory_space<vmem>>
      %202 = tpu.memref_slice %arg9[%196] : memref<16x!tpu.dma_semaphore, #tpu.memory_space<semaphore_mem>> -> memref<1x!tpu.dma_semaphore, #tpu.memory_space<semaphore_mem>>
      %203 = tpu.memref_squeeze %202 : memref<1x!tpu.dma_semaphore, #tpu.memory_space<semaphore_mem>> -> memref<!tpu.dma_semaphore, #tpu.memory_space<semaphore_mem>>
      tpu.enqueue_dma source(%200 : memref<1x32xf32, #tpu.memory_space<any>>) target(%201 : memref<1x32xf32, #tpu.memory_space<vmem>>) target_semaphore(%203 : memref<!tpu.dma_semaphore, #tpu.memory_space<semaphore_mem>>)
      %c6_i32_123 = arith.constant 6 : i32
      %204 = arith.addi %98, %c6_i32_123 : i32
      %205 = arith.index_cast %204 : i32 to index
      %206 = memref.load %arg2[%205] : memref<8xi32, #tpu.memory_space<smem>>
      %c0_i32_124 = arith.constant 0 : i32
      %207 = tpu.memref_slice %arg4[%206, %c0_i32_124] : memref<96x32xf32, #tpu.memory_space<any>> -> memref<1x32xf32, #tpu.memory_space<any>>
      %c0_i32_125 = arith.constant 0 : i32
      %208 = tpu.memref_slice %arg8[%196, %c0_i32_125] : memref<16x32xf32, #tpu.memory_space<vmem>> -> memref<1x32xf32, #tpu.memory_space<vmem>>
      %209 = tpu.memref_slice %arg10[%196] : memref<16x!tpu.dma_semaphore, #tpu.memory_space<semaphore_mem>> -> memref<1x!tpu.dma_semaphore, #tpu.memory_space<semaphore_mem>>
      %210 = tpu.memref_squeeze %209 : memref<1x!tpu.dma_semaphore, #tpu.memory_space<semaphore_mem>> -> memref<!tpu.dma_semaphore, #tpu.memory_space<semaphore_mem>>
      tpu.enqueue_dma source(%207 : memref<1x32xf32, #tpu.memory_space<any>>) target(%208 : memref<1x32xf32, #tpu.memory_space<vmem>>) target_semaphore(%210 : memref<!tpu.dma_semaphore, #tpu.memory_space<semaphore_mem>>)
      %c8_i32_126 = arith.constant 8 : i32
      %211 = arith.muli %97, %c8_i32_126 : i32
      %c7_i32_127 = arith.constant 7 : i32
      %212 = arith.addi %211, %c7_i32_127 : i32
      %c7_i32_128 = arith.constant 7 : i32
      %213 = arith.addi %98, %c7_i32_128 : i32
      %214 = arith.index_cast %213 : i32 to index
      %215 = memref.load %arg1[%214] : memref<8xi32, #tpu.memory_space<smem>>
      %c0_i32_129 = arith.constant 0 : i32
      %216 = tpu.memref_slice %arg3[%215, %c0_i32_129] : memref<64x32xf32, #tpu.memory_space<any>> -> memref<1x32xf32, #tpu.memory_space<any>>
      %c0_i32_130 = arith.constant 0 : i32
      %217 = tpu.memref_slice %arg7[%212, %c0_i32_130] : memref<16x32xf32, #tpu.memory_space<vmem>> -> memref<1x32xf32, #tpu.memory_space<vmem>>
      %218 = tpu.memref_slice %arg9[%212] : memref<16x!tpu.dma_semaphore, #tpu.memory_space<semaphore_mem>> -> memref<1x!tpu.dma_semaphore, #tpu.memory_space<semaphore_mem>>
      %219 = tpu.memref_squeeze %218 : memref<1x!tpu.dma_semaphore, #tpu.memory_space<semaphore_mem>> -> memref<!tpu.dma_semaphore, #tpu.memory_space<semaphore_mem>>
      tpu.enqueue_dma source(%216 : memref<1x32xf32, #tpu.memory_space<any>>) target(%217 : memref<1x32xf32, #tpu.memory_space<vmem>>) target_semaphore(%219 : memref<!tpu.dma_semaphore, #tpu.memory_space<semaphore_mem>>)
      %c7_i32_131 = arith.constant 7 : i32
      %220 = arith.addi %98, %c7_i32_131 : i32
      %221 = arith.index_cast %220 : i32 to index
      %222 = memref.load %arg2[%221] : memref<8xi32, #tpu.memory_space<smem>>
      %c0_i32_132 = arith.constant 0 : i32
      %223 = tpu.memref_slice %arg4[%222, %c0_i32_132] : memref<96x32xf32, #tpu.memory_space<any>> -> memref<1x32xf32, #tpu.memory_space<any>>
      %c0_i32_133 = arith.constant 0 : i32
      %224 = tpu.memref_slice %arg8[%212, %c0_i32_133] : memref<16x32xf32, #tpu.memory_space<vmem>> -> memref<1x32xf32, #tpu.memory_space<vmem>>
      %225 = tpu.memref_slice %arg10[%212] : memref<16x!tpu.dma_semaphore, #tpu.memory_space<semaphore_mem>> -> memref<1x!tpu.dma_semaphore, #tpu.memory_space<semaphore_mem>>
      %226 = tpu.memref_squeeze %225 : memref<1x!tpu.dma_semaphore, #tpu.memory_space<semaphore_mem>> -> memref<!tpu.dma_semaphore, #tpu.memory_space<semaphore_mem>>
      tpu.enqueue_dma source(%223 : memref<1x32xf32, #tpu.memory_space<any>>) target(%224 : memref<1x32xf32, #tpu.memory_space<vmem>>) target_semaphore(%226 : memref<!tpu.dma_semaphore, #tpu.memory_space<semaphore_mem>>)
    } else {
    }
    %c8_i32 = arith.constant 8 : i32
    %8 = arith.muli %0, %c8_i32 : i32
    %c0_i32_3 = arith.constant 0 : i32
    %9 = arith.addi %8, %c0_i32_3 : i32
    %c0_i32_4 = arith.constant 0 : i32
    %c0_i32_5 = arith.constant 0 : i32
    %10 = tpu.memref_slice %arg3[%c0_i32_4, %c0_i32_5] : memref<64x32xf32, #tpu.memory_space<any>> -> memref<1x32xf32, #tpu.memory_space<any>>
    %c0_i32_6 = arith.constant 0 : i32
    %11 = tpu.memref_slice %arg7[%9, %c0_i32_6] : memref<16x32xf32, #tpu.memory_space<vmem>> -> memref<1x32xf32, #tpu.memory_space<vmem>>
    %12 = tpu.memref_slice %arg9[%9] : memref<16x!tpu.dma_semaphore, #tpu.memory_space<semaphore_mem>> -> memref<1x!tpu.dma_semaphore, #tpu.memory_space<semaphore_mem>>
    %13 = tpu.memref_squeeze %12 : memref<1x!tpu.dma_semaphore, #tpu.memory_space<semaphore_mem>> -> memref<!tpu.dma_semaphore, #tpu.memory_space<semaphore_mem>>
    tpu.wait_dma2 semaphore(%13 : memref<!tpu.dma_semaphore, #tpu.memory_space<semaphore_mem>>) src(%10 : memref<1x32xf32, #tpu.memory_space<any>>) dst(%11 : memref<1x32xf32, #tpu.memory_space<vmem>>)
    %c0_i32_7 = arith.constant 0 : i32
    %c0_i32_8 = arith.constant 0 : i32
    %14 = tpu.memref_slice %arg4[%c0_i32_7, %c0_i32_8] : memref<96x32xf32, #tpu.memory_space<any>> -> memref<1x32xf32, #tpu.memory_space<any>>
    %c0_i32_9 = arith.constant 0 : i32
    %15 = tpu.memref_slice %arg8[%9, %c0_i32_9] : memref<16x32xf32, #tpu.memory_space<vmem>> -> memref<1x32xf32, #tpu.memory_space<vmem>>
    %16 = tpu.memref_slice %arg10[%9] : memref<16x!tpu.dma_semaphore, #tpu.memory_space<semaphore_mem>> -> memref<1x!tpu.dma_semaphore, #tpu.memory_space<semaphore_mem>>
    %17 = tpu.memref_squeeze %16 : memref<1x!tpu.dma_semaphore, #tpu.memory_space<semaphore_mem>> -> memref<!tpu.dma_semaphore, #tpu.memory_space<semaphore_mem>>
    tpu.wait_dma2 semaphore(%17 : memref<!tpu.dma_semaphore, #tpu.memory_space<semaphore_mem>>) src(%14 : memref<1x32xf32, #tpu.memory_space<any>>) dst(%15 : memref<1x32xf32, #tpu.memory_space<vmem>>)
    %c8_i32_10 = arith.constant 8 : i32
    %18 = arith.muli %0, %c8_i32_10 : i32
    %c1_i32_11 = arith.constant 1 : i32
    %19 = arith.addi %18, %c1_i32_11 : i32
    %c0_i32_12 = arith.constant 0 : i32
    %c0_i32_13 = arith.constant 0 : i32
    %20 = tpu.memref_slice %arg3[%c0_i32_12, %c0_i32_13] : memref<64x32xf32, #tpu.memory_space<any>> -> memref<1x32xf32, #tpu.memory_space<any>>
    %c0_i32_14 = arith.constant 0 : i32
    %21 = tpu.memref_slice %arg7[%19, %c0_i32_14] : memref<16x32xf32, #tpu.memory_space<vmem>> -> memref<1x32xf32, #tpu.memory_space<vmem>>
    %22 = tpu.memref_slice %arg9[%19] : memref<16x!tpu.dma_semaphore, #tpu.memory_space<semaphore_mem>> -> memref<1x!tpu.dma_semaphore, #tpu.memory_space<semaphore_mem>>
    %23 = tpu.memref_squeeze %22 : memref<1x!tpu.dma_semaphore, #tpu.memory_space<semaphore_mem>> -> memref<!tpu.dma_semaphore, #tpu.memory_space<semaphore_mem>>
    tpu.wait_dma2 semaphore(%23 : memref<!tpu.dma_semaphore, #tpu.memory_space<semaphore_mem>>) src(%20 : memref<1x32xf32, #tpu.memory_space<any>>) dst(%21 : memref<1x32xf32, #tpu.memory_space<vmem>>)
    %c0_i32_15 = arith.constant 0 : i32
    %c0_i32_16 = arith.constant 0 : i32
    %24 = tpu.memref_slice %arg4[%c0_i32_15, %c0_i32_16] : memref<96x32xf32, #tpu.memory_space<any>> -> memref<1x32xf32, #tpu.memory_space<any>>
    %c0_i32_17 = arith.constant 0 : i32
    %25 = tpu.memref_slice %arg8[%19, %c0_i32_17] : memref<16x32xf32, #tpu.memory_space<vmem>> -> memref<1x32xf32, #tpu.memory_space<vmem>>
    %26 = tpu.memref_slice %arg10[%19] : memref<16x!tpu.dma_semaphore, #tpu.memory_space<semaphore_mem>> -> memref<1x!tpu.dma_semaphore, #tpu.memory_space<semaphore_mem>>
    %27 = tpu.memref_squeeze %26 : memref<1x!tpu.dma_semaphore, #tpu.memory_space<semaphore_mem>> -> memref<!tpu.dma_semaphore, #tpu.memory_space<semaphore_mem>>
    tpu.wait_dma2 semaphore(%27 : memref<!tpu.dma_semaphore, #tpu.memory_space<semaphore_mem>>) src(%24 : memref<1x32xf32, #tpu.memory_space<any>>) dst(%25 : memref<1x32xf32, #tpu.memory_space<vmem>>)
    %c8_i32_18 = arith.constant 8 : i32
    %28 = arith.muli %0, %c8_i32_18 : i32
    %c2_i32_19 = arith.constant 2 : i32
    %29 = arith.addi %28, %c2_i32_19 : i32
    %c0_i32_20 = arith.constant 0 : i32
    %c0_i32_21 = arith.constant 0 : i32
    %30 = tpu.memref_slice %arg3[%c0_i32_20, %c0_i32_21] : memref<64x32xf32, #tpu.memory_space<any>> -> memref<1x32xf32, #tpu.memory_space<any>>
    %c0_i32_22 = arith.constant 0 : i32
    %31 = tpu.memref_slice %arg7[%29, %c0_i32_22] : memref<16x32xf32, #tpu.memory_space<vmem>> -> memref<1x32xf32, #tpu.memory_space<vmem>>
    %32 = tpu.memref_slice %arg9[%29] : memref<16x!tpu.dma_semaphore, #tpu.memory_space<semaphore_mem>> -> memref<1x!tpu.dma_semaphore, #tpu.memory_space<semaphore_mem>>
    %33 = tpu.memref_squeeze %32 : memref<1x!tpu.dma_semaphore, #tpu.memory_space<semaphore_mem>> -> memref<!tpu.dma_semaphore, #tpu.memory_space<semaphore_mem>>
    tpu.wait_dma2 semaphore(%33 : memref<!tpu.dma_semaphore, #tpu.memory_space<semaphore_mem>>) src(%30 : memref<1x32xf32, #tpu.memory_space<any>>) dst(%31 : memref<1x32xf32, #tpu.memory_space<vmem>>)
    %c0_i32_23 = arith.constant 0 : i32
    %c0_i32_24 = arith.constant 0 : i32
    %34 = tpu.memref_slice %arg4[%c0_i32_23, %c0_i32_24] : memref<96x32xf32, #tpu.memory_space<any>> -> memref<1x32xf32, #tpu.memory_space<any>>
    %c0_i32_25 = arith.constant 0 : i32
    %35 = tpu.memref_slice %arg8[%29, %c0_i32_25] : memref<16x32xf32, #tpu.memory_space<vmem>> -> memref<1x32xf32, #tpu.memory_space<vmem>>
    %36 = tpu.memref_slice %arg10[%29] : memref<16x!tpu.dma_semaphore, #tpu.memory_space<semaphore_mem>> -> memref<1x!tpu.dma_semaphore, #tpu.memory_space<semaphore_mem>>
    %37 = tpu.memref_squeeze %36 : memref<1x!tpu.dma_semaphore, #tpu.memory_space<semaphore_mem>> -> memref<!tpu.dma_semaphore, #tpu.memory_space<semaphore_mem>>
    tpu.wait_dma2 semaphore(%37 : memref<!tpu.dma_semaphore, #tpu.memory_space<semaphore_mem>>) src(%34 : memref<1x32xf32, #tpu.memory_space<any>>) dst(%35 : memref<1x32xf32, #tpu.memory_space<vmem>>)
    %c8_i32_26 = arith.constant 8 : i32
    %38 = arith.muli %0, %c8_i32_26 : i32
    %c3_i32 = arith.constant 3 : i32
    %39 = arith.addi %38, %c3_i32 : i32
    %c0_i32_27 = arith.constant 0 : i32
    %c0_i32_28 = arith.constant 0 : i32
    %40 = tpu.memref_slice %arg3[%c0_i32_27, %c0_i32_28] : memref<64x32xf32, #tpu.memory_space<any>> -> memref<1x32xf32, #tpu.memory_space<any>>
    %c0_i32_29 = arith.constant 0 : i32
    %41 = tpu.memref_slice %arg7[%39, %c0_i32_29] : memref<16x32xf32, #tpu.memory_space<vmem>> -> memref<1x32xf32, #tpu.memory_space<vmem>>
    %42 = tpu.memref_slice %arg9[%39] : memref<16x!tpu.dma_semaphore, #tpu.memory_space<semaphore_mem>> -> memref<1x!tpu.dma_semaphore, #tpu.memory_space<semaphore_mem>>
    %43 = tpu.memref_squeeze %42 : memref<1x!tpu.dma_semaphore, #tpu.memory_space<semaphore_mem>> -> memref<!tpu.dma_semaphore, #tpu.memory_space<semaphore_mem>>
    tpu.wait_dma2 semaphore(%43 : memref<!tpu.dma_semaphore, #tpu.memory_space<semaphore_mem>>) src(%40 : memref<1x32xf32, #tpu.memory_space<any>>) dst(%41 : memref<1x32xf32, #tpu.memory_space<vmem>>)
    %c0_i32_30 = arith.constant 0 : i32
    %c0_i32_31 = arith.constant 0 : i32
    %44 = tpu.memref_slice %arg4[%c0_i32_30, %c0_i32_31] : memref<96x32xf32, #tpu.memory_space<any>> -> memref<1x32xf32, #tpu.memory_space<any>>
    %c0_i32_32 = arith.constant 0 : i32
    %45 = tpu.memref_slice %arg8[%39, %c0_i32_32] : memref<16x32xf32, #tpu.memory_space<vmem>> -> memref<1x32xf32, #tpu.memory_space<vmem>>
    %46 = tpu.memref_slice %arg10[%39] : memref<16x!tpu.dma_semaphore, #tpu.memory_space<semaphore_mem>> -> memref<1x!tpu.dma_semaphore, #tpu.memory_space<semaphore_mem>>
    %47 = tpu.memref_squeeze %46 : memref<1x!tpu.dma_semaphore, #tpu.memory_space<semaphore_mem>> -> memref<!tpu.dma_semaphore, #tpu.memory_space<semaphore_mem>>
    tpu.wait_dma2 semaphore(%47 : memref<!tpu.dma_semaphore, #tpu.memory_space<semaphore_mem>>) src(%44 : memref<1x32xf32, #tpu.memory_space<any>>) dst(%45 : memref<1x32xf32, #tpu.memory_space<vmem>>)
    %c8_i32_33 = arith.constant 8 : i32
    %48 = arith.muli %0, %c8_i32_33 : i32
    %c4_i32 = arith.constant 4 : i32
    %49 = arith.addi %48, %c4_i32 : i32
    %c0_i32_34 = arith.constant 0 : i32
    %c0_i32_35 = arith.constant 0 : i32
    %50 = tpu.memref_slice %arg3[%c0_i32_34, %c0_i32_35] : memref<64x32xf32, #tpu.memory_space<any>> -> memref<1x32xf32, #tpu.memory_space<any>>
    %c0_i32_36 = arith.constant 0 : i32
    %51 = tpu.memref_slice %arg7[%49, %c0_i32_36] : memref<16x32xf32, #tpu.memory_space<vmem>> -> memref<1x32xf32, #tpu.memory_space<vmem>>
    %52 = tpu.memref_slice %arg9[%49] : memref<16x!tpu.dma_semaphore, #tpu.memory_space<semaphore_mem>> -> memref<1x!tpu.dma_semaphore, #tpu.memory_space<semaphore_mem>>
    %53 = tpu.memref_squeeze %52 : memref<1x!tpu.dma_semaphore, #tpu.memory_space<semaphore_mem>> -> memref<!tpu.dma_semaphore, #tpu.memory_space<semaphore_mem>>
    tpu.wait_dma2 semaphore(%53 : memref<!tpu.dma_semaphore, #tpu.memory_space<semaphore_mem>>) src(%50 : memref<1x32xf32, #tpu.memory_space<any>>) dst(%51 : memref<1x32xf32, #tpu.memory_space<vmem>>)
    %c0_i32_37 = arith.constant 0 : i32
    %c0_i32_38 = arith.constant 0 : i32
    %54 = tpu.memref_slice %arg4[%c0_i32_37, %c0_i32_38] : memref<96x32xf32, #tpu.memory_space<any>> -> memref<1x32xf32, #tpu.memory_space<any>>
    %c0_i32_39 = arith.constant 0 : i32
    %55 = tpu.memref_slice %arg8[%49, %c0_i32_39] : memref<16x32xf32, #tpu.memory_space<vmem>> -> memref<1x32xf32, #tpu.memory_space<vmem>>
    %56 = tpu.memref_slice %arg10[%49] : memref<16x!tpu.dma_semaphore, #tpu.memory_space<semaphore_mem>> -> memref<1x!tpu.dma_semaphore, #tpu.memory_space<semaphore_mem>>
    %57 = tpu.memref_squeeze %56 : memref<1x!tpu.dma_semaphore, #tpu.memory_space<semaphore_mem>> -> memref<!tpu.dma_semaphore, #tpu.memory_space<semaphore_mem>>
    tpu.wait_dma2 semaphore(%57 : memref<!tpu.dma_semaphore, #tpu.memory_space<semaphore_mem>>) src(%54 : memref<1x32xf32, #tpu.memory_space<any>>) dst(%55 : memref<1x32xf32, #tpu.memory_space<vmem>>)
    %c8_i32_40 = arith.constant 8 : i32
    %58 = arith.muli %0, %c8_i32_40 : i32
    %c5_i32 = arith.constant 5 : i32
    %59 = arith.addi %58, %c5_i32 : i32
    %c0_i32_41 = arith.constant 0 : i32
    %c0_i32_42 = arith.constant 0 : i32
    %60 = tpu.memref_slice %arg3[%c0_i32_41, %c0_i32_42] : memref<64x32xf32, #tpu.memory_space<any>> -> memref<1x32xf32, #tpu.memory_space<any>>
    %c0_i32_43 = arith.constant 0 : i32
    %61 = tpu.memref_slice %arg7[%59, %c0_i32_43] : memref<16x32xf32, #tpu.memory_space<vmem>> -> memref<1x32xf32, #tpu.memory_space<vmem>>
    %62 = tpu.memref_slice %arg9[%59] : memref<16x!tpu.dma_semaphore, #tpu.memory_space<semaphore_mem>> -> memref<1x!tpu.dma_semaphore, #tpu.memory_space<semaphore_mem>>
    %63 = tpu.memref_squeeze %62 : memref<1x!tpu.dma_semaphore, #tpu.memory_space<semaphore_mem>> -> memref<!tpu.dma_semaphore, #tpu.memory_space<semaphore_mem>>
    tpu.wait_dma2 semaphore(%63 : memref<!tpu.dma_semaphore, #tpu.memory_space<semaphore_mem>>) src(%60 : memref<1x32xf32, #tpu.memory_space<any>>) dst(%61 : memref<1x32xf32, #tpu.memory_space<vmem>>)
    %c0_i32_44 = arith.constant 0 : i32
    %c0_i32_45 = arith.constant 0 : i32
    %64 = tpu.memref_slice %arg4[%c0_i32_44, %c0_i32_45] : memref<96x32xf32, #tpu.memory_space<any>> -> memref<1x32xf32, #tpu.memory_space<any>>
    %c0_i32_46 = arith.constant 0 : i32
    %65 = tpu.memref_slice %arg8[%59, %c0_i32_46] : memref<16x32xf32, #tpu.memory_space<vmem>> -> memref<1x32xf32, #tpu.memory_space<vmem>>
    %66 = tpu.memref_slice %arg10[%59] : memref<16x!tpu.dma_semaphore, #tpu.memory_space<semaphore_mem>> -> memref<1x!tpu.dma_semaphore, #tpu.memory_space<semaphore_mem>>
    %67 = tpu.memref_squeeze %66 : memref<1x!tpu.dma_semaphore, #tpu.memory_space<semaphore_mem>> -> memref<!tpu.dma_semaphore, #tpu.memory_space<semaphore_mem>>
    tpu.wait_dma2 semaphore(%67 : memref<!tpu.dma_semaphore, #tpu.memory_space<semaphore_mem>>) src(%64 : memref<1x32xf32, #tpu.memory_space<any>>) dst(%65 : memref<1x32xf32, #tpu.memory_space<vmem>>)
    %c8_i32_47 = arith.constant 8 : i32
    %68 = arith.muli %0, %c8_i32_47 : i32
    %c6_i32 = arith.constant 6 : i32
    %69 = arith.addi %68, %c6_i32 : i32
    %c0_i32_48 = arith.constant 0 : i32
    %c0_i32_49 = arith.constant 0 : i32
    %70 = tpu.memref_slice %arg3[%c0_i32_48, %c0_i32_49] : memref<64x32xf32, #tpu.memory_space<any>> -> memref<1x32xf32, #tpu.memory_space<any>>
    %c0_i32_50 = arith.constant 0 : i32
    %71 = tpu.memref_slice %arg7[%69, %c0_i32_50] : memref<16x32xf32, #tpu.memory_space<vmem>> -> memref<1x32xf32, #tpu.memory_space<vmem>>
    %72 = tpu.memref_slice %arg9[%69] : memref<16x!tpu.dma_semaphore, #tpu.memory_space<semaphore_mem>> -> memref<1x!tpu.dma_semaphore, #tpu.memory_space<semaphore_mem>>
    %73 = tpu.memref_squeeze %72 : memref<1x!tpu.dma_semaphore, #tpu.memory_space<semaphore_mem>> -> memref<!tpu.dma_semaphore, #tpu.memory_space<semaphore_mem>>
    tpu.wait_dma2 semaphore(%73 : memref<!tpu.dma_semaphore, #tpu.memory_space<semaphore_mem>>) src(%70 : memref<1x32xf32, #tpu.memory_space<any>>) dst(%71 : memref<1x32xf32, #tpu.memory_space<vmem>>)
    %c0_i32_51 = arith.constant 0 : i32
    %c0_i32_52 = arith.constant 0 : i32
    %74 = tpu.memref_slice %arg4[%c0_i32_51, %c0_i32_52] : memref<96x32xf32, #tpu.memory_space<any>> -> memref<1x32xf32, #tpu.memory_space<any>>
    %c0_i32_53 = arith.constant 0 : i32
    %75 = tpu.memref_slice %arg8[%69, %c0_i32_53] : memref<16x32xf32, #tpu.memory_space<vmem>> -> memref<1x32xf32, #tpu.memory_space<vmem>>
    %76 = tpu.memref_slice %arg10[%69] : memref<16x!tpu.dma_semaphore, #tpu.memory_space<semaphore_mem>> -> memref<1x!tpu.dma_semaphore, #tpu.memory_space<semaphore_mem>>
    %77 = tpu.memref_squeeze %76 : memref<1x!tpu.dma_semaphore, #tpu.memory_space<semaphore_mem>> -> memref<!tpu.dma_semaphore, #tpu.memory_space<semaphore_mem>>
    tpu.wait_dma2 semaphore(%77 : memref<!tpu.dma_semaphore, #tpu.memory_space<semaphore_mem>>) src(%74 : memref<1x32xf32, #tpu.memory_space<any>>) dst(%75 : memref<1x32xf32, #tpu.memory_space<vmem>>)
    %c8_i32_54 = arith.constant 8 : i32
    %78 = arith.muli %0, %c8_i32_54 : i32
    %c7_i32 = arith.constant 7 : i32
    %79 = arith.addi %78, %c7_i32 : i32
    %c0_i32_55 = arith.constant 0 : i32
    %c0_i32_56 = arith.constant 0 : i32
    %80 = tpu.memref_slice %arg3[%c0_i32_55, %c0_i32_56] : memref<64x32xf32, #tpu.memory_space<any>> -> memref<1x32xf32, #tpu.memory_space<any>>
    %c0_i32_57 = arith.constant 0 : i32
    %81 = tpu.memref_slice %arg7[%79, %c0_i32_57] : memref<16x32xf32, #tpu.memory_space<vmem>> -> memref<1x32xf32, #tpu.memory_space<vmem>>
    %82 = tpu.memref_slice %arg9[%79] : memref<16x!tpu.dma_semaphore, #tpu.memory_space<semaphore_mem>> -> memref<1x!tpu.dma_semaphore, #tpu.memory_space<semaphore_mem>>
    %83 = tpu.memref_squeeze %82 : memref<1x!tpu.dma_semaphore, #tpu.memory_space<semaphore_mem>> -> memref<!tpu.dma_semaphore, #tpu.memory_space<semaphore_mem>>
    tpu.wait_dma2 semaphore(%83 : memref<!tpu.dma_semaphore, #tpu.memory_space<semaphore_mem>>) src(%80 : memref<1x32xf32, #tpu.memory_space<any>>) dst(%81 : memref<1x32xf32, #tpu.memory_space<vmem>>)
    %c0_i32_58 = arith.constant 0 : i32
    %c0_i32_59 = arith.constant 0 : i32
    %84 = tpu.memref_slice %arg4[%c0_i32_58, %c0_i32_59] : memref<96x32xf32, #tpu.memory_space<any>> -> memref<1x32xf32, #tpu.memory_space<any>>
    %c0_i32_60 = arith.constant 0 : i32
    %85 = tpu.memref_slice %arg8[%79, %c0_i32_60] : memref<16x32xf32, #tpu.memory_space<vmem>> -> memref<1x32xf32, #tpu.memory_space<vmem>>
    %86 = tpu.memref_slice %arg10[%79] : memref<16x!tpu.dma_semaphore, #tpu.memory_space<semaphore_mem>> -> memref<1x!tpu.dma_semaphore, #tpu.memory_space<semaphore_mem>>
    %87 = tpu.memref_squeeze %86 : memref<1x!tpu.dma_semaphore, #tpu.memory_space<semaphore_mem>> -> memref<!tpu.dma_semaphore, #tpu.memory_space<semaphore_mem>>
    tpu.wait_dma2 semaphore(%87 : memref<!tpu.dma_semaphore, #tpu.memory_space<semaphore_mem>>) src(%84 : memref<1x32xf32, #tpu.memory_space<any>>) dst(%85 : memref<1x32xf32, #tpu.memory_space<vmem>>)
    %c8_i32_61 = arith.constant 8 : i32
    %88 = arith.muli %0, %c8_i32_61 : i32
    %89 = tpu.assume_multiple %88, 8 : i32
    %90 = arith.index_cast %89 : i32 to index
    %c0 = arith.constant 0 : index
    %91 = vector.load %arg7[%90, %c0] : memref<16x32xf32, #tpu.memory_space<vmem>>, vector<8x32xf32>
    %c0_62 = arith.constant 0 : index
    %c0_63 = arith.constant 0 : index
    %92 = vector.load %arg5[%c0_62, %c0_63] : memref<8x32xf32, #tpu.memory_space<vmem>>, vector<8x32xf32>
    tpu.vector_store %arg5[%c0_62, %c0_63], %91 {strides = array<i32>} : memref<8x32xf32, #tpu.memory_space<vmem>>, vector<8x32xf32>,
    %93 = arith.index_cast %89 : i32 to index
    %c0_64 = arith.constant 0 : index
    %94 = vector.load %arg8[%93, %c0_64] : memref<16x32xf32, #tpu.memory_space<vmem>>, vector<8x32xf32>
    %c0_65 = arith.constant 0 : index
    %c0_66 = arith.constant 0 : index
    %95 = vector.load %arg6[%c0_65, %c0_66] : memref<8x32xf32, #tpu.memory_space<vmem>>, vector<8x32xf32>
    tpu.vector_store %arg6[%c0_65, %c0_66], %94 {strides = array<i32>} : memref<8x32xf32, #tpu.memory_space<vmem>>, vector<8x32xf32>,
    return
  }
  func.func @transform_2(%arg0: i32, %arg1: memref<8xi32, #tpu.memory_space<smem>>, %arg2: memref<8xi32, #tpu.memory_space<smem>>) -> (i32, i32) {
    %c0_i32 = arith.constant 0 : i32
    %c0_i32_0 = arith.constant 0 : i32
    return %arg0, %c0_i32 : i32, i32
  }
  func.func @transform_3(%arg0: i32, %arg1: memref<8xi32, #tpu.memory_space<smem>>, %arg2: memref<8xi32, #tpu.memory_space<smem>>) -> (i32, i32) {
    %c0_i32 = arith.constant 0 : i32
    %c0_i32_0 = arith.constant 0 : i32
    return %arg0, %c0_i32 : i32, i32
  }
}

</mosaic_0001>

<llo_original>
// kernel: tpu_custom_call.1
$region0: #{tpu_custom_call.1}
  #allocation0 [shape = 'u32[]', space=smem, size = 0x4, offset = 0x4, fixed_abs, tag = 'smem constant byte address 0x4 - core index']
  #allocation1 [shape = 'u32[144,128]{1,0:T(1,128)}', space=vmem, size = 0x12000, scoped, tag = 'internal scratch']
  #allocation2 [shape = 'f32[16,32]{1,0:T(8,128)}', space=vmem, size = 0x2000, scoped, tag = 'scratch operand']
  #allocation3 [shape = 'f32[16,32]{1,0:T(8,128)}', space=vmem, size = 0x2000, scoped, tag = 'scratch operand']
  #allocation4 [shape = 's32[16]{0}', space=sflag, size = 0x40, scoped, tag = 'scratch operand']
  #allocation5 [shape = 's32[16]{0}', space=sflag, size = 0x40, scoped, tag = 'scratch operand']
  #allocation6 [shape = 's32[1]{0}', space=sflag, size = 0x4, scoped, tag = 'scoped memory for tpu_custom_call.1']
  #allocation7 [shape = 'u8[512]{0}', space=smem, size = 0x200, scoped, tag = 'prefetched SMEM operand 0']
  #allocation8 [shape = 'u8[512]{0}', space=smem, size = 0x200, scoped, tag = 'prefetched SMEM operand 1']
  #allocation13 [shape = 's32[]', space=sflag, size = 0x4, offset = 0, fixed_abs, tag = 'sflag constant byte address 0x0 - dummy sync flag']
  #allocation14 [shape = 's32[]', space=sflag, size = 0x4, offset = 0, fixed_abs, tag = 'sflag constant byte address 0x0 - dummy sync flag']
  #allocation15 [shape = 's32[]', space=sflag, size = 0x4, offset = 0, fixed_abs, tag = 'sflag constant byte address 0x0 - dummy sync flag']
  #allocation16 [shape = 's32[]', space=sflag, size = 0x4, offset = 0, fixed_abs, tag = 'sflag constant byte address 0x0 - dummy sync flag']
  #allocation17 [shape = 's32[]', space=sflag, size = 0x4, offset = 0, fixed_abs, tag = 'sflag constant byte address 0x0 - dummy sync flag']
  #allocation18 [shape = 's32[]', space=sflag, size = 0x4, offset = 0, fixed_abs, tag = 'sflag constant byte address 0x0 - dummy sync flag']
  #allocation19 [shape = 's32[]', space=sflag, size = 0x4, offset = 0, fixed_abs, tag = 'sflag constant byte address 0x0 - dummy sync flag']
  #allocation20 [shape = 's32[]', space=sflag, size = 0x4, offset = 0, fixed_abs, tag = 'sflag constant byte address 0x0 - dummy sync flag']
  #allocation21 [shape = 's32[]', space=sflag, size = 0x4, offset = 0, fixed_abs, tag = 'sflag constant byte address 0x0 - dummy sync flag']
  #allocation22 [shape = 's32[]', space=sflag, size = 0x4, offset = 0, fixed_abs, tag = 'sflag constant byte address 0x0 - dummy sync flag']
  #allocation23 [shape = 's32[]', space=sflag, size = 0x4, offset = 0, fixed_abs, tag = 'sflag constant byte address 0x0 - dummy sync flag']
  #allocation24 [shape = 's32[]', space=sflag, size = 0x4, offset = 0, fixed_abs, tag = 'sflag constant byte address 0x0 - dummy sync flag']
  #allocation25 [shape = 's32[]', space=sflag, size = 0x4, offset = 0, fixed_abs, tag = 'sflag constant byte address 0x0 - dummy sync flag']
  #allocation26 [shape = 's32[]', space=sflag, size = 0x4, offset = 0, fixed_abs, tag = 'sflag constant byte address 0x0 - dummy sync flag']
  #allocation27 [shape = 's32[]', space=sflag, size = 0x4, offset = 0, fixed_abs, tag = 'sflag constant byte address 0x0 - dummy sync flag']
  #allocation28 [shape = 's32[]', space=sflag, size = 0x4, offset = 0, fixed_abs, tag = 'sflag constant byte address 0x0 - dummy sync flag']
  #allocation29 [shape = 's32[]', space=sflag, size = 0x4, offset = 0, fixed_abs, tag = 'sflag constant byte address 0x0 - dummy sync flag']
  #allocation30 [shape = 's32[]', space=sflag, size = 0x4, offset = 0, fixed_abs, tag = 'sflag constant byte address 0x0 - dummy sync flag']
  #allocation31 [shape = 's32[]', space=sflag, size = 0x4, offset = 0, fixed_abs, tag = 'sflag constant byte address 0x0 - dummy sync flag']
  #allocation32 [shape = 's32[]', space=sflag, size = 0x4, offset = 0, fixed_abs, tag = 'sflag constant byte address 0x0 - dummy sync flag']
  #allocation33 [shape = 's32[]', space=sflag, size = 0x4, offset = 0, fixed_abs, tag = 'sflag constant byte address 0x0 - dummy sync flag']
  #allocation34 [shape = 's32[]', space=sflag, size = 0x4, offset = 0, fixed_abs, tag = 'sflag constant byte address 0x0 - dummy sync flag']
  #allocation35 [shape = 's32[]', space=sflag, size = 0x4, offset = 0, fixed_abs, tag = 'sflag constant byte address 0x0 - dummy sync flag']
  #allocation36 [shape = 's32[]', space=sflag, size = 0x4, offset = 0, fixed_abs, tag = 'sflag constant byte address 0x0 - dummy sync flag']
  #allocation37 [shape = 's32[]', space=sflag, size = 0x4, offset = 0, fixed_abs, tag = 'sflag constant byte address 0x0 - dummy sync flag']
  #allocation38 [shape = 's32[]', space=sflag, size = 0x4, offset = 0, fixed_abs, tag = 'sflag constant byte address 0x0 - dummy sync flag']
  #allocation39 [shape = 's32[]', space=sflag, size = 0x4, offset = 0, fixed_abs, tag = 'sflag constant byte address 0x0 - dummy sync flag']
  #allocation40 [shape = 's32[]', space=sflag, size = 0x4, offset = 0, fixed_abs, tag = 'sflag constant byte address 0x0 - dummy sync flag']
  #allocation41 [shape = 's32[]', space=sflag, size = 0x4, offset = 0, fixed_abs, tag = 'sflag constant byte address 0x0 - dummy sync flag']
  #allocation42 [shape = 's32[]', space=sflag, size = 0x4, offset = 0, fixed_abs, tag = 'sflag constant byte address 0x0 - dummy sync flag']
  #allocation43 [shape = 's32[]', space=sflag, size = 0x4, offset = 0, fixed_abs, tag = 'sflag constant byte address 0x0 - dummy sync flag']
  #allocation44 [shape = 's32[]', space=sflag, size = 0x4, offset = 0, fixed_abs, tag = 'sflag constant byte address 0x0 - dummy sync flag']
  %s0 = inlined_call_operand.vmem [shape: s32[8], index: 0, kind: input, shape index: {}]
  %s1 = inlined_call_operand.vmem [shape: s32[8], index: 1, kind: input, shape index: {}]
  %s2 = inlined_call_operand.vmem [shape: f32[64,32], index: 2, kind: input, shape index: {}]
  %s3 = inlined_call_operand.vmem [shape: f32[96,32], index: 3, kind: input, shape index: {}]
  %s4 = inlined_call_operand.hbm [shape: f32[8,32], index: 4, kind: output, shape index: {0}]
  %s5 = inlined_call_operand.hbm [shape: f32[8,32], index: 5, kind: output, shape index: {1}]
  %6 = xla_tuple %s4, %s5
  %s7 = sld [smem:[#allocation0]]
  $region986: #{tpu_custom_call.1} parent=0
    _
  %s9 = ssub.s32 1, %s7
  %s10 = scalar_select 0, %s9, %s7
  %s11 = sshll.u32 %s0, 4
  %s12 = int_to_ptr.vmem [resolvable:$true] %s11
  %14 = dma.vmem_to_smem %s12, 16, [#allocation7], [#allocation6]
  %s15 = sshll.u32 %s1, 4
  %s16 = int_to_ptr.vmem [resolvable:$true] %s15
  %18 = dma.vmem_to_smem %s16, 16, [#allocation8], [#allocation6]
  %19 = dma.done [#allocation6], 32
  %20 = sfence
  $region1: #{tpu_custom_call.1} parent=0
    #allocation9 [shape = 'u8[4096]{0}', space=vmem, size = 0x1000, scoped, tag = 'output window, operand 0, single buffered']
    #allocation10 [shape = 's32[1]{0}', space=sflag, size = 0x4, scoped, tag = 'scoped memory for tpu_custom_call.1']
    #allocation11 [shape = 'u8[4096]{0}', space=vmem, size = 0x1000, scoped, tag = 'output window, operand 1, single buffered']
    #allocation12 [shape = 's32[1]{0}', space=sflag, size = 0x4, scoped, tag = 'scoped memory for tpu_custom_call.1']
    %21 = vsyncpa [#allocation10], 0
    %22 = vsyncpa [#allocation12], 0
    %s23 = ssub.s32 0, 0
    %s24 = ssub.s32 0, 0
    %p25 = scmp.eq.s32.totalorder 0, 0
    // Predicated region
    $region2: #{tpu_custom_call.1} parent=1 // pred_check
      %p26 = pneg %p25
    $region3: #{tpu_custom_call.1} parent=1 // pred_check_branch
      %28 = sbr.rel (%p26) target = $region5
    $region4: #{tpu_custom_call.1} parent=1 // pred_region
      %s29 = sld [smem:[#allocation7]]
      %s30 = scalar_lea.vmem %s2, %s29
      %p32 = scmp.lt.u32.totalorder 1, 8
      %p33 = pneg %p32
      // Predicated region
      $region6: #{tpu_custom_call.1} parent=4 // pred_check
        _
      $region7: #{tpu_custom_call.1} parent=4 // pred_check_branch
        %35 = sbr.rel (%p32) target = $region9
      $region8: #{tpu_custom_call.1} parent=4 // pred_region
        %s51 = sand.u32 1, 7
        %p52 = scmp.eq.s32.totalorder %s51, 0
        %p53 = pneg %p52
        // Predicated region
        $region21: #{tpu_custom_call.1} parent=8 // pred_check
          _
        $region22: #{tpu_custom_call.1} parent=8 // pred_check_branch
          %55 = sbr.rel (%p52) target = $region24
        $region23: #{tpu_custom_call.1} parent=8 // pred_region
          %s56 = sand.u32 1, 7
          %s57 = ssub.s32 1, %s56
          %s58 = scalar_lea.vmem %s30, %s57
          %s59 = ssub.s32 1, %s56
          %s60 = scalar_lea.vmem [#allocation2], %s59
          %s61 = sshll.u32 1, %s56
          %s62 = ssub.s32 %s61, 1
          loop: start=0, step=1, limit=1
          $region25: #{tpu_custom_call.1} parent=23 // loop_pre_header
            _
          $region26: #{tpu_custom_call.1} parent=23 // loop_header
            %s64 = sphi 0, %s68
            %p65 = scmp.ge.s32.totalorder %s64, 1
            %s69 = sphi %s58, %s58
            %s70 = sphi %s60, %s60
          $region27: #{tpu_custom_call.1} parent=23 // loop_header_branch
            %67 = sbr.rel (%p65) target = $region31
          $region28: #{tpu_custom_call.1} parent=23 // loop_body
            %v71 = vld [vmem:[%s69] sm:%s62]
            %72 = vst [vmem:[%s70] sm:%s62] %v71
          $region29: #{tpu_custom_call.1} parent=23 // loop_footer
            %s68 = sadd.s32 1, %s64
          $region30: #{tpu_custom_call.1} parent=23 // loop_footer_branch
            %63 = sbr.rel target = $region26
          $region31: #{tpu_custom_call.1} parent=23 // loop_exit
            _
        $region24: #{tpu_custom_call.1} parent=8 // pred_fallthru
          _
      $region9: #{tpu_custom_call.1} parent=4 // pred_fallthru
        _
      // Predicated region
      $region10: #{tpu_custom_call.1} parent=4 // pred_check
        %p36 = pneg %p32
      $region11: #{tpu_custom_call.1} parent=4 // pred_check_branch
        %38 = sbr.rel (%p36) target = $region13
      $region12: #{tpu_custom_call.1} parent=4 // pred_region
        %s39 = sshll.u32 1, 1
        %s40 = ssub.s32 %s39, 1
        loop: start=0, step=1, limit=1
        $region14: #{tpu_custom_call.1} parent=12 // loop_pre_header
          _
        $region15: #{tpu_custom_call.1} parent=12 // loop_header
          %s42 = sphi 0, %s46
          %p43 = scmp.ge.s32.totalorder %s42, 1
          %s47 = sphi %s30, %s30
          %s48 = sphi [#allocation2], [#allocation2]
        $region16: #{tpu_custom_call.1} parent=12 // loop_header_branch
          %45 = sbr.rel (%p43) target = $region20
        $region17: #{tpu_custom_call.1} parent=12 // loop_body
          %v49 = vld [vmem:[%s47] sm:%s40]
          %50 = vst [vmem:[%s48] sm:%s40] %v49
        $region18: #{tpu_custom_call.1} parent=12 // loop_footer
          %s46 = sadd.s32 1, %s42
        $region19: #{tpu_custom_call.1} parent=12 // loop_footer_branch
          %41 = sbr.rel target = $region15
        $region20: #{tpu_custom_call.1} parent=12 // loop_exit
          _
      $region13: #{tpu_custom_call.1} parent=4 // pred_fallthru
        _
      // Predicated region
      $region32: #{tpu_custom_call.1} parent=4 // pred_check
        _
      $region33: #{tpu_custom_call.1} parent=4 // pred_check_branch
        %75 = sbr.rel (0) target = $region35
      $region34: #{tpu_custom_call.1} parent=4 // pred_region
        %76 = vsyncadd [#allocation4], 16
      $region35: #{tpu_custom_call.1} parent=4 // pred_fallthru
        _
      %s77 = sld [smem:[#allocation8]]
      %s78 = scalar_lea.vmem %s3, %s77
      %p80 = scmp.lt.u32.totalorder 1, 8
      %p81 = pneg %p80
      // Predicated region
      $region36: #{tpu_custom_call.1} parent=4 // pred_check
        _
      $region37: #{tpu_custom_call.1} parent=4 // pred_check_branch
        %83 = sbr.rel (%p80) target = $region39
      $region38: #{tpu_custom_call.1} parent=4 // pred_region
        %s99 = sand.u32 1, 7
        %p100 = scmp.eq.s32.totalorder %s99, 0
        %p101 = pneg %p100
        // Predicated region
        $region51: #{tpu_custom_call.1} parent=38 // pred_check
          _
        $region52: #{tpu_custom_call.1} parent=38 // pred_check_branch
          %103 = sbr.rel (%p100) target = $region54
        $region53: #{tpu_custom_call.1} parent=38 // pred_region
          %s104 = sand.u32 1, 7
          %s105 = ssub.s32 1, %s104
          %s106 = scalar_lea.vmem %s78, %s105
          %s107 = ssub.s32 1, %s104
          %s108 = scalar_lea.vmem [#allocation3], %s107
          %s109 = sshll.u32 1, %s104
          %s110 = ssub.s32 %s109, 1
          loop: start=0, step=1, limit=1
          $region55: #{tpu_custom_call.1} parent=53 // loop_pre_header
            _
          $region56: #{tpu_custom_call.1} parent=53 // loop_header
            %s112 = sphi 0, %s116
            %p113 = scmp.ge.s32.totalorder %s112, 1
            %s117 = sphi %s106, %s106
            %s118 = sphi %s108, %s108
          $region57: #{tpu_custom_call.1} parent=53 // loop_header_branch
            %115 = sbr.rel (%p113) target = $region61
          $region58: #{tpu_custom_call.1} parent=53 // loop_body
            %v119 = vld [vmem:[%s117] sm:%s110]
            %120 = vst [vmem:[%s118] sm:%s110] %v119
          $region59: #{tpu_custom_call.1} parent=53 // loop_footer
            %s116 = sadd.s32 1, %s112
          $region60: #{tpu_custom_call.1} parent=53 // loop_footer_branch
            %111 = sbr.rel target = $region56
          $region61: #{tpu_custom_call.1} parent=53 // loop_exit
            _
        $region54: #{tpu_custom_call.1} parent=38 // pred_fallthru
          _
      $region39: #{tpu_custom_call.1} parent=4 // pred_fallthru
        _
      // Predicated region
      $region40: #{tpu_custom_call.1} parent=4 // pred_check
        %p84 = pneg %p80
      $region41: #{tpu_custom_call.1} parent=4 // pred_check_branch
        %86 = sbr.rel (%p84) target = $region43
      $region42: #{tpu_custom_call.1} parent=4 // pred_region
        %s87 = sshll.u32 1, 1
        %s88 = ssub.s32 %s87, 1
        loop: start=0, step=1, limit=1
        $region44: #{tpu_custom_call.1} parent=42 // loop_pre_header
          _
        $region45: #{tpu_custom_call.1} parent=42 // loop_header
          %s90 = sphi 0, %s94
          %p91 = scmp.ge.s32.totalorder %s90, 1
          %s95 = sphi %s78, %s78
          %s96 = sphi [#allocation3], [#allocation3]
        $region46: #{tpu_custom_call.1} parent=42 // loop_header_branch
          %93 = sbr.rel (%p91) target = $region50
        $region47: #{tpu_custom_call.1} parent=42 // loop_body
          %v97 = vld [vmem:[%s95] sm:%s88]
          %98 = vst [vmem:[%s96] sm:%s88] %v97
        $region48: #{tpu_custom_call.1} parent=42 // loop_footer
          %s94 = sadd.s32 1, %s90
        $region49: #{tpu_custom_call.1} parent=42 // loop_footer_branch
          %89 = sbr.rel target = $region45
        $region50: #{tpu_custom_call.1} parent=42 // loop_exit
          _
      $region43: #{tpu_custom_call.1} parent=4 // pred_fallthru
        _
      // Predicated region
      $region62: #{tpu_custom_call.1} parent=4 // pred_check
        _
      $region63: #{tpu_custom_call.1} parent=4 // pred_check_branch
        %123 = sbr.rel (0) target = $region65
      $region64: #{tpu_custom_call.1} parent=4 // pred_region
        %124 = vsyncadd [#allocation5], 16
      $region65: #{tpu_custom_call.1} parent=4 // pred_fallthru
        _
      %s125 = sld [smem:[#allocation7 + $0x1]]
      %s126 = scalar_lea.vmem %s2, %s125
      %s127 = scalar_lea.vmem [#allocation2], 1
      %s128 = scalar_lea.sflag [#allocation4], 1
      %p130 = scmp.lt.u32.totalorder 1, 8
      %p131 = pneg %p130
      // Predicated region
      $region66: #{tpu_custom_call.1} parent=4 // pred_check
        _
      $region67: #{tpu_custom_call.1} parent=4 // pred_check_branch
        %133 = sbr.rel (%p130) target = $region69
      $region68: #{tpu_custom_call.1} parent=4 // pred_region
        %s149 = sand.u32 1, 7
        %p150 = scmp.eq.s32.totalorder %s149, 0
        %p151 = pneg %p150
        // Predicated region
        $region81: #{tpu_custom_call.1} parent=68 // pred_check
          _
        $region82: #{tpu_custom_call.1} parent=68 // pred_check_branch
          %153 = sbr.rel (%p150) target = $region84
        $region83: #{tpu_custom_call.1} parent=68 // pred_region
          %s154 = sand.u32 1, 7
          %s155 = ssub.s32 1, %s154
          %s156 = scalar_lea.vmem %s126, %s155
          %s157 = ssub.s32 1, %s154
          %s158 = scalar_lea.vmem %s127, %s157 [#allocation2]
          %s159 = sshll.u32 1, %s154
          %s160 = ssub.s32 %s159, 1
          loop: start=0, step=1, limit=1
          $region85: #{tpu_custom_call.1} parent=83 // loop_pre_header
            _
          $region86: #{tpu_custom_call.1} parent=83 // loop_header
            %s162 = sphi 0, %s166
            %p163 = scmp.ge.s32.totalorder %s162, 1
            %s167 = sphi %s156, %s156
            %s168 = sphi %s158, %s158
          $region87: #{tpu_custom_call.1} parent=83 // loop_header_branch
            %165 = sbr.rel (%p163) target = $region91
          $region88: #{tpu_custom_call.1} parent=83 // loop_body
            %v169 = vld [vmem:[%s167] sm:%s160]
            %170 = vst [vmem:[%s168] sm:%s160] %v169
          $region89: #{tpu_custom_call.1} parent=83 // loop_footer
            %s166 = sadd.s32 1, %s162
          $region90: #{tpu_custom_call.1} parent=83 // loop_footer_branch
            %161 = sbr.rel target = $region86
          $region91: #{tpu_custom_call.1} parent=83 // loop_exit
            _
        $region84: #{tpu_custom_call.1} parent=68 // pred_fallthru
          _
      $region69: #{tpu_custom_call.1} parent=4 // pred_fallthru
        _
      // Predicated region
      $region70: #{tpu_custom_call.1} parent=4 // pred_check
        %p134 = pneg %p130
      $region71: #{tpu_custom_call.1} parent=4 // pred_check_branch
        %136 = sbr.rel (%p134) target = $region73
      $region72: #{tpu_custom_call.1} parent=4 // pred_region
        %s137 = sshll.u32 1, 1
        %s138 = ssub.s32 %s137, 1
        loop: start=0, step=1, limit=1
        $region74: #{tpu_custom_call.1} parent=72 // loop_pre_header
          _
        $region75: #{tpu_custom_call.1} parent=72 // loop_header
          %s140 = sphi 0, %s144
          %p141 = scmp.ge.s32.totalorder %s140, 1
          %s145 = sphi %s126, %s126
          %s146 = sphi %s127, %s127
        $region76: #{tpu_custom_call.1} parent=72 // loop_header_branch
          %143 = sbr.rel (%p141) target = $region80
        $region77: #{tpu_custom_call.1} parent=72 // loop_body
          %v147 = vld [vmem:[%s145] sm:%s138]
          %148 = vst [vmem:[%s146] sm:%s138] %v147
        $region78: #{tpu_custom_call.1} parent=72 // loop_footer
          %s144 = sadd.s32 1, %s140
        $region79: #{tpu_custom_call.1} parent=72 // loop_footer_branch
          %139 = sbr.rel target = $region75
        $region80: #{tpu_custom_call.1} parent=72 // loop_exit
          _
      $region73: #{tpu_custom_call.1} parent=4 // pred_fallthru
        _
      // Predicated region
      $region92: #{tpu_custom_call.1} parent=4 // pred_check
        _
      $region93: #{tpu_custom_call.1} parent=4 // pred_check_branch
        %173 = sbr.rel (0) target = $region95
      $region94: #{tpu_custom_call.1} parent=4 // pred_region
        %174 = vsyncadd %s128, 16
      $region95: #{tpu_custom_call.1} parent=4 // pred_fallthru
        _
      %s175 = sld [smem:[#allocation8 + $0x1]]
      %s176 = scalar_lea.vmem %s3, %s175
      %s177 = scalar_lea.vmem [#allocation3], 1
      %s178 = scalar_lea.sflag [#allocation5], 1
      %p180 = scmp.lt.u32.totalorder 1, 8
      %p181 = pneg %p180
      // Predicated region
      $region96: #{tpu_custom_call.1} parent=4 // pred_check
        _
      $region97: #{tpu_custom_call.1} parent=4 // pred_check_branch
        %183 = sbr.rel (%p180) target = $region99
      $region98: #{tpu_custom_call.1} parent=4 // pred_region
        %s199 = sand.u32 1, 7
        %p200 = scmp.eq.s32.totalorder %s199, 0
        %p201 = pneg %p200
        // Predicated region
        $region111: #{tpu_custom_call.1} parent=98 // pred_check
          _
        $region112: #{tpu_custom_call.1} parent=98 // pred_check_branch
          %203 = sbr.rel (%p200) target = $region114
        $region113: #{tpu_custom_call.1} parent=98 // pred_region
          %s204 = sand.u32 1, 7
          %s205 = ssub.s32 1, %s204
          %s206 = scalar_lea.vmem %s176, %s205
          %s207 = ssub.s32 1, %s204
          %s208 = scalar_lea.vmem %s177, %s207 [#allocation3]
          %s209 = sshll.u32 1, %s204
          %s210 = ssub.s32 %s209, 1
          loop: start=0, step=1, limit=1
          $region115: #{tpu_custom_call.1} parent=113 // loop_pre_header
            _
          $region116: #{tpu_custom_call.1} parent=113 // loop_header
            %s212 = sphi 0, %s216
            %p213 = scmp.ge.s32.totalorder %s212, 1
            %s217 = sphi %s206, %s206
            %s218 = sphi %s208, %s208
          $region117: #{tpu_custom_call.1} parent=113 // loop_header_branch
            %215 = sbr.rel (%p213) target = $region121
          $region118: #{tpu_custom_call.1} parent=113 // loop_body
            %v219 = vld [vmem:[%s217] sm:%s210]
            %220 = vst [vmem:[%s218] sm:%s210] %v219
          $region119: #{tpu_custom_call.1} parent=113 // loop_footer
            %s216 = sadd.s32 1, %s212
          $region120: #{tpu_custom_call.1} parent=113 // loop_footer_branch
            %211 = sbr.rel target = $region116
          $region121: #{tpu_custom_call.1} parent=113 // loop_exit
            _
        $region114: #{tpu_custom_call.1} parent=98 // pred_fallthru
          _
      $region99: #{tpu_custom_call.1} parent=4 // pred_fallthru
        _
      // Predicated region
      $region100: #{tpu_custom_call.1} parent=4 // pred_check
        %p184 = pneg %p180
      $region101: #{tpu_custom_call.1} parent=4 // pred_check_branch
        %186 = sbr.rel (%p184) target = $region103
      $region102: #{tpu_custom_call.1} parent=4 // pred_region
        %s187 = sshll.u32 1, 1
        %s188 = ssub.s32 %s187, 1
        loop: start=0, step=1, limit=1
        $region104: #{tpu_custom_call.1} parent=102 // loop_pre_header
          _
        $region105: #{tpu_custom_call.1} parent=102 // loop_header
          %s190 = sphi 0, %s194
          %p191 = scmp.ge.s32.totalorder %s190, 1
          %s195 = sphi %s176, %s176
          %s196 = sphi %s177, %s177
        $region106: #{tpu_custom_call.1} parent=102 // loop_header_branch
          %193 = sbr.rel (%p191) target = $region110
        $region107: #{tpu_custom_call.1} parent=102 // loop_body
          %v197 = vld [vmem:[%s195] sm:%s188]
          %198 = vst [vmem:[%s196] sm:%s188] %v197
        $region108: #{tpu_custom_call.1} parent=102 // loop_footer
          %s194 = sadd.s32 1, %s190
        $region109: #{tpu_custom_call.1} parent=102 // loop_footer_branch
          %189 = sbr.rel target = $region105
        $region110: #{tpu_custom_call.1} parent=102 // loop_exit
          _
      $region103: #{tpu_custom_call.1} parent=4 // pred_fallthru
        _
      // Predicated region
      $region122: #{tpu_custom_call.1} parent=4 // pred_check
        _
      $region123: #{tpu_custom_call.1} parent=4 // pred_check_branch
        %223 = sbr.rel (0) target = $region125
      $region124: #{tpu_custom_call.1} parent=4 // pred_region
        %224 = vsyncadd %s178, 16
      $region125: #{tpu_custom_call.1} parent=4 // pred_fallthru
        _
      %s225 = sld [smem:[#allocation7 + $0x2]]
      %s226 = scalar_lea.vmem %s2, %s225
      %s227 = scalar_lea.vmem [#allocation2], 2
      %s228 = scalar_lea.sflag [#allocation4], 2
      %p230 = scmp.lt.u32.totalorder 1, 8
      %p231 = pneg %p230
      // Predicated region
      $region126: #{tpu_custom_call.1} parent=4 // pred_check
        _
      $region127: #{tpu_custom_call.1} parent=4 // pred_check_branch
        %233 = sbr.rel (%p230) target = $region129
      $region128: #{tpu_custom_call.1} parent=4 // pred_region
        %s249 = sand.u32 1, 7
        %p250 = scmp.eq.s32.totalorder %s249, 0
        %p251 = pneg %p250
        // Predicated region
        $region141: #{tpu_custom_call.1} parent=128 // pred_check
          _
        $region142: #{tpu_custom_call.1} parent=128 // pred_check_branch
          %253 = sbr.rel (%p250) target = $region144
        $region143: #{tpu_custom_call.1} parent=128 // pred_region
          %s254 = sand.u32 1, 7
          %s255 = ssub.s32 1, %s254
          %s256 = scalar_lea.vmem %s226, %s255
          %s257 = ssub.s32 1, %s254
          %s258 = scalar_lea.vmem %s227, %s257 [#allocation2]
          %s259 = sshll.u32 1, %s254
          %s260 = ssub.s32 %s259, 1
          loop: start=0, step=1, limit=1
          $region145: #{tpu_custom_call.1} parent=143 // loop_pre_header
            _
          $region146: #{tpu_custom_call.1} parent=143 // loop_header
            %s262 = sphi 0, %s266
            %p263 = scmp.ge.s32.totalorder %s262, 1
            %s267 = sphi %s256, %s256
            %s268 = sphi %s258, %s258
          $region147: #{tpu_custom_call.1} parent=143 // loop_header_branch
            %265 = sbr.rel (%p263) target = $region151
          $region148: #{tpu_custom_call.1} parent=143 // loop_body
            %v269 = vld [vmem:[%s267] sm:%s260]
            %270 = vst [vmem:[%s268] sm:%s260] %v269
          $region149: #{tpu_custom_call.1} parent=143 // loop_footer
            %s266 = sadd.s32 1, %s262
          $region150: #{tpu_custom_call.1} parent=143 // loop_footer_branch
            %261 = sbr.rel target = $region146
          $region151: #{tpu_custom_call.1} parent=143 // loop_exit
            _
        $region144: #{tpu_custom_call.1} parent=128 // pred_fallthru
          _
      $region129: #{tpu_custom_call.1} parent=4 // pred_fallthru
        _
      // Predicated region
      $region130: #{tpu_custom_call.1} parent=4 // pred_check
        %p234 = pneg %p230
      $region131: #{tpu_custom_call.1} parent=4 // pred_check_branch
        %236 = sbr.rel (%p234) target = $region133
      $region132: #{tpu_custom_call.1} parent=4 // pred_region
        %s237 = sshll.u32 1, 1
        %s238 = ssub.s32 %s237, 1
        loop: start=0, step=1, limit=1
        $region134: #{tpu_custom_call.1} parent=132 // loop_pre_header
          _
        $region135: #{tpu_custom_call.1} parent=132 // loop_header
          %s240 = sphi 0, %s244
          %p241 = scmp.ge.s32.totalorder %s240, 1
          %s245 = sphi %s226, %s226
          %s246 = sphi %s227, %s227
        $region136: #{tpu_custom_call.1} parent=132 // loop_header_branch
          %243 = sbr.rel (%p241) target = $region140
        $region137: #{tpu_custom_call.1} parent=132 // loop_body
          %v247 = vld [vmem:[%s245] sm:%s238]
          %248 = vst [vmem:[%s246] sm:%s238] %v247
        $region138: #{tpu_custom_call.1} parent=132 // loop_footer
          %s244 = sadd.s32 1, %s240
        $region139: #{tpu_custom_call.1} parent=132 // loop_footer_branch
          %239 = sbr.rel target = $region135
        $region140: #{tpu_custom_call.1} parent=132 // loop_exit
          _
      $region133: #{tpu_custom_call.1} parent=4 // pred_fallthru
        _
      // Predicated region
      $region152: #{tpu_custom_call.1} parent=4 // pred_check
        _
      $region153: #{tpu_custom_call.1} parent=4 // pred_check_branch
        %273 = sbr.rel (0) target = $region155
      $region154: #{tpu_custom_call.1} parent=4 // pred_region
        %274 = vsyncadd %s228, 16
      $region155: #{tpu_custom_call.1} parent=4 // pred_fallthru
        _
      %s275 = sld [smem:[#allocation8 + $0x2]]
      %s276 = scalar_lea.vmem %s3, %s275
      %s277 = scalar_lea.vmem [#allocation3], 2
      %s278 = scalar_lea.sflag [#allocation5], 2
      %p280 = scmp.lt.u32.totalorder 1, 8
      %p281 = pneg %p280
      // Predicated region
      $region156: #{tpu_custom_call.1} parent=4 // pred_check
        _
      $region157: #{tpu_custom_call.1} parent=4 // pred_check_branch
        %283 = sbr.rel (%p280) target = $region159
      $region158: #{tpu_custom_call.1} parent=4 // pred_region
        %s299 = sand.u32 1, 7
        %p300 = scmp.eq.s32.totalorder %s299, 0
        %p301 = pneg %p300
        // Predicated region
        $region171: #{tpu_custom_call.1} parent=158 // pred_check
          _
        $region172: #{tpu_custom_call.1} parent=158 // pred_check_branch
          %303 = sbr.rel (%p300) target = $region174
        $region173: #{tpu_custom_call.1} parent=158 // pred_region
          %s304 = sand.u32 1, 7
          %s305 = ssub.s32 1, %s304
          %s306 = scalar_lea.vmem %s276, %s305
          %s307 = ssub.s32 1, %s304
          %s308 = scalar_lea.vmem %s277, %s307 [#allocation3]
          %s309 = sshll.u32 1, %s304
          %s310 = ssub.s32 %s309, 1
          loop: start=0, step=1, limit=1
          $region175: #{tpu_custom_call.1} parent=173 // loop_pre_header
            _
          $region176: #{tpu_custom_call.1} parent=173 // loop_header
            %s312 = sphi 0, %s316
            %p313 = scmp.ge.s32.totalorder %s312, 1
            %s317 = sphi %s306, %s306
            %s318 = sphi %s308, %s308
          $region177: #{tpu_custom_call.1} parent=173 // loop_header_branch
            %315 = sbr.rel (%p313) target = $region181
          $region178: #{tpu_custom_call.1} parent=173 // loop_body
            %v319 = vld [vmem:[%s317] sm:%s310]
            %320 = vst [vmem:[%s318] sm:%s310] %v319
          $region179: #{tpu_custom_call.1} parent=173 // loop_footer
            %s316 = sadd.s32 1, %s312
          $region180: #{tpu_custom_call.1} parent=173 // loop_footer_branch
            %311 = sbr.rel target = $region176
          $region181: #{tpu_custom_call.1} parent=173 // loop_exit
            _
        $region174: #{tpu_custom_call.1} parent=158 // pred_fallthru
          _
      $region159: #{tpu_custom_call.1} parent=4 // pred_fallthru
        _
      // Predicated region
      $region160: #{tpu_custom_call.1} parent=4 // pred_check
        %p284 = pneg %p280
      $region161: #{tpu_custom_call.1} parent=4 // pred_check_branch
        %286 = sbr.rel (%p284) target = $region163
      $region162: #{tpu_custom_call.1} parent=4 // pred_region
        %s287 = sshll.u32 1, 1
        %s288 = ssub.s32 %s287, 1
        loop: start=0, step=1, limit=1
        $region164: #{tpu_custom_call.1} parent=162 // loop_pre_header
          _
        $region165: #{tpu_custom_call.1} parent=162 // loop_header
          %s290 = sphi 0, %s294
          %p291 = scmp.ge.s32.totalorder %s290, 1
          %s295 = sphi %s276, %s276
          %s296 = sphi %s277, %s277
        $region166: #{tpu_custom_call.1} parent=162 // loop_header_branch
          %293 = sbr.rel (%p291) target = $region170
        $region167: #{tpu_custom_call.1} parent=162 // loop_body
          %v297 = vld [vmem:[%s295] sm:%s288]
          %298 = vst [vmem:[%s296] sm:%s288] %v297
        $region168: #{tpu_custom_call.1} parent=162 // loop_footer
          %s294 = sadd.s32 1, %s290
        $region169: #{tpu_custom_call.1} parent=162 // loop_footer_branch
          %289 = sbr.rel target = $region165
        $region170: #{tpu_custom_call.1} parent=162 // loop_exit
          _
      $region163: #{tpu_custom_call.1} parent=4 // pred_fallthru
        _
      // Predicated region
      $region182: #{tpu_custom_call.1} parent=4 // pred_check
        _
      $region183: #{tpu_custom_call.1} parent=4 // pred_check_branch
        %323 = sbr.rel (0) target = $region185
      $region184: #{tpu_custom_call.1} parent=4 // pred_region
        %324 = vsyncadd %s278, 16
      $region185: #{tpu_custom_call.1} parent=4 // pred_fallthru
        _
      %s325 = sld [smem:[#allocation7 + $0x3]]
      %s326 = scalar_lea.vmem %s2, %s325
      %s327 = scalar_lea.vmem [#allocation2], 3
      %s328 = scalar_lea.sflag [#allocation4], 3
      %p330 = scmp.lt.u32.totalorder 1, 8
      %p331 = pneg %p330
      // Predicated region
      $region186: #{tpu_custom_call.1} parent=4 // pred_check
        _
      $region187: #{tpu_custom_call.1} parent=4 // pred_check_branch
        %333 = sbr.rel (%p330) target = $region189
      $region188: #{tpu_custom_call.1} parent=4 // pred_region
        %s349 = sand.u32 1, 7
        %p350 = scmp.eq.s32.totalorder %s349, 0
        %p351 = pneg %p350
        // Predicated region
        $region201: #{tpu_custom_call.1} parent=188 // pred_check
          _
        $region202: #{tpu_custom_call.1} parent=188 // pred_check_branch
          %353 = sbr.rel (%p350) target = $region204
        $region203: #{tpu_custom_call.1} parent=188 // pred_region
          %s354 = sand.u32 1, 7
          %s355 = ssub.s32 1, %s354
          %s356 = scalar_lea.vmem %s326, %s355
          %s357 = ssub.s32 1, %s354
          %s358 = scalar_lea.vmem %s327, %s357 [#allocation2]
          %s359 = sshll.u32 1, %s354
          %s360 = ssub.s32 %s359, 1
          loop: start=0, step=1, limit=1
          $region205: #{tpu_custom_call.1} parent=203 // loop_pre_header
            _
          $region206: #{tpu_custom_call.1} parent=203 // loop_header
            %s362 = sphi 0, %s366
            %p363 = scmp.ge.s32.totalorder %s362, 1
            %s367 = sphi %s356, %s356
            %s368 = sphi %s358, %s358
          $region207: #{tpu_custom_call.1} parent=203 // loop_header_branch
            %365 = sbr.rel (%p363) target = $region211
          $region208: #{tpu_custom_call.1} parent=203 // loop_body
            %v369 = vld [vmem:[%s367] sm:%s360]
            %370 = vst [vmem:[%s368] sm:%s360] %v369
          $region209: #{tpu_custom_call.1} parent=203 // loop_footer
            %s366 = sadd.s32 1, %s362
          $region210: #{tpu_custom_call.1} parent=203 // loop_footer_branch
            %361 = sbr.rel target = $region206
          $region211: #{tpu_custom_call.1} parent=203 // loop_exit
            _
        $region204: #{tpu_custom_call.1} parent=188 // pred_fallthru
          _
      $region189: #{tpu_custom_call.1} parent=4 // pred_fallthru
        _
      // Predicated region
      $region190: #{tpu_custom_call.1} parent=4 // pred_check
        %p334 = pneg %p330
      $region191: #{tpu_custom_call.1} parent=4 // pred_check_branch
        %336 = sbr.rel (%p334) target = $region193
      $region192: #{tpu_custom_call.1} parent=4 // pred_region
        %s337 = sshll.u32 1, 1
        %s338 = ssub.s32 %s337, 1
        loop: start=0, step=1, limit=1
        $region194: #{tpu_custom_call.1} parent=192 // loop_pre_header
          _
        $region195: #{tpu_custom_call.1} parent=192 // loop_header
          %s340 = sphi 0, %s344
          %p341 = scmp.ge.s32.totalorder %s340, 1
          %s345 = sphi %s326, %s326
          %s346 = sphi %s327, %s327
        $region196: #{tpu_custom_call.1} parent=192 // loop_header_branch
          %343 = sbr.rel (%p341) target = $region200
        $region197: #{tpu_custom_call.1} parent=192 // loop_body
          %v347 = vld [vmem:[%s345] sm:%s338]
          %348 = vst [vmem:[%s346] sm:%s338] %v347
        $region198: #{tpu_custom_call.1} parent=192 // loop_footer
          %s344 = sadd.s32 1, %s340
        $region199: #{tpu_custom_call.1} parent=192 // loop_footer_branch
          %339 = sbr.rel target = $region195
        $region200: #{tpu_custom_call.1} parent=192 // loop_exit
          _
      $region193: #{tpu_custom_call.1} parent=4 // pred_fallthru
        _
      // Predicated region
      $region212: #{tpu_custom_call.1} parent=4 // pred_check
        _
      $region213: #{tpu_custom_call.1} parent=4 // pred_check_branch
        %373 = sbr.rel (0) target = $region215
      $region214: #{tpu_custom_call.1} parent=4 // pred_region
        %374 = vsyncadd %s328, 16
      $region215: #{tpu_custom_call.1} parent=4 // pred_fallthru
        _
      %s375 = sld [smem:[#allocation8 + $0x3]]
      %s376 = scalar_lea.vmem %s3, %s375
      %s377 = scalar_lea.vmem [#allocation3], 3
      %s378 = scalar_lea.sflag [#allocation5], 3
      %p380 = scmp.lt.u32.totalorder 1, 8
      %p381 = pneg %p380
      // Predicated region
      $region216: #{tpu_custom_call.1} parent=4 // pred_check
        _
      $region217: #{tpu_custom_call.1} parent=4 // pred_check_branch
        %383 = sbr.rel (%p380) target = $region219
      $region218: #{tpu_custom_call.1} parent=4 // pred_region
        %s399 = sand.u32 1, 7
        %p400 = scmp.eq.s32.totalorder %s399, 0
        %p401 = pneg %p400
        // Predicated region
        $region231: #{tpu_custom_call.1} parent=218 // pred_check
          _
        $region232: #{tpu_custom_call.1} parent=218 // pred_check_branch
          %403 = sbr.rel (%p400) target = $region234
        $region233: #{tpu_custom_call.1} parent=218 // pred_region
          %s404 = sand.u32 1, 7
          %s405 = ssub.s32 1, %s404
          %s406 = scalar_lea.vmem %s376, %s405
          %s407 = ssub.s32 1, %s404
          %s408 = scalar_lea.vmem %s377, %s407 [#allocation3]
          %s409 = sshll.u32 1, %s404
          %s410 = ssub.s32 %s409, 1
          loop: start=0, step=1, limit=1
          $region235: #{tpu_custom_call.1} parent=233 // loop_pre_header
            _
          $region236: #{tpu_custom_call.1} parent=233 // loop_header
            %s412 = sphi 0, %s416
            %p413 = scmp.ge.s32.totalorder %s412, 1
            %s417 = sphi %s406, %s406
            %s418 = sphi %s408, %s408
          $region237: #{tpu_custom_call.1} parent=233 // loop_header_branch
            %415 = sbr.rel (%p413) target = $region241
          $region238: #{tpu_custom_call.1} parent=233 // loop_body
            %v419 = vld [vmem:[%s417] sm:%s410]
            %420 = vst [vmem:[%s418] sm:%s410] %v419
          $region239: #{tpu_custom_call.1} parent=233 // loop_footer
            %s416 = sadd.s32 1, %s412
          $region240: #{tpu_custom_call.1} parent=233 // loop_footer_branch
            %411 = sbr.rel target = $region236
          $region241: #{tpu_custom_call.1} parent=233 // loop_exit
            _
        $region234: #{tpu_custom_call.1} parent=218 // pred_fallthru
          _
      $region219: #{tpu_custom_call.1} parent=4 // pred_fallthru
        _
      // Predicated region
      $region220: #{tpu_custom_call.1} parent=4 // pred_check
        %p384 = pneg %p380
      $region221: #{tpu_custom_call.1} parent=4 // pred_check_branch
        %386 = sbr.rel (%p384) target = $region223
      $region222: #{tpu_custom_call.1} parent=4 // pred_region
        %s387 = sshll.u32 1, 1
        %s388 = ssub.s32 %s387, 1
        loop: start=0, step=1, limit=1
        $region224: #{tpu_custom_call.1} parent=222 // loop_pre_header
          _
        $region225: #{tpu_custom_call.1} parent=222 // loop_header
          %s390 = sphi 0, %s394
          %p391 = scmp.ge.s32.totalorder %s390, 1
          %s395 = sphi %s376, %s376
          %s396 = sphi %s377, %s377
        $region226: #{tpu_custom_call.1} parent=222 // loop_header_branch
          %393 = sbr.rel (%p391) target = $region230
        $region227: #{tpu_custom_call.1} parent=222 // loop_body
          %v397 = vld [vmem:[%s395] sm:%s388]
          %398 = vst [vmem:[%s396] sm:%s388] %v397
        $region228: #{tpu_custom_call.1} parent=222 // loop_footer
          %s394 = sadd.s32 1, %s390
        $region229: #{tpu_custom_call.1} parent=222 // loop_footer_branch
          %389 = sbr.rel target = $region225
        $region230: #{tpu_custom_call.1} parent=222 // loop_exit
          _
      $region223: #{tpu_custom_call.1} parent=4 // pred_fallthru
        _
      // Predicated region
      $region242: #{tpu_custom_call.1} parent=4 // pred_check
        _
      $region243: #{tpu_custom_call.1} parent=4 // pred_check_branch
        %423 = sbr.rel (0) target = $region245
      $region244: #{tpu_custom_call.1} parent=4 // pred_region
        %424 = vsyncadd %s378, 16
      $region245: #{tpu_custom_call.1} parent=4 // pred_fallthru
        _
      %s425 = sld [smem:[#allocation7 + $0x4]]
      %s426 = scalar_lea.vmem %s2, %s425
      %s427 = scalar_lea.vmem [#allocation2], 4
      %s428 = scalar_lea.sflag [#allocation4], 4
      %p430 = scmp.lt.u32.totalorder 1, 8
      %p431 = pneg %p430
      // Predicated region
      $region246: #{tpu_custom_call.1} parent=4 // pred_check
        _
      $region247: #{tpu_custom_call.1} parent=4 // pred_check_branch
        %433 = sbr.rel (%p430) target = $region249
      $region248: #{tpu_custom_call.1} parent=4 // pred_region
        %s449 = sand.u32 1, 7
        %p450 = scmp.eq.s32.totalorder %s449, 0
        %p451 = pneg %p450
        // Predicated region
        $region261: #{tpu_custom_call.1} parent=248 // pred_check
          _
        $region262: #{tpu_custom_call.1} parent=248 // pred_check_branch
          %453 = sbr.rel (%p450) target = $region264
        $region263: #{tpu_custom_call.1} parent=248 // pred_region
          %s454 = sand.u32 1, 7
          %s455 = ssub.s32 1, %s454
          %s456 = scalar_lea.vmem %s426, %s455
          %s457 = ssub.s32 1, %s454
          %s458 = scalar_lea.vmem %s427, %s457 [#allocation2]
          %s459 = sshll.u32 1, %s454
          %s460 = ssub.s32 %s459, 1
          loop: start=0, step=1, limit=1
          $region265: #{tpu_custom_call.1} parent=263 // loop_pre_header
            _
          $region266: #{tpu_custom_call.1} parent=263 // loop_header
            %s462 = sphi 0, %s466
            %p463 = scmp.ge.s32.totalorder %s462, 1
            %s467 = sphi %s456, %s456
            %s468 = sphi %s458, %s458
          $region267: #{tpu_custom_call.1} parent=263 // loop_header_branch
            %465 = sbr.rel (%p463) target = $region271
          $region268: #{tpu_custom_call.1} parent=263 // loop_body
            %v469 = vld [vmem:[%s467] sm:%s460]
            %470 = vst [vmem:[%s468] sm:%s460] %v469
          $region269: #{tpu_custom_call.1} parent=263 // loop_footer
            %s466 = sadd.s32 1, %s462
          $region270: #{tpu_custom_call.1} parent=263 // loop_footer_branch
            %461 = sbr.rel target = $region266
          $region271: #{tpu_custom_call.1} parent=263 // loop_exit
            _
        $region264: #{tpu_custom_call.1} parent=248 // pred_fallthru
          _
      $region249: #{tpu_custom_call.1} parent=4 // pred_fallthru
        _
      // Predicated region
      $region250: #{tpu_custom_call.1} parent=4 // pred_check
        %p434 = pneg %p430
      $region251: #{tpu_custom_call.1} parent=4 // pred_check_branch
        %436 = sbr.rel (%p434) target = $region253
      $region252: #{tpu_custom_call.1} parent=4 // pred_region
        %s437 = sshll.u32 1, 1
        %s438 = ssub.s32 %s437, 1
        loop: start=0, step=1, limit=1
        $region254: #{tpu_custom_call.1} parent=252 // loop_pre_header
          _
        $region255: #{tpu_custom_call.1} parent=252 // loop_header
          %s440 = sphi 0, %s444
          %p441 = scmp.ge.s32.totalorder %s440, 1
          %s445 = sphi %s426, %s426
          %s446 = sphi %s427, %s427
        $region256: #{tpu_custom_call.1} parent=252 // loop_header_branch
          %443 = sbr.rel (%p441) target = $region260
        $region257: #{tpu_custom_call.1} parent=252 // loop_body
          %v447 = vld [vmem:[%s445] sm:%s438]
          %448 = vst [vmem:[%s446] sm:%s438] %v447
        $region258: #{tpu_custom_call.1} parent=252 // loop_footer
          %s444 = sadd.s32 1, %s440
        $region259: #{tpu_custom_call.1} parent=252 // loop_footer_branch
          %439 = sbr.rel target = $region255
        $region260: #{tpu_custom_call.1} parent=252 // loop_exit
          _
      $region253: #{tpu_custom_call.1} parent=4 // pred_fallthru
        _
      // Predicated region
      $region272: #{tpu_custom_call.1} parent=4 // pred_check
        _
      $region273: #{tpu_custom_call.1} parent=4 // pred_check_branch
        %473 = sbr.rel (0) target = $region275
      $region274: #{tpu_custom_call.1} parent=4 // pred_region
        %474 = vsyncadd %s428, 16
      $region275: #{tpu_custom_call.1} parent=4 // pred_fallthru
        _
      %s475 = sld [smem:[#allocation8 + $0x4]]
      %s476 = scalar_lea.vmem %s3, %s475
      %s477 = scalar_lea.vmem [#allocation3], 4
      %s478 = scalar_lea.sflag [#allocation5], 4
      %p480 = scmp.lt.u32.totalorder 1, 8
      %p481 = pneg %p480
      // Predicated region
      $region276: #{tpu_custom_call.1} parent=4 // pred_check
        _
      $region277: #{tpu_custom_call.1} parent=4 // pred_check_branch
        %483 = sbr.rel (%p480) target = $region279
      $region278: #{tpu_custom_call.1} parent=4 // pred_region
        %s499 = sand.u32 1, 7
        %p500 = scmp.eq.s32.totalorder %s499, 0
        %p501 = pneg %p500
        // Predicated region
        $region291: #{tpu_custom_call.1} parent=278 // pred_check
          _
        $region292: #{tpu_custom_call.1} parent=278 // pred_check_branch
          %503 = sbr.rel (%p500) target = $region294
        $region293: #{tpu_custom_call.1} parent=278 // pred_region
          %s504 = sand.u32 1, 7
          %s505 = ssub.s32 1, %s504
          %s506 = scalar_lea.vmem %s476, %s505
          %s507 = ssub.s32 1, %s504
          %s508 = scalar_lea.vmem %s477, %s507 [#allocation3]
          %s509 = sshll.u32 1, %s504
          %s510 = ssub.s32 %s509, 1
          loop: start=0, step=1, limit=1
          $region295: #{tpu_custom_call.1} parent=293 // loop_pre_header
            _
          $region296: #{tpu_custom_call.1} parent=293 // loop_header
            %s512 = sphi 0, %s516
            %p513 = scmp.ge.s32.totalorder %s512, 1
            %s517 = sphi %s506, %s506
            %s518 = sphi %s508, %s508
          $region297: #{tpu_custom_call.1} parent=293 // loop_header_branch
            %515 = sbr.rel (%p513) target = $region301
          $region298: #{tpu_custom_call.1} parent=293 // loop_body
            %v519 = vld [vmem:[%s517] sm:%s510]
            %520 = vst [vmem:[%s518] sm:%s510] %v519
          $region299: #{tpu_custom_call.1} parent=293 // loop_footer
            %s516 = sadd.s32 1, %s512
          $region300: #{tpu_custom_call.1} parent=293 // loop_footer_branch
            %511 = sbr.rel target = $region296
          $region301: #{tpu_custom_call.1} parent=293 // loop_exit
            _
        $region294: #{tpu_custom_call.1} parent=278 // pred_fallthru
          _
      $region279: #{tpu_custom_call.1} parent=4 // pred_fallthru
        _
      // Predicated region
      $region280: #{tpu_custom_call.1} parent=4 // pred_check
        %p484 = pneg %p480
      $region281: #{tpu_custom_call.1} parent=4 // pred_check_branch
        %486 = sbr.rel (%p484) target = $region283
      $region282: #{tpu_custom_call.1} parent=4 // pred_region
        %s487 = sshll.u32 1, 1
        %s488 = ssub.s32 %s487, 1
        loop: start=0, step=1, limit=1
        $region284: #{tpu_custom_call.1} parent=282 // loop_pre_header
          _
        $region285: #{tpu_custom_call.1} parent=282 // loop_header
          %s490 = sphi 0, %s494
          %p491 = scmp.ge.s32.totalorder %s490, 1
          %s495 = sphi %s476, %s476
          %s496 = sphi %s477, %s477
        $region286: #{tpu_custom_call.1} parent=282 // loop_header_branch
          %493 = sbr.rel (%p491) target = $region290
        $region287: #{tpu_custom_call.1} parent=282 // loop_body
          %v497 = vld [vmem:[%s495] sm:%s488]
          %498 = vst [vmem:[%s496] sm:%s488] %v497
        $region288: #{tpu_custom_call.1} parent=282 // loop_footer
          %s494 = sadd.s32 1, %s490
        $region289: #{tpu_custom_call.1} parent=282 // loop_footer_branch
          %489 = sbr.rel target = $region285
        $region290: #{tpu_custom_call.1} parent=282 // loop_exit
          _
      $region283: #{tpu_custom_call.1} parent=4 // pred_fallthru
        _
      // Predicated region
      $region302: #{tpu_custom_call.1} parent=4 // pred_check
        _
      $region303: #{tpu_custom_call.1} parent=4 // pred_check_branch
        %523 = sbr.rel (0) target = $region305
      $region304: #{tpu_custom_call.1} parent=4 // pred_region
        %524 = vsyncadd %s478, 16
      $region305: #{tpu_custom_call.1} parent=4 // pred_fallthru
        _
      %s525 = sld [smem:[#allocation7 + $0x5]]
      %s526 = scalar_lea.vmem %s2, %s525
      %s527 = scalar_lea.vmem [#allocation2], 5
      %s528 = scalar_lea.sflag [#allocation4], 5
      %p530 = scmp.lt.u32.totalorder 1, 8
      %p531 = pneg %p530
      // Predicated region
      $region306: #{tpu_custom_call.1} parent=4 // pred_check
        _
      $region307: #{tpu_custom_call.1} parent=4 // pred_check_branch
        %533 = sbr.rel (%p530) target = $region309
      $region308: #{tpu_custom_call.1} parent=4 // pred_region
        %s549 = sand.u32 1, 7
        %p550 = scmp.eq.s32.totalorder %s549, 0
        %p551 = pneg %p550
        // Predicated region
        $region321: #{tpu_custom_call.1} parent=308 // pred_check
          _
        $region322: #{tpu_custom_call.1} parent=308 // pred_check_branch
          %553 = sbr.rel (%p550) target = $region324
        $region323: #{tpu_custom_call.1} parent=308 // pred_region
          %s554 = sand.u32 1, 7
          %s555 = ssub.s32 1, %s554
          %s556 = scalar_lea.vmem %s526, %s555
          %s557 = ssub.s32 1, %s554
          %s558 = scalar_lea.vmem %s527, %s557 [#allocation2]
          %s559 = sshll.u32 1, %s554
          %s560 = ssub.s32 %s559, 1
          loop: start=0, step=1, limit=1
          $region325: #{tpu_custom_call.1} parent=323 // loop_pre_header
            _
          $region326: #{tpu_custom_call.1} parent=323 // loop_header
            %s562 = sphi 0, %s566
            %p563 = scmp.ge.s32.totalorder %s562, 1
            %s567 = sphi %s556, %s556
            %s568 = sphi %s558, %s558
          $region327: #{tpu_custom_call.1} parent=323 // loop_header_branch
            %565 = sbr.rel (%p563) target = $region331
          $region328: #{tpu_custom_call.1} parent=323 // loop_body
            %v569 = vld [vmem:[%s567] sm:%s560]
            %570 = vst [vmem:[%s568] sm:%s560] %v569
          $region329: #{tpu_custom_call.1} parent=323 // loop_footer
            %s566 = sadd.s32 1, %s562
          $region330: #{tpu_custom_call.1} parent=323 // loop_footer_branch
            %561 = sbr.rel target = $region326
          $region331: #{tpu_custom_call.1} parent=323 // loop_exit
            _
        $region324: #{tpu_custom_call.1} parent=308 // pred_fallthru
          _
      $region309: #{tpu_custom_call.1} parent=4 // pred_fallthru
        _
      // Predicated region
      $region310: #{tpu_custom_call.1} parent=4 // pred_check
        %p534 = pneg %p530
      $region311: #{tpu_custom_call.1} parent=4 // pred_check_branch
        %536 = sbr.rel (%p534) target = $region313
      $region312: #{tpu_custom_call.1} parent=4 // pred_region
        %s537 = sshll.u32 1, 1
        %s538 = ssub.s32 %s537, 1
        loop: start=0, step=1, limit=1
        $region314: #{tpu_custom_call.1} parent=312 // loop_pre_header
          _
        $region315: #{tpu_custom_call.1} parent=312 // loop_header
          %s540 = sphi 0, %s544
          %p541 = scmp.ge.s32.totalorder %s540, 1
          %s545 = sphi %s526, %s526
          %s546 = sphi %s527, %s527
        $region316: #{tpu_custom_call.1} parent=312 // loop_header_branch
          %543 = sbr.rel (%p541) target = $region320
        $region317: #{tpu_custom_call.1} parent=312 // loop_body
          %v547 = vld [vmem:[%s545] sm:%s538]
          %548 = vst [vmem:[%s546] sm:%s538] %v547
        $region318: #{tpu_custom_call.1} parent=312 // loop_footer
          %s544 = sadd.s32 1, %s540
        $region319: #{tpu_custom_call.1} parent=312 // loop_footer_branch
          %539 = sbr.rel target = $region315
        $region320: #{tpu_custom_call.1} parent=312 // loop_exit
          _
      $region313: #{tpu_custom_call.1} parent=4 // pred_fallthru
        _
      // Predicated region
      $region332: #{tpu_custom_call.1} parent=4 // pred_check
        _
      $region333: #{tpu_custom_call.1} parent=4 // pred_check_branch
        %573 = sbr.rel (0) target = $region335
      $region334: #{tpu_custom_call.1} parent=4 // pred_region
        %574 = vsyncadd %s528, 16
      $region335: #{tpu_custom_call.1} parent=4 // pred_fallthru
        _
      %s575 = sld [smem:[#allocation8 + $0x5]]
      %s576 = scalar_lea.vmem %s3, %s575
      %s577 = scalar_lea.vmem [#allocation3], 5
      %s578 = scalar_lea.sflag [#allocation5], 5
      %p580 = scmp.lt.u32.totalorder 1, 8
      %p581 = pneg %p580
      // Predicated region
      $region336: #{tpu_custom_call.1} parent=4 // pred_check
        _
      $region337: #{tpu_custom_call.1} parent=4 // pred_check_branch
        %583 = sbr.rel (%p580) target = $region339
      $region338: #{tpu_custom_call.1} parent=4 // pred_region
        %s599 = sand.u32 1, 7
        %p600 = scmp.eq.s32.totalorder %s599, 0
        %p601 = pneg %p600
        // Predicated region
        $region351: #{tpu_custom_call.1} parent=338 // pred_check
          _
        $region352: #{tpu_custom_call.1} parent=338 // pred_check_branch
          %603 = sbr.rel (%p600) target = $region354
        $region353: #{tpu_custom_call.1} parent=338 // pred_region
          %s604 = sand.u32 1, 7
          %s605 = ssub.s32 1, %s604
          %s606 = scalar_lea.vmem %s576, %s605
          %s607 = ssub.s32 1, %s604
          %s608 = scalar_lea.vmem %s577, %s607 [#allocation3]
          %s609 = sshll.u32 1, %s604
          %s610 = ssub.s32 %s609, 1
          loop: start=0, step=1, limit=1
          $region355: #{tpu_custom_call.1} parent=353 // loop_pre_header
            _
          $region356: #{tpu_custom_call.1} parent=353 // loop_header
            %s612 = sphi 0, %s616
            %p613 = scmp.ge.s32.totalorder %s612, 1
            %s617 = sphi %s606, %s606
            %s618 = sphi %s608, %s608
          $region357: #{tpu_custom_call.1} parent=353 // loop_header_branch
            %615 = sbr.rel (%p613) target = $region361
          $region358: #{tpu_custom_call.1} parent=353 // loop_body
            %v619 = vld [vmem:[%s617] sm:%s610]
            %620 = vst [vmem:[%s618] sm:%s610] %v619
          $region359: #{tpu_custom_call.1} parent=353 // loop_footer
            %s616 = sadd.s32 1, %s612
          $region360: #{tpu_custom_call.1} parent=353 // loop_footer_branch
            %611 = sbr.rel target = $region356
          $region361: #{tpu_custom_call.1} parent=353 // loop_exit
            _
        $region354: #{tpu_custom_call.1} parent=338 // pred_fallthru
          _
      $region339: #{tpu_custom_call.1} parent=4 // pred_fallthru
        _
      // Predicated region
      $region340: #{tpu_custom_call.1} parent=4 // pred_check
        %p584 = pneg %p580
      $region341: #{tpu_custom_call.1} parent=4 // pred_check_branch
        %586 = sbr.rel (%p584) target = $region343
      $region342: #{tpu_custom_call.1} parent=4 // pred_region
        %s587 = sshll.u32 1, 1
        %s588 = ssub.s32 %s587, 1
        loop: start=0, step=1, limit=1
        $region344: #{tpu_custom_call.1} parent=342 // loop_pre_header
          _
        $region345: #{tpu_custom_call.1} parent=342 // loop_header
          %s590 = sphi 0, %s594
          %p591 = scmp.ge.s32.totalorder %s590, 1
          %s595 = sphi %s576, %s576
          %s596 = sphi %s577, %s577
        $region346: #{tpu_custom_call.1} parent=342 // loop_header_branch
          %593 = sbr.rel (%p591) target = $region350
        $region347: #{tpu_custom_call.1} parent=342 // loop_body
          %v597 = vld [vmem:[%s595] sm:%s588]
          %598 = vst [vmem:[%s596] sm:%s588] %v597
        $region348: #{tpu_custom_call.1} parent=342 // loop_footer
          %s594 = sadd.s32 1, %s590
        $region349: #{tpu_custom_call.1} parent=342 // loop_footer_branch
          %589 = sbr.rel target = $region345
        $region350: #{tpu_custom_call.1} parent=342 // loop_exit
          _
      $region343: #{tpu_custom_call.1} parent=4 // pred_fallthru
        _
      // Predicated region
      $region362: #{tpu_custom_call.1} parent=4 // pred_check
        _
      $region363: #{tpu_custom_call.1} parent=4 // pred_check_branch
        %623 = sbr.rel (0) target = $region365
      $region364: #{tpu_custom_call.1} parent=4 // pred_region
        %624 = vsyncadd %s578, 16
      $region365: #{tpu_custom_call.1} parent=4 // pred_fallthru
        _
      %s625 = sld [smem:[#allocation7 + $0x6]]
      %s626 = scalar_lea.vmem %s2, %s625
      %s627 = scalar_lea.vmem [#allocation2], 6
      %s628 = scalar_lea.sflag [#allocation4], 6
      %p630 = scmp.lt.u32.totalorder 1, 8
      %p631 = pneg %p630
      // Predicated region
      $region366: #{tpu_custom_call.1} parent=4 // pred_check
        _
      $region367: #{tpu_custom_call.1} parent=4 // pred_check_branch
        %633 = sbr.rel (%p630) target = $region369
      $region368: #{tpu_custom_call.1} parent=4 // pred_region
        %s649 = sand.u32 1, 7
        %p650 = scmp.eq.s32.totalorder %s649, 0
        %p651 = pneg %p650
        // Predicated region
        $region381: #{tpu_custom_call.1} parent=368 // pred_check
          _
        $region382: #{tpu_custom_call.1} parent=368 // pred_check_branch
          %653 = sbr.rel (%p650) target = $region384
        $region383: #{tpu_custom_call.1} parent=368 // pred_region
          %s654 = sand.u32 1, 7
          %s655 = ssub.s32 1, %s654
          %s656 = scalar_lea.vmem %s626, %s655
          %s657 = ssub.s32 1, %s654
          %s658 = scalar_lea.vmem %s627, %s657 [#allocation2]
          %s659 = sshll.u32 1, %s654
          %s660 = ssub.s32 %s659, 1
          loop: start=0, step=1, limit=1
          $region385: #{tpu_custom_call.1} parent=383 // loop_pre_header
            _
          $region386: #{tpu_custom_call.1} parent=383 // loop_header
            %s662 = sphi 0, %s666
            %p663 = scmp.ge.s32.totalorder %s662, 1
            %s667 = sphi %s656, %s656
            %s668 = sphi %s658, %s658
          $region387: #{tpu_custom_call.1} parent=383 // loop_header_branch
            %665 = sbr.rel (%p663) target = $region391
          $region388: #{tpu_custom_call.1} parent=383 // loop_body
            %v669 = vld [vmem:[%s667] sm:%s660]
            %670 = vst [vmem:[%s668] sm:%s660] %v669
          $region389: #{tpu_custom_call.1} parent=383 // loop_footer
            %s666 = sadd.s32 1, %s662
          $region390: #{tpu_custom_call.1} parent=383 // loop_footer_branch
            %661 = sbr.rel target = $region386
          $region391: #{tpu_custom_call.1} parent=383 // loop_exit
            _
        $region384: #{tpu_custom_call.1} parent=368 // pred_fallthru
          _
      $region369: #{tpu_custom_call.1} parent=4 // pred_fallthru
        _
      // Predicated region
      $region370: #{tpu_custom_call.1} parent=4 // pred_check
        %p634 = pneg %p630
      $region371: #{tpu_custom_call.1} parent=4 // pred_check_branch
        %636 = sbr.rel (%p634) target = $region373
      $region372: #{tpu_custom_call.1} parent=4 // pred_region
        %s637 = sshll.u32 1, 1
        %s638 = ssub.s32 %s637, 1
        loop: start=0, step=1, limit=1
        $region374: #{tpu_custom_call.1} parent=372 // loop_pre_header
          _
        $region375: #{tpu_custom_call.1} parent=372 // loop_header
          %s640 = sphi 0, %s644
          %p641 = scmp.ge.s32.totalorder %s640, 1
          %s645 = sphi %s626, %s626
          %s646 = sphi %s627, %s627
        $region376: #{tpu_custom_call.1} parent=372 // loop_header_branch
          %643 = sbr.rel (%p641) target = $region380
        $region377: #{tpu_custom_call.1} parent=372 // loop_body
          %v647 = vld [vmem:[%s645] sm:%s638]
          %648 = vst [vmem:[%s646] sm:%s638] %v647
        $region378: #{tpu_custom_call.1} parent=372 // loop_footer
          %s644 = sadd.s32 1, %s640
        $region379: #{tpu_custom_call.1} parent=372 // loop_footer_branch
          %639 = sbr.rel target = $region375
        $region380: #{tpu_custom_call.1} parent=372 // loop_exit
          _
      $region373: #{tpu_custom_call.1} parent=4 // pred_fallthru
        _
      // Predicated region
      $region392: #{tpu_custom_call.1} parent=4 // pred_check
        _
      $region393: #{tpu_custom_call.1} parent=4 // pred_check_branch
        %673 = sbr.rel (0) target = $region395
      $region394: #{tpu_custom_call.1} parent=4 // pred_region
        %674 = vsyncadd %s628, 16
      $region395: #{tpu_custom_call.1} parent=4 // pred_fallthru
        _
      %s675 = sld [smem:[#allocation8 + $0x6]]
      %s676 = scalar_lea.vmem %s3, %s675
      %s677 = scalar_lea.vmem [#allocation3], 6
      %s678 = scalar_lea.sflag [#allocation5], 6
      %p680 = scmp.lt.u32.totalorder 1, 8
      %p681 = pneg %p680
      // Predicated region
      $region396: #{tpu_custom_call.1} parent=4 // pred_check
        _
      $region397: #{tpu_custom_call.1} parent=4 // pred_check_branch
        %683 = sbr.rel (%p680) target = $region399
      $region398: #{tpu_custom_call.1} parent=4 // pred_region
        %s699 = sand.u32 1, 7
        %p700 = scmp.eq.s32.totalorder %s699, 0
        %p701 = pneg %p700
        // Predicated region
        $region411: #{tpu_custom_call.1} parent=398 // pred_check
          _
        $region412: #{tpu_custom_call.1} parent=398 // pred_check_branch
          %703 = sbr.rel (%p700) target = $region414
        $region413: #{tpu_custom_call.1} parent=398 // pred_region
          %s704 = sand.u32 1, 7
          %s705 = ssub.s32 1, %s704
          %s706 = scalar_lea.vmem %s676, %s705
          %s707 = ssub.s32 1, %s704
          %s708 = scalar_lea.vmem %s677, %s707 [#allocation3]
          %s709 = sshll.u32 1, %s704
          %s710 = ssub.s32 %s709, 1
          loop: start=0, step=1, limit=1
          $region415: #{tpu_custom_call.1} parent=413 // loop_pre_header
            _
          $region416: #{tpu_custom_call.1} parent=413 // loop_header
            %s712 = sphi 0, %s716
            %p713 = scmp.ge.s32.totalorder %s712, 1
            %s717 = sphi %s706, %s706
            %s718 = sphi %s708, %s708
          $region417: #{tpu_custom_call.1} parent=413 // loop_header_branch
            %715 = sbr.rel (%p713) target = $region421
          $region418: #{tpu_custom_call.1} parent=413 // loop_body
            %v719 = vld [vmem:[%s717] sm:%s710]
            %720 = vst [vmem:[%s718] sm:%s710] %v719
          $region419: #{tpu_custom_call.1} parent=413 // loop_footer
            %s716 = sadd.s32 1, %s712
          $region420: #{tpu_custom_call.1} parent=413 // loop_footer_branch
            %711 = sbr.rel target = $region416
          $region421: #{tpu_custom_call.1} parent=413 // loop_exit
            _
        $region414: #{tpu_custom_call.1} parent=398 // pred_fallthru
          _
      $region399: #{tpu_custom_call.1} parent=4 // pred_fallthru
        _
      // Predicated region
      $region400: #{tpu_custom_call.1} parent=4 // pred_check
        %p684 = pneg %p680
      $region401: #{tpu_custom_call.1} parent=4 // pred_check_branch
        %686 = sbr.rel (%p684) target = $region403
      $region402: #{tpu_custom_call.1} parent=4 // pred_region
        %s687 = sshll.u32 1, 1
        %s688 = ssub.s32 %s687, 1
        loop: start=0, step=1, limit=1
        $region404: #{tpu_custom_call.1} parent=402 // loop_pre_header
          _
        $region405: #{tpu_custom_call.1} parent=402 // loop_header
          %s690 = sphi 0, %s694
          %p691 = scmp.ge.s32.totalorder %s690, 1
          %s695 = sphi %s676, %s676
          %s696 = sphi %s677, %s677
        $region406: #{tpu_custom_call.1} parent=402 // loop_header_branch
          %693 = sbr.rel (%p691) target = $region410
        $region407: #{tpu_custom_call.1} parent=402 // loop_body
          %v697 = vld [vmem:[%s695] sm:%s688]
          %698 = vst [vmem:[%s696] sm:%s688] %v697
        $region408: #{tpu_custom_call.1} parent=402 // loop_footer
          %s694 = sadd.s32 1, %s690
        $region409: #{tpu_custom_call.1} parent=402 // loop_footer_branch
          %689 = sbr.rel target = $region405
        $region410: #{tpu_custom_call.1} parent=402 // loop_exit
          _
      $region403: #{tpu_custom_call.1} parent=4 // pred_fallthru
        _
      // Predicated region
      $region422: #{tpu_custom_call.1} parent=4 // pred_check
        _
      $region423: #{tpu_custom_call.1} parent=4 // pred_check_branch
        %723 = sbr.rel (0) target = $region425
      $region424: #{tpu_custom_call.1} parent=4 // pred_region
        %724 = vsyncadd %s678, 16
      $region425: #{tpu_custom_call.1} parent=4 // pred_fallthru
        _
      %s725 = sld [smem:[#allocation7 + $0x7]]
      %s726 = scalar_lea.vmem %s2, %s725
      %s727 = scalar_lea.vmem [#allocation2], 7
      %s728 = scalar_lea.sflag [#allocation4], 7
      %p730 = scmp.lt.u32.totalorder 1, 8
      %p731 = pneg %p730
      // Predicated region
      $region426: #{tpu_custom_call.1} parent=4 // pred_check
        _
      $region427: #{tpu_custom_call.1} parent=4 // pred_check_branch
        %733 = sbr.rel (%p730) target = $region429
      $region428: #{tpu_custom_call.1} parent=4 // pred_region
        %s749 = sand.u32 1, 7
        %p750 = scmp.eq.s32.totalorder %s749, 0
        %p751 = pneg %p750
        // Predicated region
        $region441: #{tpu_custom_call.1} parent=428 // pred_check
          _
        $region442: #{tpu_custom_call.1} parent=428 // pred_check_branch
          %753 = sbr.rel (%p750) target = $region444
        $region443: #{tpu_custom_call.1} parent=428 // pred_region
          %s754 = sand.u32 1, 7
          %s755 = ssub.s32 1, %s754
          %s756 = scalar_lea.vmem %s726, %s755
          %s757 = ssub.s32 1, %s754
          %s758 = scalar_lea.vmem %s727, %s757 [#allocation2]
          %s759 = sshll.u32 1, %s754
          %s760 = ssub.s32 %s759, 1
          loop: start=0, step=1, limit=1
          $region445: #{tpu_custom_call.1} parent=443 // loop_pre_header
            _
          $region446: #{tpu_custom_call.1} parent=443 // loop_header
            %s762 = sphi 0, %s766
            %p763 = scmp.ge.s32.totalorder %s762, 1
            %s767 = sphi %s756, %s756
            %s768 = sphi %s758, %s758
          $region447: #{tpu_custom_call.1} parent=443 // loop_header_branch
            %765 = sbr.rel (%p763) target = $region451
          $region448: #{tpu_custom_call.1} parent=443 // loop_body
            %v769 = vld [vmem:[%s767] sm:%s760]
            %770 = vst [vmem:[%s768] sm:%s760] %v769
          $region449: #{tpu_custom_call.1} parent=443 // loop_footer
            %s766 = sadd.s32 1, %s762
          $region450: #{tpu_custom_call.1} parent=443 // loop_footer_branch
            %761 = sbr.rel target = $region446
          $region451: #{tpu_custom_call.1} parent=443 // loop_exit
            _
        $region444: #{tpu_custom_call.1} parent=428 // pred_fallthru
          _
      $region429: #{tpu_custom_call.1} parent=4 // pred_fallthru
        _
      // Predicated region
      $region430: #{tpu_custom_call.1} parent=4 // pred_check
        %p734 = pneg %p730
      $region431: #{tpu_custom_call.1} parent=4 // pred_check_branch
        %736 = sbr.rel (%p734) target = $region433
      $region432: #{tpu_custom_call.1} parent=4 // pred_region
        %s737 = sshll.u32 1, 1
        %s738 = ssub.s32 %s737, 1
        loop: start=0, step=1, limit=1
        $region434: #{tpu_custom_call.1} parent=432 // loop_pre_header
          _
        $region435: #{tpu_custom_call.1} parent=432 // loop_header
          %s740 = sphi 0, %s744
          %p741 = scmp.ge.s32.totalorder %s740, 1
          %s745 = sphi %s726, %s726
          %s746 = sphi %s727, %s727
        $region436: #{tpu_custom_call.1} parent=432 // loop_header_branch
          %743 = sbr.rel (%p741) target = $region440
        $region437: #{tpu_custom_call.1} parent=432 // loop_body
          %v747 = vld [vmem:[%s745] sm:%s738]
          %748 = vst [vmem:[%s746] sm:%s738] %v747
        $region438: #{tpu_custom_call.1} parent=432 // loop_footer
          %s744 = sadd.s32 1, %s740
        $region439: #{tpu_custom_call.1} parent=432 // loop_footer_branch
          %739 = sbr.rel target = $region435
        $region440: #{tpu_custom_call.1} parent=432 // loop_exit
          _
      $region433: #{tpu_custom_call.1} parent=4 // pred_fallthru
        _
      // Predicated region
      $region452: #{tpu_custom_call.1} parent=4 // pred_check
        _
      $region453: #{tpu_custom_call.1} parent=4 // pred_check_branch
        %773 = sbr.rel (0) target = $region455
      $region454: #{tpu_custom_call.1} parent=4 // pred_region
        %774 = vsyncadd %s728, 16
      $region455: #{tpu_custom_call.1} parent=4 // pred_fallthru
        _
      %s775 = sld [smem:[#allocation8 + $0x7]]
      %s776 = scalar_lea.vmem %s3, %s775
      %s777 = scalar_lea.vmem [#allocation3], 7
      %s778 = scalar_lea.sflag [#allocation5], 7
      %p780 = scmp.lt.u32.totalorder 1, 8
      %p781 = pneg %p780
      // Predicated region
      $region456: #{tpu_custom_call.1} parent=4 // pred_check
        _
      $region457: #{tpu_custom_call.1} parent=4 // pred_check_branch
        %783 = sbr.rel (%p780) target = $region459
      $region458: #{tpu_custom_call.1} parent=4 // pred_region
        %s799 = sand.u32 1, 7
        %p800 = scmp.eq.s32.totalorder %s799, 0
        %p801 = pneg %p800
        // Predicated region
        $region471: #{tpu_custom_call.1} parent=458 // pred_check
          _
        $region472: #{tpu_custom_call.1} parent=458 // pred_check_branch
          %803 = sbr.rel (%p800) target = $region474
        $region473: #{tpu_custom_call.1} parent=458 // pred_region
          %s804 = sand.u32 1, 7
          %s805 = ssub.s32 1, %s804
          %s806 = scalar_lea.vmem %s776, %s805
          %s807 = ssub.s32 1, %s804
          %s808 = scalar_lea.vmem %s777, %s807 [#allocation3]
          %s809 = sshll.u32 1, %s804
          %s810 = ssub.s32 %s809, 1
          loop: start=0, step=1, limit=1
          $region475: #{tpu_custom_call.1} parent=473 // loop_pre_header
            _
          $region476: #{tpu_custom_call.1} parent=473 // loop_header
            %s812 = sphi 0, %s816
            %p813 = scmp.ge.s32.totalorder %s812, 1
            %s817 = sphi %s806, %s806
            %s818 = sphi %s808, %s808
          $region477: #{tpu_custom_call.1} parent=473 // loop_header_branch
            %815 = sbr.rel (%p813) target = $region481
          $region478: #{tpu_custom_call.1} parent=473 // loop_body
            %v819 = vld [vmem:[%s817] sm:%s810]
            %820 = vst [vmem:[%s818] sm:%s810] %v819
          $region479: #{tpu_custom_call.1} parent=473 // loop_footer
            %s816 = sadd.s32 1, %s812
          $region480: #{tpu_custom_call.1} parent=473 // loop_footer_branch
            %811 = sbr.rel target = $region476
          $region481: #{tpu_custom_call.1} parent=473 // loop_exit
            _
        $region474: #{tpu_custom_call.1} parent=458 // pred_fallthru
          _
      $region459: #{tpu_custom_call.1} parent=4 // pred_fallthru
        _
      // Predicated region
      $region460: #{tpu_custom_call.1} parent=4 // pred_check
        %p784 = pneg %p780
      $region461: #{tpu_custom_call.1} parent=4 // pred_check_branch
        %786 = sbr.rel (%p784) target = $region463
      $region462: #{tpu_custom_call.1} parent=4 // pred_region
        %s787 = sshll.u32 1, 1
        %s788 = ssub.s32 %s787, 1
        loop: start=0, step=1, limit=1
        $region464: #{tpu_custom_call.1} parent=462 // loop_pre_header
          _
        $region465: #{tpu_custom_call.1} parent=462 // loop_header
          %s790 = sphi 0, %s794
          %p791 = scmp.ge.s32.totalorder %s790, 1
          %s795 = sphi %s776, %s776
          %s796 = sphi %s777, %s777
        $region466: #{tpu_custom_call.1} parent=462 // loop_header_branch
          %793 = sbr.rel (%p791) target = $region470
        $region467: #{tpu_custom_call.1} parent=462 // loop_body
          %v797 = vld [vmem:[%s795] sm:%s788]
          %798 = vst [vmem:[%s796] sm:%s788] %v797
        $region468: #{tpu_custom_call.1} parent=462 // loop_footer
          %s794 = sadd.s32 1, %s790
        $region469: #{tpu_custom_call.1} parent=462 // loop_footer_branch
          %789 = sbr.rel target = $region465
        $region470: #{tpu_custom_call.1} parent=462 // loop_exit
          _
      $region463: #{tpu_custom_call.1} parent=4 // pred_fallthru
        _
      // Predicated region
      $region482: #{tpu_custom_call.1} parent=4 // pred_check
        _
      $region483: #{tpu_custom_call.1} parent=4 // pred_check_branch
        %823 = sbr.rel (0) target = $region485
      $region484: #{tpu_custom_call.1} parent=4 // pred_region
        %824 = vsyncadd %s778, 16
      $region485: #{tpu_custom_call.1} parent=4 // pred_fallthru
        _
    $region5: #{tpu_custom_call.1} parent=1 // pred_fallthru
      _
    %s825 = sadd.s32 0, 1
    %p826 = scmp.lt.s32.totalorder %s825, 1
    // Predicated region
    $region486: #{tpu_custom_call.1} parent=1 // pred_check
      %p827 = pneg %p826
    $region487: #{tpu_custom_call.1} parent=1 // pred_check_branch
      %829 = sbr.rel (%p827) target = $region489
    $region488: #{tpu_custom_call.1} parent=1 // pred_region
      %s830 = ssub.s32 1, 0
      %s831 = smul.u32 %s825, 8
      %s832 = smul.u32 %s830, 8
      %s833 = sld [smem:[#allocation7 + %s831]]
      %s834 = scalar_lea.vmem %s2, %s833
      %s835 = scalar_lea.vmem [#allocation2], %s832
      %s836 = scalar_lea.sflag [#allocation4], %s832
      %p838 = scmp.lt.u32.totalorder 1, 8
      %p839 = pneg %p838
      // Predicated region
      $region490: #{tpu_custom_call.1} parent=488 // pred_check
        _
      $region491: #{tpu_custom_call.1} parent=488 // pred_check_branch
        %841 = sbr.rel (%p838) target = $region493
      $region492: #{tpu_custom_call.1} parent=488 // pred_region
        %s857 = sand.u32 1, 7
        %p858 = scmp.eq.s32.totalorder %s857, 0
        %p859 = pneg %p858
        // Predicated region
        $region505: #{tpu_custom_call.1} parent=492 // pred_check
          _
        $region506: #{tpu_custom_call.1} parent=492 // pred_check_branch
          %861 = sbr.rel (%p858) target = $region508
        $region507: #{tpu_custom_call.1} parent=492 // pred_region
          %s862 = sand.u32 1, 7
          %s863 = ssub.s32 1, %s862
          %s864 = scalar_lea.vmem %s834, %s863
          %s865 = ssub.s32 1, %s862
          %s866 = scalar_lea.vmem %s835, %s865 [#allocation2]
          %s867 = sshll.u32 1, %s862
          %s868 = ssub.s32 %s867, 1
          loop: start=0, step=1, limit=1
          $region509: #{tpu_custom_call.1} parent=507 // loop_pre_header
            _
          $region510: #{tpu_custom_call.1} parent=507 // loop_header
            %s870 = sphi 0, %s874
            %p871 = scmp.ge.s32.totalorder %s870, 1
            %s875 = sphi %s864, %s864
            %s876 = sphi %s866, %s866
          $region511: #{tpu_custom_call.1} parent=507 // loop_header_branch
            %873 = sbr.rel (%p871) target = $region515
          $region512: #{tpu_custom_call.1} parent=507 // loop_body
            %v877 = vld [vmem:[%s875] sm:%s868]
            %878 = vst [vmem:[%s876] sm:%s868] %v877
          $region513: #{tpu_custom_call.1} parent=507 // loop_footer
            %s874 = sadd.s32 1, %s870
          $region514: #{tpu_custom_call.1} parent=507 // loop_footer_branch
            %869 = sbr.rel target = $region510
          $region515: #{tpu_custom_call.1} parent=507 // loop_exit
            _
        $region508: #{tpu_custom_call.1} parent=492 // pred_fallthru
          _
      $region493: #{tpu_custom_call.1} parent=488 // pred_fallthru
        _
      // Predicated region
      $region494: #{tpu_custom_call.1} parent=488 // pred_check
        %p842 = pneg %p838
      $region495: #{tpu_custom_call.1} parent=488 // pred_check_branch
        %844 = sbr.rel (%p842) target = $region497
      $region496: #{tpu_custom_call.1} parent=488 // pred_region
        %s845 = sshll.u32 1, 1
        %s846 = ssub.s32 %s845, 1
        loop: start=0, step=1, limit=1
        $region498: #{tpu_custom_call.1} parent=496 // loop_pre_header
          _
        $region499: #{tpu_custom_call.1} parent=496 // loop_header
          %s848 = sphi 0, %s852
          %p849 = scmp.ge.s32.totalorder %s848, 1
          %s853 = sphi %s834, %s834
          %s854 = sphi %s835, %s835
        $region500: #{tpu_custom_call.1} parent=496 // loop_header_branch
          %851 = sbr.rel (%p849) target = $region504
        $region501: #{tpu_custom_call.1} parent=496 // loop_body
          %v855 = vld [vmem:[%s853] sm:%s846]
          %856 = vst [vmem:[%s854] sm:%s846] %v855
        $region502: #{tpu_custom_call.1} parent=496 // loop_footer
          %s852 = sadd.s32 1, %s848
        $region503: #{tpu_custom_call.1} parent=496 // loop_footer_branch
          %847 = sbr.rel target = $region499
        $region504: #{tpu_custom_call.1} parent=496 // loop_exit
          _
      $region497: #{tpu_custom_call.1} parent=488 // pred_fallthru
        _
      // Predicated region
      $region516: #{tpu_custom_call.1} parent=488 // pred_check
        _
      $region517: #{tpu_custom_call.1} parent=488 // pred_check_branch
        %881 = sbr.rel (0) target = $region519
      $region518: #{tpu_custom_call.1} parent=488 // pred_region
        %882 = vsyncadd %s836, 16
      $region519: #{tpu_custom_call.1} parent=488 // pred_fallthru
        _
      %s883 = sld [smem:[#allocation8 + %s831]]
      %s884 = scalar_lea.vmem %s3, %s883
      %s885 = scalar_lea.vmem [#allocation3], %s832
      %s886 = scalar_lea.sflag [#allocation5], %s832
      %p888 = scmp.lt.u32.totalorder 1, 8
      %p889 = pneg %p888
      // Predicated region
      $region520: #{tpu_custom_call.1} parent=488 // pred_check
        _
      $region521: #{tpu_custom_call.1} parent=488 // pred_check_branch
        %891 = sbr.rel (%p888) target = $region523
      $region522: #{tpu_custom_call.1} parent=488 // pred_region
        %s907 = sand.u32 1, 7
        %p908 = scmp.eq.s32.totalorder %s907, 0
        %p909 = pneg %p908
        // Predicated region
        $region535: #{tpu_custom_call.1} parent=522 // pred_check
          _
        $region536: #{tpu_custom_call.1} parent=522 // pred_check_branch
          %911 = sbr.rel (%p908) target = $region538
        $region537: #{tpu_custom_call.1} parent=522 // pred_region
          %s912 = sand.u32 1, 7
          %s913 = ssub.s32 1, %s912
          %s914 = scalar_lea.vmem %s884, %s913
          %s915 = ssub.s32 1, %s912
          %s916 = scalar_lea.vmem %s885, %s915 [#allocation3]
          %s917 = sshll.u32 1, %s912
          %s918 = ssub.s32 %s917, 1
          loop: start=0, step=1, limit=1
          $region539: #{tpu_custom_call.1} parent=537 // loop_pre_header
            _
          $region540: #{tpu_custom_call.1} parent=537 // loop_header
            %s920 = sphi 0, %s924
            %p921 = scmp.ge.s32.totalorder %s920, 1
            %s925 = sphi %s914, %s914
            %s926 = sphi %s916, %s916
          $region541: #{tpu_custom_call.1} parent=537 // loop_header_branch
            %923 = sbr.rel (%p921) target = $region545
          $region542: #{tpu_custom_call.1} parent=537 // loop_body
            %v927 = vld [vmem:[%s925] sm:%s918]
            %928 = vst [vmem:[%s926] sm:%s918] %v927
          $region543: #{tpu_custom_call.1} parent=537 // loop_footer
            %s924 = sadd.s32 1, %s920
          $region544: #{tpu_custom_call.1} parent=537 // loop_footer_branch
            %919 = sbr.rel target = $region540
          $region545: #{tpu_custom_call.1} parent=537 // loop_exit
            _
        $region538: #{tpu_custom_call.1} parent=522 // pred_fallthru
          _
      $region523: #{tpu_custom_call.1} parent=488 // pred_fallthru
        _
      // Predicated region
      $region524: #{tpu_custom_call.1} parent=488 // pred_check
        %p892 = pneg %p888
      $region525: #{tpu_custom_call.1} parent=488 // pred_check_branch
        %894 = sbr.rel (%p892) target = $region527
      $region526: #{tpu_custom_call.1} parent=488 // pred_region
        %s895 = sshll.u32 1, 1
        %s896 = ssub.s32 %s895, 1
        loop: start=0, step=1, limit=1
        $region528: #{tpu_custom_call.1} parent=526 // loop_pre_header
          _
        $region529: #{tpu_custom_call.1} parent=526 // loop_header
          %s898 = sphi 0, %s902
          %p899 = scmp.ge.s32.totalorder %s898, 1
          %s903 = sphi %s884, %s884
          %s904 = sphi %s885, %s885
        $region530: #{tpu_custom_call.1} parent=526 // loop_header_branch
          %901 = sbr.rel (%p899) target = $region534
        $region531: #{tpu_custom_call.1} parent=526 // loop_body
          %v905 = vld [vmem:[%s903] sm:%s896]
          %906 = vst [vmem:[%s904] sm:%s896] %v905
        $region532: #{tpu_custom_call.1} parent=526 // loop_footer
          %s902 = sadd.s32 1, %s898
        $region533: #{tpu_custom_call.1} parent=526 // loop_footer_branch
          %897 = sbr.rel target = $region529
        $region534: #{tpu_custom_call.1} parent=526 // loop_exit
          _
      $region527: #{tpu_custom_call.1} parent=488 // pred_fallthru
        _
      // Predicated region
      $region546: #{tpu_custom_call.1} parent=488 // pred_check
        _
      $region547: #{tpu_custom_call.1} parent=488 // pred_check_branch
        %931 = sbr.rel (0) target = $region549
      $region548: #{tpu_custom_call.1} parent=488 // pred_region
        %932 = vsyncadd %s886, 16
      $region549: #{tpu_custom_call.1} parent=488 // pred_fallthru
        _
      %s933 = sadd.s32 %s832, 1
      %s934 = sadd.s32 %s831, 1
      %s935 = sld [smem:[#allocation7 + %s934]]
      %s936 = scalar_lea.vmem %s2, %s935
      %s937 = scalar_lea.vmem [#allocation2], %s933
      %s938 = scalar_lea.sflag [#allocation4], %s933
      %p940 = scmp.lt.u32.totalorder 1, 8
      %p941 = pneg %p940
      // Predicated region
      $region550: #{tpu_custom_call.1} parent=488 // pred_check
        _
      $region551: #{tpu_custom_call.1} parent=488 // pred_check_branch
        %943 = sbr.rel (%p940) target = $region553
      $region552: #{tpu_custom_call.1} parent=488 // pred_region
        %s959 = sand.u32 1, 7
        %p960 = scmp.eq.s32.totalorder %s959, 0
        %p961 = pneg %p960
        // Predicated region
        $region565: #{tpu_custom_call.1} parent=552 // pred_check
          _
        $region566: #{tpu_custom_call.1} parent=552 // pred_check_branch
          %963 = sbr.rel (%p960) target = $region568
        $region567: #{tpu_custom_call.1} parent=552 // pred_region
          %s964 = sand.u32 1, 7
          %s965 = ssub.s32 1, %s964
          %s966 = scalar_lea.vmem %s936, %s965
          %s967 = ssub.s32 1, %s964
          %s968 = scalar_lea.vmem %s937, %s967 [#allocation2]
          %s969 = sshll.u32 1, %s964
          %s970 = ssub.s32 %s969, 1
          loop: start=0, step=1, limit=1
          $region569: #{tpu_custom_call.1} parent=567 // loop_pre_header
            _
          $region570: #{tpu_custom_call.1} parent=567 // loop_header
            %s972 = sphi 0, %s976
            %p973 = scmp.ge.s32.totalorder %s972, 1
            %s977 = sphi %s966, %s966
            %s978 = sphi %s968, %s968
          $region571: #{tpu_custom_call.1} parent=567 // loop_header_branch
            %975 = sbr.rel (%p973) target = $region575
          $region572: #{tpu_custom_call.1} parent=567 // loop_body
            %v979 = vld [vmem:[%s977] sm:%s970]
            %980 = vst [vmem:[%s978] sm:%s970] %v979
          $region573: #{tpu_custom_call.1} parent=567 // loop_footer
            %s976 = sadd.s32 1, %s972
          $region574: #{tpu_custom_call.1} parent=567 // loop_footer_branch
            %971 = sbr.rel target = $region570
          $region575: #{tpu_custom_call.1} parent=567 // loop_exit
            _
        $region568: #{tpu_custom_call.1} parent=552 // pred_fallthru
          _
      $region553: #{tpu_custom_call.1} parent=488 // pred_fallthru
        _
      // Predicated region
      $region554: #{tpu_custom_call.1} parent=488 // pred_check
        %p944 = pneg %p940
      $region555: #{tpu_custom_call.1} parent=488 // pred_check_branch
        %946 = sbr.rel (%p944) target = $region557
      $region556: #{tpu_custom_call.1} parent=488 // pred_region
        %s947 = sshll.u32 1, 1
        %s948 = ssub.s32 %s947, 1
        loop: start=0, step=1, limit=1
        $region558: #{tpu_custom_call.1} parent=556 // loop_pre_header
          _
        $region559: #{tpu_custom_call.1} parent=556 // loop_header
          %s950 = sphi 0, %s954
          %p951 = scmp.ge.s32.totalorder %s950, 1
          %s955 = sphi %s936, %s936
          %s956 = sphi %s937, %s937
        $region560: #{tpu_custom_call.1} parent=556 // loop_header_branch
          %953 = sbr.rel (%p951) target = $region564
        $region561: #{tpu_custom_call.1} parent=556 // loop_body
          %v957 = vld [vmem:[%s955] sm:%s948]
          %958 = vst [vmem:[%s956] sm:%s948] %v957
        $region562: #{tpu_custom_call.1} parent=556 // loop_footer
          %s954 = sadd.s32 1, %s950
        $region563: #{tpu_custom_call.1} parent=556 // loop_footer_branch
          %949 = sbr.rel target = $region559
        $region564: #{tpu_custom_call.1} parent=556 // loop_exit
          _
      $region557: #{tpu_custom_call.1} parent=488 // pred_fallthru
        _
      // Predicated region
      $region576: #{tpu_custom_call.1} parent=488 // pred_check
        _
      $region577: #{tpu_custom_call.1} parent=488 // pred_check_branch
        %983 = sbr.rel (0) target = $region579
      $region578: #{tpu_custom_call.1} parent=488 // pred_region
        %984 = vsyncadd %s938, 16
      $region579: #{tpu_custom_call.1} parent=488 // pred_fallthru
        _
      %s985 = sld [smem:[#allocation8 + %s934]]
      %s986 = scalar_lea.vmem %s3, %s985
      %s987 = scalar_lea.vmem [#allocation3], %s933
      %s988 = scalar_lea.sflag [#allocation5], %s933
      %p990 = scmp.lt.u32.totalorder 1, 8
      %p991 = pneg %p990
      // Predicated region
      $region580: #{tpu_custom_call.1} parent=488 // pred_check
        _
      $region581: #{tpu_custom_call.1} parent=488 // pred_check_branch
        %993 = sbr.rel (%p990) target = $region583
      $region582: #{tpu_custom_call.1} parent=488 // pred_region
        %s1009 = sand.u32 1, 7
        %p1010 = scmp.eq.s32.totalorder %s1009, 0
        %p1011 = pneg %p1010
        // Predicated region
        $region595: #{tpu_custom_call.1} parent=582 // pred_check
          _
        $region596: #{tpu_custom_call.1} parent=582 // pred_check_branch
          %1013 = sbr.rel (%p1010) target = $region598
        $region597: #{tpu_custom_call.1} parent=582 // pred_region
          %s1014 = sand.u32 1, 7
          %s1015 = ssub.s32 1, %s1014
          %s1016 = scalar_lea.vmem %s986, %s1015
          %s1017 = ssub.s32 1, %s1014
          %s1018 = scalar_lea.vmem %s987, %s1017 [#allocation3]
          %s1019 = sshll.u32 1, %s1014
          %s1020 = ssub.s32 %s1019, 1
          loop: start=0, step=1, limit=1
          $region599: #{tpu_custom_call.1} parent=597 // loop_pre_header
            _
          $region600: #{tpu_custom_call.1} parent=597 // loop_header
            %s1022 = sphi 0, %s1026
            %p1023 = scmp.ge.s32.totalorder %s1022, 1
            %s1027 = sphi %s1016, %s1016
            %s1028 = sphi %s1018, %s1018
          $region601: #{tpu_custom_call.1} parent=597 // loop_header_branch
            %1025 = sbr.rel (%p1023) target = $region605
          $region602: #{tpu_custom_call.1} parent=597 // loop_body
            %v1029 = vld [vmem:[%s1027] sm:%s1020]
            %1030 = vst [vmem:[%s1028] sm:%s1020] %v1029
          $region603: #{tpu_custom_call.1} parent=597 // loop_footer
            %s1026 = sadd.s32 1, %s1022
          $region604: #{tpu_custom_call.1} parent=597 // loop_footer_branch
            %1021 = sbr.rel target = $region600
          $region605: #{tpu_custom_call.1} parent=597 // loop_exit
            _
        $region598: #{tpu_custom_call.1} parent=582 // pred_fallthru
          _
      $region583: #{tpu_custom_call.1} parent=488 // pred_fallthru
        _
      // Predicated region
      $region584: #{tpu_custom_call.1} parent=488 // pred_check
        %p994 = pneg %p990
      $region585: #{tpu_custom_call.1} parent=488 // pred_check_branch
        %996 = sbr.rel (%p994) target = $region587
      $region586: #{tpu_custom_call.1} parent=488 // pred_region
        %s997 = sshll.u32 1, 1
        %s998 = ssub.s32 %s997, 1
        loop: start=0, step=1, limit=1
        $region588: #{tpu_custom_call.1} parent=586 // loop_pre_header
          _
        $region589: #{tpu_custom_call.1} parent=586 // loop_header
          %s1000 = sphi 0, %s1004
          %p1001 = scmp.ge.s32.totalorder %s1000, 1
          %s1005 = sphi %s986, %s986
          %s1006 = sphi %s987, %s987
        $region590: #{tpu_custom_call.1} parent=586 // loop_header_branch
          %1003 = sbr.rel (%p1001) target = $region594
        $region591: #{tpu_custom_call.1} parent=586 // loop_body
          %v1007 = vld [vmem:[%s1005] sm:%s998]
          %1008 = vst [vmem:[%s1006] sm:%s998] %v1007
        $region592: #{tpu_custom_call.1} parent=586 // loop_footer
          %s1004 = sadd.s32 1, %s1000
        $region593: #{tpu_custom_call.1} parent=586 // loop_footer_branch
          %999 = sbr.rel target = $region589
        $region594: #{tpu_custom_call.1} parent=586 // loop_exit
          _
      $region587: #{tpu_custom_call.1} parent=488 // pred_fallthru
        _
      // Predicated region
      $region606: #{tpu_custom_call.1} parent=488 // pred_check
        _
      $region607: #{tpu_custom_call.1} parent=488 // pred_check_branch
        %1033 = sbr.rel (0) target = $region609
      $region608: #{tpu_custom_call.1} parent=488 // pred_region
        %1034 = vsyncadd %s988, 16
      $region609: #{tpu_custom_call.1} parent=488 // pred_fallthru
        _
      %s1035 = sadd.s32 %s832, 2
      %s1036 = sadd.s32 %s831, 2
      %s1037 = sld [smem:[#allocation7 + %s1036]]
      %s1038 = scalar_lea.vmem %s2, %s1037
      %s1039 = scalar_lea.vmem [#allocation2], %s1035
      %s1040 = scalar_lea.sflag [#allocation4], %s1035
      %p1042 = scmp.lt.u32.totalorder 1, 8
      %p1043 = pneg %p1042
      // Predicated region
      $region610: #{tpu_custom_call.1} parent=488 // pred_check
        _
      $region611: #{tpu_custom_call.1} parent=488 // pred_check_branch
        %1045 = sbr.rel (%p1042) target = $region613
      $region612: #{tpu_custom_call.1} parent=488 // pred_region
        %s1061 = sand.u32 1, 7
        %p1062 = scmp.eq.s32.totalorder %s1061, 0
        %p1063 = pneg %p1062
        // Predicated region
        $region625: #{tpu_custom_call.1} parent=612 // pred_check
          _
        $region626: #{tpu_custom_call.1} parent=612 // pred_check_branch
          %1065 = sbr.rel (%p1062) target = $region628
        $region627: #{tpu_custom_call.1} parent=612 // pred_region
          %s1066 = sand.u32 1, 7
          %s1067 = ssub.s32 1, %s1066
          %s1068 = scalar_lea.vmem %s1038, %s1067
          %s1069 = ssub.s32 1, %s1066
          %s1070 = scalar_lea.vmem %s1039, %s1069 [#allocation2]
          %s1071 = sshll.u32 1, %s1066
          %s1072 = ssub.s32 %s1071, 1
          loop: start=0, step=1, limit=1
          $region629: #{tpu_custom_call.1} parent=627 // loop_pre_header
            _
          $region630: #{tpu_custom_call.1} parent=627 // loop_header
            %s1074 = sphi 0, %s1078
            %p1075 = scmp.ge.s32.totalorder %s1074, 1
            %s1079 = sphi %s1068, %s1068
            %s1080 = sphi %s1070, %s1070
          $region631: #{tpu_custom_call.1} parent=627 // loop_header_branch
            %1077 = sbr.rel (%p1075) target = $region635
          $region632: #{tpu_custom_call.1} parent=627 // loop_body
            %v1081 = vld [vmem:[%s1079] sm:%s1072]
            %1082 = vst [vmem:[%s1080] sm:%s1072] %v1081
          $region633: #{tpu_custom_call.1} parent=627 // loop_footer
            %s1078 = sadd.s32 1, %s1074
          $region634: #{tpu_custom_call.1} parent=627 // loop_footer_branch
            %1073 = sbr.rel target = $region630
          $region635: #{tpu_custom_call.1} parent=627 // loop_exit
            _
        $region628: #{tpu_custom_call.1} parent=612 // pred_fallthru
          _
      $region613: #{tpu_custom_call.1} parent=488 // pred_fallthru
        _
      // Predicated region
      $region614: #{tpu_custom_call.1} parent=488 // pred_check
        %p1046 = pneg %p1042
      $region615: #{tpu_custom_call.1} parent=488 // pred_check_branch
        %1048 = sbr.rel (%p1046) target = $region617
      $region616: #{tpu_custom_call.1} parent=488 // pred_region
        %s1049 = sshll.u32 1, 1
        %s1050 = ssub.s32 %s1049, 1
        loop: start=0, step=1, limit=1
        $region618: #{tpu_custom_call.1} parent=616 // loop_pre_header
          _
        $region619: #{tpu_custom_call.1} parent=616 // loop_header
          %s1052 = sphi 0, %s1056
          %p1053 = scmp.ge.s32.totalorder %s1052, 1
          %s1057 = sphi %s1038, %s1038
          %s1058 = sphi %s1039, %s1039
        $region620: #{tpu_custom_call.1} parent=616 // loop_header_branch
          %1055 = sbr.rel (%p1053) target = $region624
        $region621: #{tpu_custom_call.1} parent=616 // loop_body
          %v1059 = vld [vmem:[%s1057] sm:%s1050]
          %1060 = vst [vmem:[%s1058] sm:%s1050] %v1059
        $region622: #{tpu_custom_call.1} parent=616 // loop_footer
          %s1056 = sadd.s32 1, %s1052
        $region623: #{tpu_custom_call.1} parent=616 // loop_footer_branch
          %1051 = sbr.rel target = $region619
        $region624: #{tpu_custom_call.1} parent=616 // loop_exit
          _
      $region617: #{tpu_custom_call.1} parent=488 // pred_fallthru
        _
      // Predicated region
      $region636: #{tpu_custom_call.1} parent=488 // pred_check
        _
      $region637: #{tpu_custom_call.1} parent=488 // pred_check_branch
        %1085 = sbr.rel (0) target = $region639
      $region638: #{tpu_custom_call.1} parent=488 // pred_region
        %1086 = vsyncadd %s1040, 16
      $region639: #{tpu_custom_call.1} parent=488 // pred_fallthru
        _
      %s1087 = sld [smem:[#allocation8 + %s1036]]
      %s1088 = scalar_lea.vmem %s3, %s1087
      %s1089 = scalar_lea.vmem [#allocation3], %s1035
      %s1090 = scalar_lea.sflag [#allocation5], %s1035
      %p1092 = scmp.lt.u32.totalorder 1, 8
      %p1093 = pneg %p1092
      // Predicated region
      $region640: #{tpu_custom_call.1} parent=488 // pred_check
        _
      $region641: #{tpu_custom_call.1} parent=488 // pred_check_branch
        %1095 = sbr.rel (%p1092) target = $region643
      $region642: #{tpu_custom_call.1} parent=488 // pred_region
        %s1111 = sand.u32 1, 7
        %p1112 = scmp.eq.s32.totalorder %s1111, 0
        %p1113 = pneg %p1112
        // Predicated region
        $region655: #{tpu_custom_call.1} parent=642 // pred_check
          _
        $region656: #{tpu_custom_call.1} parent=642 // pred_check_branch
          %1115 = sbr.rel (%p1112) target = $region658
        $region657: #{tpu_custom_call.1} parent=642 // pred_region
          %s1116 = sand.u32 1, 7
          %s1117 = ssub.s32 1, %s1116
          %s1118 = scalar_lea.vmem %s1088, %s1117
          %s1119 = ssub.s32 1, %s1116
          %s1120 = scalar_lea.vmem %s1089, %s1119 [#allocation3]
          %s1121 = sshll.u32 1, %s1116
          %s1122 = ssub.s32 %s1121, 1
          loop: start=0, step=1, limit=1
          $region659: #{tpu_custom_call.1} parent=657 // loop_pre_header
            _
          $region660: #{tpu_custom_call.1} parent=657 // loop_header
            %s1124 = sphi 0, %s1128
            %p1125 = scmp.ge.s32.totalorder %s1124, 1
            %s1129 = sphi %s1118, %s1118
            %s1130 = sphi %s1120, %s1120
          $region661: #{tpu_custom_call.1} parent=657 // loop_header_branch
            %1127 = sbr.rel (%p1125) target = $region665
          $region662: #{tpu_custom_call.1} parent=657 // loop_body
            %v1131 = vld [vmem:[%s1129] sm:%s1122]
            %1132 = vst [vmem:[%s1130] sm:%s1122] %v1131
          $region663: #{tpu_custom_call.1} parent=657 // loop_footer
            %s1128 = sadd.s32 1, %s1124
          $region664: #{tpu_custom_call.1} parent=657 // loop_footer_branch
            %1123 = sbr.rel target = $region660
          $region665: #{tpu_custom_call.1} parent=657 // loop_exit
            _
        $region658: #{tpu_custom_call.1} parent=642 // pred_fallthru
          _
      $region643: #{tpu_custom_call.1} parent=488 // pred_fallthru
        _
      // Predicated region
      $region644: #{tpu_custom_call.1} parent=488 // pred_check
        %p1096 = pneg %p1092
      $region645: #{tpu_custom_call.1} parent=488 // pred_check_branch
        %1098 = sbr.rel (%p1096) target = $region647
      $region646: #{tpu_custom_call.1} parent=488 // pred_region
        %s1099 = sshll.u32 1, 1
        %s1100 = ssub.s32 %s1099, 1
        loop: start=0, step=1, limit=1
        $region648: #{tpu_custom_call.1} parent=646 // loop_pre_header
          _
        $region649: #{tpu_custom_call.1} parent=646 // loop_header
          %s1102 = sphi 0, %s1106
          %p1103 = scmp.ge.s32.totalorder %s1102, 1
          %s1107 = sphi %s1088, %s1088
          %s1108 = sphi %s1089, %s1089
        $region650: #{tpu_custom_call.1} parent=646 // loop_header_branch
          %1105 = sbr.rel (%p1103) target = $region654
        $region651: #{tpu_custom_call.1} parent=646 // loop_body
          %v1109 = vld [vmem:[%s1107] sm:%s1100]
          %1110 = vst [vmem:[%s1108] sm:%s1100] %v1109
        $region652: #{tpu_custom_call.1} parent=646 // loop_footer
          %s1106 = sadd.s32 1, %s1102
        $region653: #{tpu_custom_call.1} parent=646 // loop_footer_branch
          %1101 = sbr.rel target = $region649
        $region654: #{tpu_custom_call.1} parent=646 // loop_exit
          _
      $region647: #{tpu_custom_call.1} parent=488 // pred_fallthru
        _
      // Predicated region
      $region666: #{tpu_custom_call.1} parent=488 // pred_check
        _
      $region667: #{tpu_custom_call.1} parent=488 // pred_check_branch
        %1135 = sbr.rel (0) target = $region669
      $region668: #{tpu_custom_call.1} parent=488 // pred_region
        %1136 = vsyncadd %s1090, 16
      $region669: #{tpu_custom_call.1} parent=488 // pred_fallthru
        _
      %s1137 = sadd.s32 %s832, 3
      %s1138 = sadd.s32 %s831, 3
      %s1139 = sld [smem:[#allocation7 + %s1138]]
      %s1140 = scalar_lea.vmem %s2, %s1139
      %s1141 = scalar_lea.vmem [#allocation2], %s1137
      %s1142 = scalar_lea.sflag [#allocation4], %s1137
      %p1144 = scmp.lt.u32.totalorder 1, 8
      %p1145 = pneg %p1144
      // Predicated region
      $region670: #{tpu_custom_call.1} parent=488 // pred_check
        _
      $region671: #{tpu_custom_call.1} parent=488 // pred_check_branch
        %1147 = sbr.rel (%p1144) target = $region673
      $region672: #{tpu_custom_call.1} parent=488 // pred_region
        %s1163 = sand.u32 1, 7
        %p1164 = scmp.eq.s32.totalorder %s1163, 0
        %p1165 = pneg %p1164
        // Predicated region
        $region685: #{tpu_custom_call.1} parent=672 // pred_check
          _
        $region686: #{tpu_custom_call.1} parent=672 // pred_check_branch
          %1167 = sbr.rel (%p1164) target = $region688
        $region687: #{tpu_custom_call.1} parent=672 // pred_region
          %s1168 = sand.u32 1, 7
          %s1169 = ssub.s32 1, %s1168
          %s1170 = scalar_lea.vmem %s1140, %s1169
          %s1171 = ssub.s32 1, %s1168
          %s1172 = scalar_lea.vmem %s1141, %s1171 [#allocation2]
          %s1173 = sshll.u32 1, %s1168
          %s1174 = ssub.s32 %s1173, 1
          loop: start=0, step=1, limit=1
          $region689: #{tpu_custom_call.1} parent=687 // loop_pre_header
            _
          $region690: #{tpu_custom_call.1} parent=687 // loop_header
            %s1176 = sphi 0, %s1180
            %p1177 = scmp.ge.s32.totalorder %s1176, 1
            %s1181 = sphi %s1170, %s1170
            %s1182 = sphi %s1172, %s1172
          $region691: #{tpu_custom_call.1} parent=687 // loop_header_branch
            %1179 = sbr.rel (%p1177) target = $region695
          $region692: #{tpu_custom_call.1} parent=687 // loop_body
            %v1183 = vld [vmem:[%s1181] sm:%s1174]
            %1184 = vst [vmem:[%s1182] sm:%s1174] %v1183
          $region693: #{tpu_custom_call.1} parent=687 // loop_footer
            %s1180 = sadd.s32 1, %s1176
          $region694: #{tpu_custom_call.1} parent=687 // loop_footer_branch
            %1175 = sbr.rel target = $region690
          $region695: #{tpu_custom_call.1} parent=687 // loop_exit
            _
        $region688: #{tpu_custom_call.1} parent=672 // pred_fallthru
          _
      $region673: #{tpu_custom_call.1} parent=488 // pred_fallthru
        _
      // Predicated region
      $region674: #{tpu_custom_call.1} parent=488 // pred_check
        %p1148 = pneg %p1144
      $region675: #{tpu_custom_call.1} parent=488 // pred_check_branch
        %1150 = sbr.rel (%p1148) target = $region677
      $region676: #{tpu_custom_call.1} parent=488 // pred_region
        %s1151 = sshll.u32 1, 1
        %s1152 = ssub.s32 %s1151, 1
        loop: start=0, step=1, limit=1
        $region678: #{tpu_custom_call.1} parent=676 // loop_pre_header
          _
        $region679: #{tpu_custom_call.1} parent=676 // loop_header
          %s1154 = sphi 0, %s1158
          %p1155 = scmp.ge.s32.totalorder %s1154, 1
          %s1159 = sphi %s1140, %s1140
          %s1160 = sphi %s1141, %s1141
        $region680: #{tpu_custom_call.1} parent=676 // loop_header_branch
          %1157 = sbr.rel (%p1155) target = $region684
        $region681: #{tpu_custom_call.1} parent=676 // loop_body
          %v1161 = vld [vmem:[%s1159] sm:%s1152]
          %1162 = vst [vmem:[%s1160] sm:%s1152] %v1161
        $region682: #{tpu_custom_call.1} parent=676 // loop_footer
          %s1158 = sadd.s32 1, %s1154
        $region683: #{tpu_custom_call.1} parent=676 // loop_footer_branch
          %1153 = sbr.rel target = $region679
        $region684: #{tpu_custom_call.1} parent=676 // loop_exit
          _
      $region677: #{tpu_custom_call.1} parent=488 // pred_fallthru
        _
      // Predicated region
      $region696: #{tpu_custom_call.1} parent=488 // pred_check
        _
      $region697: #{tpu_custom_call.1} parent=488 // pred_check_branch
        %1187 = sbr.rel (0) target = $region699
      $region698: #{tpu_custom_call.1} parent=488 // pred_region
        %1188 = vsyncadd %s1142, 16
      $region699: #{tpu_custom_call.1} parent=488 // pred_fallthru
        _
      %s1189 = sld [smem:[#allocation8 + %s1138]]
      %s1190 = scalar_lea.vmem %s3, %s1189
      %s1191 = scalar_lea.vmem [#allocation3], %s1137
      %s1192 = scalar_lea.sflag [#allocation5], %s1137
      %p1194 = scmp.lt.u32.totalorder 1, 8
      %p1195 = pneg %p1194
      // Predicated region
      $region700: #{tpu_custom_call.1} parent=488 // pred_check
        _
      $region701: #{tpu_custom_call.1} parent=488 // pred_check_branch
        %1197 = sbr.rel (%p1194) target = $region703
      $region702: #{tpu_custom_call.1} parent=488 // pred_region
        %s1213 = sand.u32 1, 7
        %p1214 = scmp.eq.s32.totalorder %s1213, 0
        %p1215 = pneg %p1214
        // Predicated region
        $region715: #{tpu_custom_call.1} parent=702 // pred_check
          _
        $region716: #{tpu_custom_call.1} parent=702 // pred_check_branch
          %1217 = sbr.rel (%p1214) target = $region718
        $region717: #{tpu_custom_call.1} parent=702 // pred_region
          %s1218 = sand.u32 1, 7
          %s1219 = ssub.s32 1, %s1218
          %s1220 = scalar_lea.vmem %s1190, %s1219
          %s1221 = ssub.s32 1, %s1218
          %s1222 = scalar_lea.vmem %s1191, %s1221 [#allocation3]
          %s1223 = sshll.u32 1, %s1218
          %s1224 = ssub.s32 %s1223, 1
          loop: start=0, step=1, limit=1
          $region719: #{tpu_custom_call.1} parent=717 // loop_pre_header
            _
          $region720: #{tpu_custom_call.1} parent=717 // loop_header
            %s1226 = sphi 0, %s1230
            %p1227 = scmp.ge.s32.totalorder %s1226, 1
            %s1231 = sphi %s1220, %s1220
            %s1232 = sphi %s1222, %s1222
          $region721: #{tpu_custom_call.1} parent=717 // loop_header_branch
            %1229 = sbr.rel (%p1227) target = $region725
          $region722: #{tpu_custom_call.1} parent=717 // loop_body
            %v1233 = vld [vmem:[%s1231] sm:%s1224]
            %1234 = vst [vmem:[%s1232] sm:%s1224] %v1233
          $region723: #{tpu_custom_call.1} parent=717 // loop_footer
            %s1230 = sadd.s32 1, %s1226
          $region724: #{tpu_custom_call.1} parent=717 // loop_footer_branch
            %1225 = sbr.rel target = $region720
          $region725: #{tpu_custom_call.1} parent=717 // loop_exit
            _
        $region718: #{tpu_custom_call.1} parent=702 // pred_fallthru
          _
      $region703: #{tpu_custom_call.1} parent=488 // pred_fallthru
        _
      // Predicated region
      $region704: #{tpu_custom_call.1} parent=488 // pred_check
        %p1198 = pneg %p1194
      $region705: #{tpu_custom_call.1} parent=488 // pred_check_branch
        %1200 = sbr.rel (%p1198) target = $region707
      $region706: #{tpu_custom_call.1} parent=488 // pred_region
        %s1201 = sshll.u32 1, 1
        %s1202 = ssub.s32 %s1201, 1
        loop: start=0, step=1, limit=1
        $region708: #{tpu_custom_call.1} parent=706 // loop_pre_header
          _
        $region709: #{tpu_custom_call.1} parent=706 // loop_header
          %s1204 = sphi 0, %s1208
          %p1205 = scmp.ge.s32.totalorder %s1204, 1
          %s1209 = sphi %s1190, %s1190
          %s1210 = sphi %s1191, %s1191
        $region710: #{tpu_custom_call.1} parent=706 // loop_header_branch
          %1207 = sbr.rel (%p1205) target = $region714
        $region711: #{tpu_custom_call.1} parent=706 // loop_body
          %v1211 = vld [vmem:[%s1209] sm:%s1202]
          %1212 = vst [vmem:[%s1210] sm:%s1202] %v1211
        $region712: #{tpu_custom_call.1} parent=706 // loop_footer
          %s1208 = sadd.s32 1, %s1204
        $region713: #{tpu_custom_call.1} parent=706 // loop_footer_branch
          %1203 = sbr.rel target = $region709
        $region714: #{tpu_custom_call.1} parent=706 // loop_exit
          _
      $region707: #{tpu_custom_call.1} parent=488 // pred_fallthru
        _
      // Predicated region
      $region726: #{tpu_custom_call.1} parent=488 // pred_check
        _
      $region727: #{tpu_custom_call.1} parent=488 // pred_check_branch
        %1237 = sbr.rel (0) target = $region729
      $region728: #{tpu_custom_call.1} parent=488 // pred_region
        %1238 = vsyncadd %s1192, 16
      $region729: #{tpu_custom_call.1} parent=488 // pred_fallthru
        _
      %s1239 = sadd.s32 %s832, 4
      %s1240 = sadd.s32 %s831, 4
      %s1241 = sld [smem:[#allocation7 + %s1240]]
      %s1242 = scalar_lea.vmem %s2, %s1241
      %s1243 = scalar_lea.vmem [#allocation2], %s1239
      %s1244 = scalar_lea.sflag [#allocation4], %s1239
      %p1246 = scmp.lt.u32.totalorder 1, 8
      %p1247 = pneg %p1246
      // Predicated region
      $region730: #{tpu_custom_call.1} parent=488 // pred_check
        _
      $region731: #{tpu_custom_call.1} parent=488 // pred_check_branch
        %1249 = sbr.rel (%p1246) target = $region733
      $region732: #{tpu_custom_call.1} parent=488 // pred_region
        %s1265 = sand.u32 1, 7
        %p1266 = scmp.eq.s32.totalorder %s1265, 0
        %p1267 = pneg %p1266
        // Predicated region
        $region745: #{tpu_custom_call.1} parent=732 // pred_check
          _
        $region746: #{tpu_custom_call.1} parent=732 // pred_check_branch
          %1269 = sbr.rel (%p1266) target = $region748
        $region747: #{tpu_custom_call.1} parent=732 // pred_region
          %s1270 = sand.u32 1, 7
          %s1271 = ssub.s32 1, %s1270
          %s1272 = scalar_lea.vmem %s1242, %s1271
          %s1273 = ssub.s32 1, %s1270
          %s1274 = scalar_lea.vmem %s1243, %s1273 [#allocation2]
          %s1275 = sshll.u32 1, %s1270
          %s1276 = ssub.s32 %s1275, 1
          loop: start=0, step=1, limit=1
          $region749: #{tpu_custom_call.1} parent=747 // loop_pre_header
            _
          $region750: #{tpu_custom_call.1} parent=747 // loop_header
            %s1278 = sphi 0, %s1282
            %p1279 = scmp.ge.s32.totalorder %s1278, 1
            %s1283 = sphi %s1272, %s1272
            %s1284 = sphi %s1274, %s1274
          $region751: #{tpu_custom_call.1} parent=747 // loop_header_branch
            %1281 = sbr.rel (%p1279) target = $region755
          $region752: #{tpu_custom_call.1} parent=747 // loop_body
            %v1285 = vld [vmem:[%s1283] sm:%s1276]
            %1286 = vst [vmem:[%s1284] sm:%s1276] %v1285
          $region753: #{tpu_custom_call.1} parent=747 // loop_footer
            %s1282 = sadd.s32 1, %s1278
          $region754: #{tpu_custom_call.1} parent=747 // loop_footer_branch
            %1277 = sbr.rel target = $region750
          $region755: #{tpu_custom_call.1} parent=747 // loop_exit
            _
        $region748: #{tpu_custom_call.1} parent=732 // pred_fallthru
          _
      $region733: #{tpu_custom_call.1} parent=488 // pred_fallthru
        _
      // Predicated region
      $region734: #{tpu_custom_call.1} parent=488 // pred_check
        %p1250 = pneg %p1246
      $region735: #{tpu_custom_call.1} parent=488 // pred_check_branch
        %1252 = sbr.rel (%p1250) target = $region737
      $region736: #{tpu_custom_call.1} parent=488 // pred_region
        %s1253 = sshll.u32 1, 1
        %s1254 = ssub.s32 %s1253, 1
        loop: start=0, step=1, limit=1
        $region738: #{tpu_custom_call.1} parent=736 // loop_pre_header
          _
        $region739: #{tpu_custom_call.1} parent=736 // loop_header
          %s1256 = sphi 0, %s1260
          %p1257 = scmp.ge.s32.totalorder %s1256, 1
          %s1261 = sphi %s1242, %s1242
          %s1262 = sphi %s1243, %s1243
        $region740: #{tpu_custom_call.1} parent=736 // loop_header_branch
          %1259 = sbr.rel (%p1257) target = $region744
        $region741: #{tpu_custom_call.1} parent=736 // loop_body
          %v1263 = vld [vmem:[%s1261] sm:%s1254]
          %1264 = vst [vmem:[%s1262] sm:%s1254] %v1263
        $region742: #{tpu_custom_call.1} parent=736 // loop_footer
          %s1260 = sadd.s32 1, %s1256
        $region743: #{tpu_custom_call.1} parent=736 // loop_footer_branch
          %1255 = sbr.rel target = $region739
        $region744: #{tpu_custom_call.1} parent=736 // loop_exit
          _
      $region737: #{tpu_custom_call.1} parent=488 // pred_fallthru
        _
      // Predicated region
      $region756: #{tpu_custom_call.1} parent=488 // pred_check
        _
      $region757: #{tpu_custom_call.1} parent=488 // pred_check_branch
        %1289 = sbr.rel (0) target = $region759
      $region758: #{tpu_custom_call.1} parent=488 // pred_region
        %1290 = vsyncadd %s1244, 16
      $region759: #{tpu_custom_call.1} parent=488 // pred_fallthru
        _
      %s1291 = sld [smem:[#allocation8 + %s1240]]
      %s1292 = scalar_lea.vmem %s3, %s1291
      %s1293 = scalar_lea.vmem [#allocation3], %s1239
      %s1294 = scalar_lea.sflag [#allocation5], %s1239
      %p1296 = scmp.lt.u32.totalorder 1, 8
      %p1297 = pneg %p1296
      // Predicated region
      $region760: #{tpu_custom_call.1} parent=488 // pred_check
        _
      $region761: #{tpu_custom_call.1} parent=488 // pred_check_branch
        %1299 = sbr.rel (%p1296) target = $region763
      $region762: #{tpu_custom_call.1} parent=488 // pred_region
        %s1315 = sand.u32 1, 7
        %p1316 = scmp.eq.s32.totalorder %s1315, 0
        %p1317 = pneg %p1316
        // Predicated region
        $region775: #{tpu_custom_call.1} parent=762 // pred_check
          _
        $region776: #{tpu_custom_call.1} parent=762 // pred_check_branch
          %1319 = sbr.rel (%p1316) target = $region778
        $region777: #{tpu_custom_call.1} parent=762 // pred_region
          %s1320 = sand.u32 1, 7
          %s1321 = ssub.s32 1, %s1320
          %s1322 = scalar_lea.vmem %s1292, %s1321
          %s1323 = ssub.s32 1, %s1320
          %s1324 = scalar_lea.vmem %s1293, %s1323 [#allocation3]
          %s1325 = sshll.u32 1, %s1320
          %s1326 = ssub.s32 %s1325, 1
          loop: start=0, step=1, limit=1
          $region779: #{tpu_custom_call.1} parent=777 // loop_pre_header
            _
          $region780: #{tpu_custom_call.1} parent=777 // loop_header
            %s1328 = sphi 0, %s1332
            %p1329 = scmp.ge.s32.totalorder %s1328, 1
            %s1333 = sphi %s1322, %s1322
            %s1334 = sphi %s1324, %s1324
          $region781: #{tpu_custom_call.1} parent=777 // loop_header_branch
            %1331 = sbr.rel (%p1329) target = $region785
          $region782: #{tpu_custom_call.1} parent=777 // loop_body
            %v1335 = vld [vmem:[%s1333] sm:%s1326]
            %1336 = vst [vmem:[%s1334] sm:%s1326] %v1335
          $region783: #{tpu_custom_call.1} parent=777 // loop_footer
            %s1332 = sadd.s32 1, %s1328
          $region784: #{tpu_custom_call.1} parent=777 // loop_footer_branch
            %1327 = sbr.rel target = $region780
          $region785: #{tpu_custom_call.1} parent=777 // loop_exit
            _
        $region778: #{tpu_custom_call.1} parent=762 // pred_fallthru
          _
      $region763: #{tpu_custom_call.1} parent=488 // pred_fallthru
        _
      // Predicated region
      $region764: #{tpu_custom_call.1} parent=488 // pred_check
        %p1300 = pneg %p1296
      $region765: #{tpu_custom_call.1} parent=488 // pred_check_branch
        %1302 = sbr.rel (%p1300) target = $region767
      $region766: #{tpu_custom_call.1} parent=488 // pred_region
        %s1303 = sshll.u32 1, 1
        %s1304 = ssub.s32 %s1303, 1
        loop: start=0, step=1, limit=1
        $region768: #{tpu_custom_call.1} parent=766 // loop_pre_header
          _
        $region769: #{tpu_custom_call.1} parent=766 // loop_header
          %s1306 = sphi 0, %s1310
          %p1307 = scmp.ge.s32.totalorder %s1306, 1
          %s1311 = sphi %s1292, %s1292
          %s1312 = sphi %s1293, %s1293
        $region770: #{tpu_custom_call.1} parent=766 // loop_header_branch
          %1309 = sbr.rel (%p1307) target = $region774
        $region771: #{tpu_custom_call.1} parent=766 // loop_body
          %v1313 = vld [vmem:[%s1311] sm:%s1304]
          %1314 = vst [vmem:[%s1312] sm:%s1304] %v1313
        $region772: #{tpu_custom_call.1} parent=766 // loop_footer
          %s1310 = sadd.s32 1, %s1306
        $region773: #{tpu_custom_call.1} parent=766 // loop_footer_branch
          %1305 = sbr.rel target = $region769
        $region774: #{tpu_custom_call.1} parent=766 // loop_exit
          _
      $region767: #{tpu_custom_call.1} parent=488 // pred_fallthru
        _
      // Predicated region
      $region786: #{tpu_custom_call.1} parent=488 // pred_check
        _
      $region787: #{tpu_custom_call.1} parent=488 // pred_check_branch
        %1339 = sbr.rel (0) target = $region789
      $region788: #{tpu_custom_call.1} parent=488 // pred_region
        %1340 = vsyncadd %s1294, 16
      $region789: #{tpu_custom_call.1} parent=488 // pred_fallthru
        _
      %s1341 = sadd.s32 %s832, 5
      %s1342 = sadd.s32 %s831, 5
      %s1343 = sld [smem:[#allocation7 + %s1342]]
      %s1344 = scalar_lea.vmem %s2, %s1343
      %s1345 = scalar_lea.vmem [#allocation2], %s1341
      %s1346 = scalar_lea.sflag [#allocation4], %s1341
      %p1348 = scmp.lt.u32.totalorder 1, 8
      %p1349 = pneg %p1348
      // Predicated region
      $region790: #{tpu_custom_call.1} parent=488 // pred_check
        _
      $region791: #{tpu_custom_call.1} parent=488 // pred_check_branch
        %1351 = sbr.rel (%p1348) target = $region793
      $region792: #{tpu_custom_call.1} parent=488 // pred_region
        %s1367 = sand.u32 1, 7
        %p1368 = scmp.eq.s32.totalorder %s1367, 0
        %p1369 = pneg %p1368
        // Predicated region
        $region805: #{tpu_custom_call.1} parent=792 // pred_check
          _
        $region806: #{tpu_custom_call.1} parent=792 // pred_check_branch
          %1371 = sbr.rel (%p1368) target = $region808
        $region807: #{tpu_custom_call.1} parent=792 // pred_region
          %s1372 = sand.u32 1, 7
          %s1373 = ssub.s32 1, %s1372
          %s1374 = scalar_lea.vmem %s1344, %s1373
          %s1375 = ssub.s32 1, %s1372
          %s1376 = scalar_lea.vmem %s1345, %s1375 [#allocation2]
          %s1377 = sshll.u32 1, %s1372
          %s1378 = ssub.s32 %s1377, 1
          loop: start=0, step=1, limit=1
          $region809: #{tpu_custom_call.1} parent=807 // loop_pre_header
            _
          $region810: #{tpu_custom_call.1} parent=807 // loop_header
            %s1380 = sphi 0, %s1384
            %p1381 = scmp.ge.s32.totalorder %s1380, 1
            %s1385 = sphi %s1374, %s1374
            %s1386 = sphi %s1376, %s1376
          $region811: #{tpu_custom_call.1} parent=807 // loop_header_branch
            %1383 = sbr.rel (%p1381) target = $region815
          $region812: #{tpu_custom_call.1} parent=807 // loop_body
            %v1387 = vld [vmem:[%s1385] sm:%s1378]
            %1388 = vst [vmem:[%s1386] sm:%s1378] %v1387
          $region813: #{tpu_custom_call.1} parent=807 // loop_footer
            %s1384 = sadd.s32 1, %s1380
          $region814: #{tpu_custom_call.1} parent=807 // loop_footer_branch
            %1379 = sbr.rel target = $region810
          $region815: #{tpu_custom_call.1} parent=807 // loop_exit
            _
        $region808: #{tpu_custom_call.1} parent=792 // pred_fallthru
          _
      $region793: #{tpu_custom_call.1} parent=488 // pred_fallthru
        _
      // Predicated region
      $region794: #{tpu_custom_call.1} parent=488 // pred_check
        %p1352 = pneg %p1348
      $region795: #{tpu_custom_call.1} parent=488 // pred_check_branch
        %1354 = sbr.rel (%p1352) target = $region797
      $region796: #{tpu_custom_call.1} parent=488 // pred_region
        %s1355 = sshll.u32 1, 1
        %s1356 = ssub.s32 %s1355, 1
        loop: start=0, step=1, limit=1
        $region798: #{tpu_custom_call.1} parent=796 // loop_pre_header
          _
        $region799: #{tpu_custom_call.1} parent=796 // loop_header
          %s1358 = sphi 0, %s1362
          %p1359 = scmp.ge.s32.totalorder %s1358, 1
          %s1363 = sphi %s1344, %s1344
          %s1364 = sphi %s1345, %s1345
        $region800: #{tpu_custom_call.1} parent=796 // loop_header_branch
          %1361 = sbr.rel (%p1359) target = $region804
        $region801: #{tpu_custom_call.1} parent=796 // loop_body
          %v1365 = vld [vmem:[%s1363] sm:%s1356]
          %1366 = vst [vmem:[%s1364] sm:%s1356] %v1365
        $region802: #{tpu_custom_call.1} parent=796 // loop_footer
          %s1362 = sadd.s32 1, %s1358
        $region803: #{tpu_custom_call.1} parent=796 // loop_footer_branch
          %1357 = sbr.rel target = $region799
        $region804: #{tpu_custom_call.1} parent=796 // loop_exit
          _
      $region797: #{tpu_custom_call.1} parent=488 // pred_fallthru
        _
      // Predicated region
      $region816: #{tpu_custom_call.1} parent=488 // pred_check
        _
      $region817: #{tpu_custom_call.1} parent=488 // pred_check_branch
        %1391 = sbr.rel (0) target = $region819
      $region818: #{tpu_custom_call.1} parent=488 // pred_region
        %1392 = vsyncadd %s1346, 16
      $region819: #{tpu_custom_call.1} parent=488 // pred_fallthru
        _
      %s1393 = sld [smem:[#allocation8 + %s1342]]
      %s1394 = scalar_lea.vmem %s3, %s1393
      %s1395 = scalar_lea.vmem [#allocation3], %s1341
      %s1396 = scalar_lea.sflag [#allocation5], %s1341
      %p1398 = scmp.lt.u32.totalorder 1, 8
      %p1399 = pneg %p1398
      // Predicated region
      $region820: #{tpu_custom_call.1} parent=488 // pred_check
        _
      $region821: #{tpu_custom_call.1} parent=488 // pred_check_branch
        %1401 = sbr.rel (%p1398) target = $region823
      $region822: #{tpu_custom_call.1} parent=488 // pred_region
        %s1417 = sand.u32 1, 7
        %p1418 = scmp.eq.s32.totalorder %s1417, 0
        %p1419 = pneg %p1418
        // Predicated region
        $region835: #{tpu_custom_call.1} parent=822 // pred_check
          _
        $region836: #{tpu_custom_call.1} parent=822 // pred_check_branch
          %1421 = sbr.rel (%p1418) target = $region838
        $region837: #{tpu_custom_call.1} parent=822 // pred_region
          %s1422 = sand.u32 1, 7
          %s1423 = ssub.s32 1, %s1422
          %s1424 = scalar_lea.vmem %s1394, %s1423
          %s1425 = ssub.s32 1, %s1422
          %s1426 = scalar_lea.vmem %s1395, %s1425 [#allocation3]
          %s1427 = sshll.u32 1, %s1422
          %s1428 = ssub.s32 %s1427, 1
          loop: start=0, step=1, limit=1
          $region839: #{tpu_custom_call.1} parent=837 // loop_pre_header
            _
          $region840: #{tpu_custom_call.1} parent=837 // loop_header
            %s1430 = sphi 0, %s1434
            %p1431 = scmp.ge.s32.totalorder %s1430, 1
            %s1435 = sphi %s1424, %s1424
            %s1436 = sphi %s1426, %s1426
          $region841: #{tpu_custom_call.1} parent=837 // loop_header_branch
            %1433 = sbr.rel (%p1431) target = $region845
          $region842: #{tpu_custom_call.1} parent=837 // loop_body
            %v1437 = vld [vmem:[%s1435] sm:%s1428]
            %1438 = vst [vmem:[%s1436] sm:%s1428] %v1437
          $region843: #{tpu_custom_call.1} parent=837 // loop_footer
            %s1434 = sadd.s32 1, %s1430
          $region844: #{tpu_custom_call.1} parent=837 // loop_footer_branch
            %1429 = sbr.rel target = $region840
          $region845: #{tpu_custom_call.1} parent=837 // loop_exit
            _
        $region838: #{tpu_custom_call.1} parent=822 // pred_fallthru
          _
      $region823: #{tpu_custom_call.1} parent=488 // pred_fallthru
        _
      // Predicated region
      $region824: #{tpu_custom_call.1} parent=488 // pred_check
        %p1402 = pneg %p1398
      $region825: #{tpu_custom_call.1} parent=488 // pred_check_branch
        %1404 = sbr.rel (%p1402) target = $region827
      $region826: #{tpu_custom_call.1} parent=488 // pred_region
        %s1405 = sshll.u32 1, 1
        %s1406 = ssub.s32 %s1405, 1
        loop: start=0, step=1, limit=1
        $region828: #{tpu_custom_call.1} parent=826 // loop_pre_header
          _
        $region829: #{tpu_custom_call.1} parent=826 // loop_header
          %s1408 = sphi 0, %s1412
          %p1409 = scmp.ge.s32.totalorder %s1408, 1
          %s1413 = sphi %s1394, %s1394
          %s1414 = sphi %s1395, %s1395
        $region830: #{tpu_custom_call.1} parent=826 // loop_header_branch
          %1411 = sbr.rel (%p1409) target = $region834
        $region831: #{tpu_custom_call.1} parent=826 // loop_body
          %v1415 = vld [vmem:[%s1413] sm:%s1406]
          %1416 = vst [vmem:[%s1414] sm:%s1406] %v1415
        $region832: #{tpu_custom_call.1} parent=826 // loop_footer
          %s1412 = sadd.s32 1, %s1408
        $region833: #{tpu_custom_call.1} parent=826 // loop_footer_branch
          %1407 = sbr.rel target = $region829
        $region834: #{tpu_custom_call.1} parent=826 // loop_exit
          _
      $region827: #{tpu_custom_call.1} parent=488 // pred_fallthru
        _
      // Predicated region
      $region846: #{tpu_custom_call.1} parent=488 // pred_check
        _
      $region847: #{tpu_custom_call.1} parent=488 // pred_check_branch
        %1441 = sbr.rel (0) target = $region849
      $region848: #{tpu_custom_call.1} parent=488 // pred_region
        %1442 = vsyncadd %s1396, 16
      $region849: #{tpu_custom_call.1} parent=488 // pred_fallthru
        _
      %s1443 = sadd.s32 %s832, 6
      %s1444 = sadd.s32 %s831, 6
      %s1445 = sld [smem:[#allocation7 + %s1444]]
      %s1446 = scalar_lea.vmem %s2, %s1445
      %s1447 = scalar_lea.vmem [#allocation2], %s1443
      %s1448 = scalar_lea.sflag [#allocation4], %s1443
      %p1450 = scmp.lt.u32.totalorder 1, 8
      %p1451 = pneg %p1450
      // Predicated region
      $region850: #{tpu_custom_call.1} parent=488 // pred_check
        _
      $region851: #{tpu_custom_call.1} parent=488 // pred_check_branch
        %1453 = sbr.rel (%p1450) target = $region853
      $region852: #{tpu_custom_call.1} parent=488 // pred_region
        %s1469 = sand.u32 1, 7
        %p1470 = scmp.eq.s32.totalorder %s1469, 0
        %p1471 = pneg %p1470
        // Predicated region
        $region865: #{tpu_custom_call.1} parent=852 // pred_check
          _
        $region866: #{tpu_custom_call.1} parent=852 // pred_check_branch
          %1473 = sbr.rel (%p1470) target = $region868
        $region867: #{tpu_custom_call.1} parent=852 // pred_region
          %s1474 = sand.u32 1, 7
          %s1475 = ssub.s32 1, %s1474
          %s1476 = scalar_lea.vmem %s1446, %s1475
          %s1477 = ssub.s32 1, %s1474
          %s1478 = scalar_lea.vmem %s1447, %s1477 [#allocation2]
          %s1479 = sshll.u32 1, %s1474
          %s1480 = ssub.s32 %s1479, 1
          loop: start=0, step=1, limit=1
          $region869: #{tpu_custom_call.1} parent=867 // loop_pre_header
            _
          $region870: #{tpu_custom_call.1} parent=867 // loop_header
            %s1482 = sphi 0, %s1486
            %p1483 = scmp.ge.s32.totalorder %s1482, 1
            %s1487 = sphi %s1476, %s1476
            %s1488 = sphi %s1478, %s1478
          $region871: #{tpu_custom_call.1} parent=867 // loop_header_branch
            %1485 = sbr.rel (%p1483) target = $region875
          $region872: #{tpu_custom_call.1} parent=867 // loop_body
            %v1489 = vld [vmem:[%s1487] sm:%s1480]
            %1490 = vst [vmem:[%s1488] sm:%s1480] %v1489
          $region873: #{tpu_custom_call.1} parent=867 // loop_footer
            %s1486 = sadd.s32 1, %s1482
          $region874: #{tpu_custom_call.1} parent=867 // loop_footer_branch
            %1481 = sbr.rel target = $region870
          $region875: #{tpu_custom_call.1} parent=867 // loop_exit
            _
        $region868: #{tpu_custom_call.1} parent=852 // pred_fallthru
          _
      $region853: #{tpu_custom_call.1} parent=488 // pred_fallthru
        _
      // Predicated region
      $region854: #{tpu_custom_call.1} parent=488 // pred_check
        %p1454 = pneg %p1450
      $region855: #{tpu_custom_call.1} parent=488 // pred_check_branch
        %1456 = sbr.rel (%p1454) target = $region857
      $region856: #{tpu_custom_call.1} parent=488 // pred_region
        %s1457 = sshll.u32 1, 1
        %s1458 = ssub.s32 %s1457, 1
        loop: start=0, step=1, limit=1
        $region858: #{tpu_custom_call.1} parent=856 // loop_pre_header
          _
        $region859: #{tpu_custom_call.1} parent=856 // loop_header
          %s1460 = sphi 0, %s1464
          %p1461 = scmp.ge.s32.totalorder %s1460, 1
          %s1465 = sphi %s1446, %s1446
          %s1466 = sphi %s1447, %s1447
        $region860: #{tpu_custom_call.1} parent=856 // loop_header_branch
          %1463 = sbr.rel (%p1461) target = $region864
        $region861: #{tpu_custom_call.1} parent=856 // loop_body
          %v1467 = vld [vmem:[%s1465] sm:%s1458]
          %1468 = vst [vmem:[%s1466] sm:%s1458] %v1467
        $region862: #{tpu_custom_call.1} parent=856 // loop_footer
          %s1464 = sadd.s32 1, %s1460
        $region863: #{tpu_custom_call.1} parent=856 // loop_footer_branch
          %1459 = sbr.rel target = $region859
        $region864: #{tpu_custom_call.1} parent=856 // loop_exit
          _
      $region857: #{tpu_custom_call.1} parent=488 // pred_fallthru
        _
      // Predicated region
      $region876: #{tpu_custom_call.1} parent=488 // pred_check
        _
      $region877: #{tpu_custom_call.1} parent=488 // pred_check_branch
        %1493 = sbr.rel (0) target = $region879
      $region878: #{tpu_custom_call.1} parent=488 // pred_region
        %1494 = vsyncadd %s1448, 16
      $region879: #{tpu_custom_call.1} parent=488 // pred_fallthru
        _
      %s1495 = sld [smem:[#allocation8 + %s1444]]
      %s1496 = scalar_lea.vmem %s3, %s1495
      %s1497 = scalar_lea.vmem [#allocation3], %s1443
      %s1498 = scalar_lea.sflag [#allocation5], %s1443
      %p1500 = scmp.lt.u32.totalorder 1, 8
      %p1501 = pneg %p1500
      // Predicated region
      $region880: #{tpu_custom_call.1} parent=488 // pred_check
        _
      $region881: #{tpu_custom_call.1} parent=488 // pred_check_branch
        %1503 = sbr.rel (%p1500) target = $region883
      $region882: #{tpu_custom_call.1} parent=488 // pred_region
        %s1519 = sand.u32 1, 7
        %p1520 = scmp.eq.s32.totalorder %s1519, 0
        %p1521 = pneg %p1520
        // Predicated region
        $region895: #{tpu_custom_call.1} parent=882 // pred_check
          _
        $region896: #{tpu_custom_call.1} parent=882 // pred_check_branch
          %1523 = sbr.rel (%p1520) target = $region898
        $region897: #{tpu_custom_call.1} parent=882 // pred_region
          %s1524 = sand.u32 1, 7
          %s1525 = ssub.s32 1, %s1524
          %s1526 = scalar_lea.vmem %s1496, %s1525
          %s1527 = ssub.s32 1, %s1524
          %s1528 = scalar_lea.vmem %s1497, %s1527 [#allocation3]
          %s1529 = sshll.u32 1, %s1524
          %s1530 = ssub.s32 %s1529, 1
          loop: start=0, step=1, limit=1
          $region899: #{tpu_custom_call.1} parent=897 // loop_pre_header
            _
          $region900: #{tpu_custom_call.1} parent=897 // loop_header
            %s1532 = sphi 0, %s1536
            %p1533 = scmp.ge.s32.totalorder %s1532, 1
            %s1537 = sphi %s1526, %s1526
            %s1538 = sphi %s1528, %s1528
          $region901: #{tpu_custom_call.1} parent=897 // loop_header_branch
            %1535 = sbr.rel (%p1533) target = $region905
          $region902: #{tpu_custom_call.1} parent=897 // loop_body
            %v1539 = vld [vmem:[%s1537] sm:%s1530]
            %1540 = vst [vmem:[%s1538] sm:%s1530] %v1539
          $region903: #{tpu_custom_call.1} parent=897 // loop_footer
            %s1536 = sadd.s32 1, %s1532
          $region904: #{tpu_custom_call.1} parent=897 // loop_footer_branch
            %1531 = sbr.rel target = $region900
          $region905: #{tpu_custom_call.1} parent=897 // loop_exit
            _
        $region898: #{tpu_custom_call.1} parent=882 // pred_fallthru
          _
      $region883: #{tpu_custom_call.1} parent=488 // pred_fallthru
        _
      // Predicated region
      $region884: #{tpu_custom_call.1} parent=488 // pred_check
        %p1504 = pneg %p1500
      $region885: #{tpu_custom_call.1} parent=488 // pred_check_branch
        %1506 = sbr.rel (%p1504) target = $region887
      $region886: #{tpu_custom_call.1} parent=488 // pred_region
        %s1507 = sshll.u32 1, 1
        %s1508 = ssub.s32 %s1507, 1
        loop: start=0, step=1, limit=1
        $region888: #{tpu_custom_call.1} parent=886 // loop_pre_header
          _
        $region889: #{tpu_custom_call.1} parent=886 // loop_header
          %s1510 = sphi 0, %s1514
          %p1511 = scmp.ge.s32.totalorder %s1510, 1
          %s1515 = sphi %s1496, %s1496
          %s1516 = sphi %s1497, %s1497
        $region890: #{tpu_custom_call.1} parent=886 // loop_header_branch
          %1513 = sbr.rel (%p1511) target = $region894
        $region891: #{tpu_custom_call.1} parent=886 // loop_body
          %v1517 = vld [vmem:[%s1515] sm:%s1508]
          %1518 = vst [vmem:[%s1516] sm:%s1508] %v1517
        $region892: #{tpu_custom_call.1} parent=886 // loop_footer
          %s1514 = sadd.s32 1, %s1510
        $region893: #{tpu_custom_call.1} parent=886 // loop_footer_branch
          %1509 = sbr.rel target = $region889
        $region894: #{tpu_custom_call.1} parent=886 // loop_exit
          _
      $region887: #{tpu_custom_call.1} parent=488 // pred_fallthru
        _
      // Predicated region
      $region906: #{tpu_custom_call.1} parent=488 // pred_check
        _
      $region907: #{tpu_custom_call.1} parent=488 // pred_check_branch
        %1543 = sbr.rel (0) target = $region909
      $region908: #{tpu_custom_call.1} parent=488 // pred_region
        %1544 = vsyncadd %s1498, 16
      $region909: #{tpu_custom_call.1} parent=488 // pred_fallthru
        _
      %s1545 = sadd.s32 %s832, 7
      %s1546 = sadd.s32 %s831, 7
      %s1547 = sld [smem:[#allocation7 + %s1546]]
      %s1548 = scalar_lea.vmem %s2, %s1547
      %s1549 = scalar_lea.vmem [#allocation2], %s1545
      %s1550 = scalar_lea.sflag [#allocation4], %s1545
      %p1552 = scmp.lt.u32.totalorder 1, 8
      %p1553 = pneg %p1552
      // Predicated region
      $region910: #{tpu_custom_call.1} parent=488 // pred_check
        _
      $region911: #{tpu_custom_call.1} parent=488 // pred_check_branch
        %1555 = sbr.rel (%p1552) target = $region913
      $region912: #{tpu_custom_call.1} parent=488 // pred_region
        %s1571 = sand.u32 1, 7
        %p1572 = scmp.eq.s32.totalorder %s1571, 0
        %p1573 = pneg %p1572
        // Predicated region
        $region925: #{tpu_custom_call.1} parent=912 // pred_check
          _
        $region926: #{tpu_custom_call.1} parent=912 // pred_check_branch
          %1575 = sbr.rel (%p1572) target = $region928
        $region927: #{tpu_custom_call.1} parent=912 // pred_region
          %s1576 = sand.u32 1, 7
          %s1577 = ssub.s32 1, %s1576
          %s1578 = scalar_lea.vmem %s1548, %s1577
          %s1579 = ssub.s32 1, %s1576
          %s1580 = scalar_lea.vmem %s1549, %s1579 [#allocation2]
          %s1581 = sshll.u32 1, %s1576
          %s1582 = ssub.s32 %s1581, 1
          loop: start=0, step=1, limit=1
          $region929: #{tpu_custom_call.1} parent=927 // loop_pre_header
            _
          $region930: #{tpu_custom_call.1} parent=927 // loop_header
            %s1584 = sphi 0, %s1588
            %p1585 = scmp.ge.s32.totalorder %s1584, 1
            %s1589 = sphi %s1578, %s1578
            %s1590 = sphi %s1580, %s1580
          $region931: #{tpu_custom_call.1} parent=927 // loop_header_branch
            %1587 = sbr.rel (%p1585) target = $region935
          $region932: #{tpu_custom_call.1} parent=927 // loop_body
            %v1591 = vld [vmem:[%s1589] sm:%s1582]
            %1592 = vst [vmem:[%s1590] sm:%s1582] %v1591
          $region933: #{tpu_custom_call.1} parent=927 // loop_footer
            %s1588 = sadd.s32 1, %s1584
          $region934: #{tpu_custom_call.1} parent=927 // loop_footer_branch
            %1583 = sbr.rel target = $region930
          $region935: #{tpu_custom_call.1} parent=927 // loop_exit
            _
        $region928: #{tpu_custom_call.1} parent=912 // pred_fallthru
          _
      $region913: #{tpu_custom_call.1} parent=488 // pred_fallthru
        _
      // Predicated region
      $region914: #{tpu_custom_call.1} parent=488 // pred_check
        %p1556 = pneg %p1552
      $region915: #{tpu_custom_call.1} parent=488 // pred_check_branch
        %1558 = sbr.rel (%p1556) target = $region917
      $region916: #{tpu_custom_call.1} parent=488 // pred_region
        %s1559 = sshll.u32 1, 1
        %s1560 = ssub.s32 %s1559, 1
        loop: start=0, step=1, limit=1
        $region918: #{tpu_custom_call.1} parent=916 // loop_pre_header
          _
        $region919: #{tpu_custom_call.1} parent=916 // loop_header
          %s1562 = sphi 0, %s1566
          %p1563 = scmp.ge.s32.totalorder %s1562, 1
          %s1567 = sphi %s1548, %s1548
          %s1568 = sphi %s1549, %s1549
        $region920: #{tpu_custom_call.1} parent=916 // loop_header_branch
          %1565 = sbr.rel (%p1563) target = $region924
        $region921: #{tpu_custom_call.1} parent=916 // loop_body
          %v1569 = vld [vmem:[%s1567] sm:%s1560]
          %1570 = vst [vmem:[%s1568] sm:%s1560] %v1569
        $region922: #{tpu_custom_call.1} parent=916 // loop_footer
          %s1566 = sadd.s32 1, %s1562
        $region923: #{tpu_custom_call.1} parent=916 // loop_footer_branch
          %1561 = sbr.rel target = $region919
        $region924: #{tpu_custom_call.1} parent=916 // loop_exit
          _
      $region917: #{tpu_custom_call.1} parent=488 // pred_fallthru
        _
      // Predicated region
      $region936: #{tpu_custom_call.1} parent=488 // pred_check
        _
      $region937: #{tpu_custom_call.1} parent=488 // pred_check_branch
        %1595 = sbr.rel (0) target = $region939
      $region938: #{tpu_custom_call.1} parent=488 // pred_region
        %1596 = vsyncadd %s1550, 16
      $region939: #{tpu_custom_call.1} parent=488 // pred_fallthru
        _
      %s1597 = sld [smem:[#allocation8 + %s1546]]
      %s1598 = scalar_lea.vmem %s3, %s1597
      %s1599 = scalar_lea.vmem [#allocation3], %s1545
      %s1600 = scalar_lea.sflag [#allocation5], %s1545
      %p1602 = scmp.lt.u32.totalorder 1, 8
      %p1603 = pneg %p1602
      // Predicated region
      $region940: #{tpu_custom_call.1} parent=488 // pred_check
        _
      $region941: #{tpu_custom_call.1} parent=488 // pred_check_branch
        %1605 = sbr.rel (%p1602) target = $region943
      $region942: #{tpu_custom_call.1} parent=488 // pred_region
        %s1621 = sand.u32 1, 7
        %p1622 = scmp.eq.s32.totalorder %s1621, 0
        %p1623 = pneg %p1622
        // Predicated region
        $region955: #{tpu_custom_call.1} parent=942 // pred_check
          _
        $region956: #{tpu_custom_call.1} parent=942 // pred_check_branch
          %1625 = sbr.rel (%p1622) target = $region958
        $region957: #{tpu_custom_call.1} parent=942 // pred_region
          %s1626 = sand.u32 1, 7
          %s1627 = ssub.s32 1, %s1626
          %s1628 = scalar_lea.vmem %s1598, %s1627
          %s1629 = ssub.s32 1, %s1626
          %s1630 = scalar_lea.vmem %s1599, %s1629 [#allocation3]
          %s1631 = sshll.u32 1, %s1626
          %s1632 = ssub.s32 %s1631, 1
          loop: start=0, step=1, limit=1
          $region959: #{tpu_custom_call.1} parent=957 // loop_pre_header
            _
          $region960: #{tpu_custom_call.1} parent=957 // loop_header
            %s1634 = sphi 0, %s1638
            %p1635 = scmp.ge.s32.totalorder %s1634, 1
            %s1639 = sphi %s1628, %s1628
            %s1640 = sphi %s1630, %s1630
          $region961: #{tpu_custom_call.1} parent=957 // loop_header_branch
            %1637 = sbr.rel (%p1635) target = $region965
          $region962: #{tpu_custom_call.1} parent=957 // loop_body
            %v1641 = vld [vmem:[%s1639] sm:%s1632]
            %1642 = vst [vmem:[%s1640] sm:%s1632] %v1641
          $region963: #{tpu_custom_call.1} parent=957 // loop_footer
            %s1638 = sadd.s32 1, %s1634
          $region964: #{tpu_custom_call.1} parent=957 // loop_footer_branch
            %1633 = sbr.rel target = $region960
          $region965: #{tpu_custom_call.1} parent=957 // loop_exit
            _
        $region958: #{tpu_custom_call.1} parent=942 // pred_fallthru
          _
      $region943: #{tpu_custom_call.1} parent=488 // pred_fallthru
        _
      // Predicated region
      $region944: #{tpu_custom_call.1} parent=488 // pred_check
        %p1606 = pneg %p1602
      $region945: #{tpu_custom_call.1} parent=488 // pred_check_branch
        %1608 = sbr.rel (%p1606) target = $region947
      $region946: #{tpu_custom_call.1} parent=488 // pred_region
        %s1609 = sshll.u32 1, 1
        %s1610 = ssub.s32 %s1609, 1
        loop: start=0, step=1, limit=1
        $region948: #{tpu_custom_call.1} parent=946 // loop_pre_header
          _
        $region949: #{tpu_custom_call.1} parent=946 // loop_header
          %s1612 = sphi 0, %s1616
          %p1613 = scmp.ge.s32.totalorder %s1612, 1
          %s1617 = sphi %s1598, %s1598
          %s1618 = sphi %s1599, %s1599
        $region950: #{tpu_custom_call.1} parent=946 // loop_header_branch
          %1615 = sbr.rel (%p1613) target = $region954
        $region951: #{tpu_custom_call.1} parent=946 // loop_body
          %v1619 = vld [vmem:[%s1617] sm:%s1610]
          %1620 = vst [vmem:[%s1618] sm:%s1610] %v1619
        $region952: #{tpu_custom_call.1} parent=946 // loop_footer
          %s1616 = sadd.s32 1, %s1612
        $region953: #{tpu_custom_call.1} parent=946 // loop_footer_branch
          %1611 = sbr.rel target = $region949
        $region954: #{tpu_custom_call.1} parent=946 // loop_exit
          _
      $region947: #{tpu_custom_call.1} parent=488 // pred_fallthru
        _
      // Predicated region
      $region966: #{tpu_custom_call.1} parent=488 // pred_check
        _
      $region967: #{tpu_custom_call.1} parent=488 // pred_check_branch
        %1645 = sbr.rel (0) target = $region969
      $region968: #{tpu_custom_call.1} parent=488 // pred_region
        %1646 = vsyncadd %s1600, 16
      $region969: #{tpu_custom_call.1} parent=488 // pred_fallthru
        _
    $region489: #{tpu_custom_call.1} parent=1 // pred_fallthru
      _
    %s1647 = smul.u32 0, 8
    %s1648 = scalar_lea.sflag [#allocation4], %s1647
    %s1649 = smul.u32 1, 1
    %s1650 = sshll.u32 %s1649, 4
    %1651 = dma.done %s1648, %s1650
    %s1652 = scalar_lea.sflag [#allocation5], %s1647
    %s1653 = sshll.u32 %s1649, 4
    %1654 = dma.done %s1652, %s1653
    %s1655 = sadd.s32 %s1647, 1
    %s1656 = scalar_lea.sflag [#allocation4], %s1655
    %s1657 = sshll.u32 %s1649, 4
    %1658 = dma.done %s1656, %s1657
    %s1659 = scalar_lea.sflag [#allocation5], %s1655
    %s1660 = sshll.u32 %s1649, 4
    %1661 = dma.done %s1659, %s1660
    %s1662 = sadd.s32 %s1647, 2
    %s1663 = scalar_lea.sflag [#allocation4], %s1662
    %s1664 = sshll.u32 %s1649, 4
    %1665 = dma.done %s1663, %s1664
    %s1666 = scalar_lea.sflag [#allocation5], %s1662
    %s1667 = sshll.u32 %s1649, 4
    %1668 = dma.done %s1666, %s1667
    %s1669 = sadd.s32 %s1647, 3
    %s1670 = scalar_lea.sflag [#allocation4], %s1669
    %s1671 = sshll.u32 %s1649, 4
    %1672 = dma.done %s1670, %s1671
    %s1673 = scalar_lea.sflag [#allocation5], %s1669
    %s1674 = sshll.u32 %s1649, 4
    %1675 = dma.done %s1673, %s1674
    %s1676 = sadd.s32 %s1647, 4
    %s1677 = scalar_lea.sflag [#allocation4], %s1676
    %s1678 = sshll.u32 %s1649, 4
    %1679 = dma.done %s1677, %s1678
    %s1680 = scalar_lea.sflag [#allocation5], %s1676
    %s1681 = sshll.u32 %s1649, 4
    %1682 = dma.done %s1680, %s1681
    %s1683 = sadd.s32 %s1647, 5
    %s1684 = scalar_lea.sflag [#allocation4], %s1683
    %s1685 = sshll.u32 %s1649, 4
    %1686 = dma.done %s1684, %s1685
    %s1687 = scalar_lea.sflag [#allocation5], %s1683
    %s1688 = sshll.u32 %s1649, 4
    %1689 = dma.done %s1687, %s1688
    %s1690 = sadd.s32 %s1647, 6
    %s1691 = scalar_lea.sflag [#allocation4], %s1690
    %s1692 = sshll.u32 %s1649, 4
    %1693 = dma.done %s1691, %s1692
    %s1694 = scalar_lea.sflag [#allocation5], %s1690
    %s1695 = sshll.u32 %s1649, 4
    %1696 = dma.done %s1694, %s1695
    %s1697 = sadd.s32 %s1647, 7
    %s1698 = scalar_lea.sflag [#allocation4], %s1697
    %s1699 = sshll.u32 %s1649, 4
    %1700 = dma.done %s1698, %s1699
    %s1701 = scalar_lea.sflag [#allocation5], %s1697
    %s1702 = sshll.u32 %s1649, 4
    %1703 = dma.done %s1701, %s1702
    %s1704 = scalar_lea.vmem [#allocation2], %s1647
    %v1705 = vld [vmem:[%s1704] sm:$0xff]
    %vm1706 = vcmask 261120
    %1707 = vst.msk [vmem:[#allocation9] sm:$0xff] %vm1706, %v1705
    %s1708 = scalar_lea.vmem [#allocation3], %s1647
    %v1709 = vld [vmem:[%s1708] sm:$0xff]
    %1710 = vst.msk [vmem:[#allocation11] sm:$0xff] %vm1706, %v1709
    // Predicated region
    $region970: #{tpu_custom_call.1} parent=1 // pred_check
      _
    $region971: #{tpu_custom_call.1} parent=1 // pred_check_branch
      %1712 = sbr.rel (0) target = $region973
    $region972: #{tpu_custom_call.1} parent=1 // pred_region
      %s1714 = ssub.s32 128, 128
      %1715 = vsyncadd [#allocation10], %s1714
      %s1717 = sshll.u32 [#allocation9], 4
      %s1718 = int_to_ptr.vmem [resolvable:$true] %s1717
      %1720 = dma.vmem_to_hbm [thread:$0]  %s1718, 128, %s4, [#allocation10]
    $region973: #{tpu_custom_call.1} parent=1 // pred_fallthru
      _
    // Predicated region
    $region974: #{tpu_custom_call.1} parent=1 // pred_check
      _
    $region975: #{tpu_custom_call.1} parent=1 // pred_check_branch
      %1722 = sbr.rel (0) target = $region977
    $region976: #{tpu_custom_call.1} parent=1 // pred_region
      %s1724 = ssub.s32 128, 128
      %1725 = vsyncadd [#allocation12], %s1724
      %s1727 = sshll.u32 [#allocation11], 4
      %s1728 = int_to_ptr.vmem [resolvable:$true] %s1727
      %1730 = dma.vmem_to_hbm [thread:$0]  %s1728, 128, %s5, [#allocation12]
    $region977: #{tpu_custom_call.1} parent=1 // pred_fallthru
      _
    // Predicated region
    $region978: #{tpu_custom_call.1} parent=1 // pred_check
      _
    $region979: #{tpu_custom_call.1} parent=1 // pred_check_branch
      %1732 = sbr.rel (0) target = $region981
    $region980: #{tpu_custom_call.1} parent=1 // pred_region
      %1733 = dma.done [#allocation10], 128
    $region981: #{tpu_custom_call.1} parent=1 // pred_fallthru
      _
    // Predicated region
    $region982: #{tpu_custom_call.1} parent=1 // pred_check
      _
    $region983: #{tpu_custom_call.1} parent=1 // pred_check_branch
      %1735 = sbr.rel (0) target = $region985
    $region984: #{tpu_custom_call.1} parent=1 // pred_region
      %1736 = dma.done [#allocation12], 128
    $region985: #{tpu_custom_call.1} parent=1 // pred_fallthru
      _
    %1737 = vsyncpa [#allocation10], 1
    %1738 = vsyncpa [#allocation12], 1
  %1739 = vsyncmov [#allocation4]
  %s1740 = vpop.sfrf %1739
  %p1741 = scmp.eq.s32.totalorder %s1740, 0
  %p1742 = pneg %p1741
  %1744 = shalt.err (%p1742)
  %s1745 = scalar_lea.sflag [#allocation4], 1
  %1746 = vsyncmov %s1745
  %s1747 = vpop.sfrf %1746
  %p1748 = scmp.eq.s32.totalorder %s1747, 0
  %p1749 = pneg %p1748
  %1751 = shalt.err (%p1749)
  %s1752 = scalar_lea.sflag [#allocation4], 2
  %1753 = vsyncmov %s1752
  %s1754 = vpop.sfrf %1753
  %p1755 = scmp.eq.s32.totalorder %s1754, 0
  %p1756 = pneg %p1755
  %1758 = shalt.err (%p1756)
  %s1759 = scalar_lea.sflag [#allocation4], 3
  %1760 = vsyncmov %s1759
  %s1761 = vpop.sfrf %1760
  %p1762 = scmp.eq.s32.totalorder %s1761, 0
  %p1763 = pneg %p1762
  %1765 = shalt.err (%p1763)
  %s1766 = scalar_lea.sflag [#allocation4], 4
  %1767 = vsyncmov %s1766
  %s1768 = vpop.sfrf %1767
  %p1769 = scmp.eq.s32.totalorder %s1768, 0
  %p1770 = pneg %p1769
  %1772 = shalt.err (%p1770)
  %s1773 = scalar_lea.sflag [#allocation4], 5
  %1774 = vsyncmov %s1773
  %s1775 = vpop.sfrf %1774
  %p1776 = scmp.eq.s32.totalorder %s1775, 0
  %p1777 = pneg %p1776
  %1779 = shalt.err (%p1777)
  %s1780 = scalar_lea.sflag [#allocation4], 6
  %1781 = vsyncmov %s1780
  %s1782 = vpop.sfrf %1781
  %p1783 = scmp.eq.s32.totalorder %s1782, 0
  %p1784 = pneg %p1783
  %1786 = shalt.err (%p1784)
  %s1787 = scalar_lea.sflag [#allocation4], 7
  %1788 = vsyncmov %s1787
  %s1789 = vpop.sfrf %1788
  %p1790 = scmp.eq.s32.totalorder %s1789, 0
  %p1791 = pneg %p1790
  %1793 = shalt.err (%p1791)
  %s1794 = scalar_lea.sflag [#allocation4], 8
  %1795 = vsyncmov %s1794
  %s1796 = vpop.sfrf %1795
  %p1797 = scmp.eq.s32.totalorder %s1796, 0
  %p1798 = pneg %p1797
  %1800 = shalt.err (%p1798)
  %s1801 = scalar_lea.sflag [#allocation4], 9
  %1802 = vsyncmov %s1801
  %s1803 = vpop.sfrf %1802
  %p1804 = scmp.eq.s32.totalorder %s1803, 0
  %p1805 = pneg %p1804
  %1807 = shalt.err (%p1805)
  %s1808 = scalar_lea.sflag [#allocation4], 10
  %1809 = vsyncmov %s1808
  %s1810 = vpop.sfrf %1809
  %p1811 = scmp.eq.s32.totalorder %s1810, 0
  %p1812 = pneg %p1811
  %1814 = shalt.err (%p1812)
  %s1815 = scalar_lea.sflag [#allocation4], 11
  %1816 = vsyncmov %s1815
  %s1817 = vpop.sfrf %1816
  %p1818 = scmp.eq.s32.totalorder %s1817, 0
  %p1819 = pneg %p1818
  %1821 = shalt.err (%p1819)
  %s1822 = scalar_lea.sflag [#allocation4], 12
  %1823 = vsyncmov %s1822
  %s1824 = vpop.sfrf %1823
  %p1825 = scmp.eq.s32.totalorder %s1824, 0
  %p1826 = pneg %p1825
  %1828 = shalt.err (%p1826)
  %s1829 = scalar_lea.sflag [#allocation4], 13
  %1830 = vsyncmov %s1829
  %s1831 = vpop.sfrf %1830
  %p1832 = scmp.eq.s32.totalorder %s1831, 0
  %p1833 = pneg %p1832
  %1835 = shalt.err (%p1833)
  %s1836 = scalar_lea.sflag [#allocation4], 14
  %1837 = vsyncmov %s1836
  %s1838 = vpop.sfrf %1837
  %p1839 = scmp.eq.s32.totalorder %s1838, 0
  %p1840 = pneg %p1839
  %1842 = shalt.err (%p1840)
  %s1843 = scalar_lea.sflag [#allocation4], 15
  %1844 = vsyncmov %s1843
  %s1845 = vpop.sfrf %1844
  %p1846 = scmp.eq.s32.totalorder %s1845, 0
  %p1847 = pneg %p1846
  %1849 = shalt.err (%p1847)
  %1850 = vsyncmov [#allocation5]
  %s1851 = vpop.sfrf %1850
  %p1852 = scmp.eq.s32.totalorder %s1851, 0
  %p1853 = pneg %p1852
  %1855 = shalt.err (%p1853)
  %s1856 = scalar_lea.sflag [#allocation5], 1
  %1857 = vsyncmov %s1856
  %s1858 = vpop.sfrf %1857
  %p1859 = scmp.eq.s32.totalorder %s1858, 0
  %p1860 = pneg %p1859
  %1862 = shalt.err (%p1860)
  %s1863 = scalar_lea.sflag [#allocation5], 2
  %1864 = vsyncmov %s1863
  %s1865 = vpop.sfrf %1864
  %p1866 = scmp.eq.s32.totalorder %s1865, 0
  %p1867 = pneg %p1866
  %1869 = shalt.err (%p1867)
  %s1870 = scalar_lea.sflag [#allocation5], 3
  %1871 = vsyncmov %s1870
  %s1872 = vpop.sfrf %1871
  %p1873 = scmp.eq.s32.totalorder %s1872, 0
  %p1874 = pneg %p1873
  %1876 = shalt.err (%p1874)
  %s1877 = scalar_lea.sflag [#allocation5], 4
  %1878 = vsyncmov %s1877
  %s1879 = vpop.sfrf %1878
  %p1880 = scmp.eq.s32.totalorder %s1879, 0
  %p1881 = pneg %p1880
  %1883 = shalt.err (%p1881)
  %s1884 = scalar_lea.sflag [#allocation5], 5
  %1885 = vsyncmov %s1884
  %s1886 = vpop.sfrf %1885
  %p1887 = scmp.eq.s32.totalorder %s1886, 0
  %p1888 = pneg %p1887
  %1890 = shalt.err (%p1888)
  %s1891 = scalar_lea.sflag [#allocation5], 6
  %1892 = vsyncmov %s1891
  %s1893 = vpop.sfrf %1892
  %p1894 = scmp.eq.s32.totalorder %s1893, 0
  %p1895 = pneg %p1894
  %1897 = shalt.err (%p1895)
  %s1898 = scalar_lea.sflag [#allocation5], 7
  %1899 = vsyncmov %s1898
  %s1900 = vpop.sfrf %1899
  %p1901 = scmp.eq.s32.totalorder %s1900, 0
  %p1902 = pneg %p1901
  %1904 = shalt.err (%p1902)
  %s1905 = scalar_lea.sflag [#allocation5], 8
  %1906 = vsyncmov %s1905
  %s1907 = vpop.sfrf %1906
  %p1908 = scmp.eq.s32.totalorder %s1907, 0
  %p1909 = pneg %p1908
  %1911 = shalt.err (%p1909)
  %s1912 = scalar_lea.sflag [#allocation5], 9
  %1913 = vsyncmov %s1912
  %s1914 = vpop.sfrf %1913
  %p1915 = scmp.eq.s32.totalorder %s1914, 0
  %p1916 = pneg %p1915
  %1918 = shalt.err (%p1916)
  %s1919 = scalar_lea.sflag [#allocation5], 10
  %1920 = vsyncmov %s1919
  %s1921 = vpop.sfrf %1920
  %p1922 = scmp.eq.s32.totalorder %s1921, 0
  %p1923 = pneg %p1922
  %1925 = shalt.err (%p1923)
  %s1926 = scalar_lea.sflag [#allocation5], 11
  %1927 = vsyncmov %s1926
  %s1928 = vpop.sfrf %1927
  %p1929 = scmp.eq.s32.totalorder %s1928, 0
  %p1930 = pneg %p1929
  %1932 = shalt.err (%p1930)
  %s1933 = scalar_lea.sflag [#allocation5], 12
  %1934 = vsyncmov %s1933
  %s1935 = vpop.sfrf %1934
  %p1936 = scmp.eq.s32.totalorder %s1935, 0
  %p1937 = pneg %p1936
  %1939 = shalt.err (%p1937)
  %s1940 = scalar_lea.sflag [#allocation5], 13
  %1941 = vsyncmov %s1940
  %s1942 = vpop.sfrf %1941
  %p1943 = scmp.eq.s32.totalorder %s1942, 0
  %p1944 = pneg %p1943
  %1946 = shalt.err (%p1944)
  %s1947 = scalar_lea.sflag [#allocation5], 14
  %1948 = vsyncmov %s1947
  %s1949 = vpop.sfrf %1948
  %p1950 = scmp.eq.s32.totalorder %s1949, 0
  %p1951 = pneg %p1950
  %1953 = shalt.err (%p1951)
  %s1954 = scalar_lea.sflag [#allocation5], 15
  %1955 = vsyncmov %s1954
  %s1956 = vpop.sfrf %1955
  %p1957 = scmp.eq.s32.totalorder %s1956, 0
  %p1958 = pneg %p1957
  %1960 = shalt.err (%p1958)

</llo_original>
